<compile_context>
chip_gen: v6e
topology: v6e:2x2x1
jax: 0.10.0
libtpu: 0.0.40
codegen_flags: <defaults>
</compile_context>

<pallas_src>
import functools

import jax
import jax.numpy as jnp
from jax.experimental import pallas as pl
from jax.experimental.pallas import tpu as pltpu  # noqa: F401 (TPU backend)

INPUT_DIM = 16
NUM_CLASSES = 4

# Real (unpadded) layer widths from the PyTorch module.
D_IN = INPUT_DIM
H1, H2, H3 = 64, 128, 64
F1_OUT = 64          # fc1: 64 -> 64
F_PAD = 128          # fc2/fc3 outputs lane-padded to 128 (zero columns)

# ---------------------------------------------------------------------------
# Packed-operand layouts (shared by prepare_kernel_params and the kernel).
# Weights: pre-transposed to (in, out), gate cols reordered to [i|f|o|g],
# zero-padded to W_COLS columns, stacked row-wise.  All row offsets are
# multiples of 16 (bf16 sublane tile), all column slices 128-aligned.
# ---------------------------------------------------------------------------
W_COLS = 4 * H2      # 512 (widest weight)
_W_LAYOUT = (
    ("wih1", D_IN,   4 * H1),
    ("whh1", H1,     4 * H1),
    ("wih2", H1,     4 * H2),
    ("whh2", H2,     4 * H2),
    ("wih3", H2,     4 * H3),
    ("whh3", H3,     4 * H3),
    ("wf1",  H3,     F1_OUT),
    ("wf2",  F1_OUT, F_PAD),
    ("wf3",  F_PAD,  F_PAD),
)
W_SLOTS = {}
_off = 0
for _name, _rows, _cols in _W_LAYOUT:
    W_SLOTS[_name] = (_off, _rows, _cols)
    _off += _rows
W_ROWS_TOTAL = _off  # 720

# Biases: one f32 row, each bias in its own 128-aligned lane slot.
_B_LAYOUT = (        # (name, real width, slot width)
    ("b1",  4 * H1, 256), ("b2", 4 * H2, 512), ("b3", 4 * H3, 256),
    ("bf1", F1_OUT, 128), ("bf2", F_PAD, 128), ("bf3", F_PAD, 128),
)
B_SLOTS = {}
_off = 0
for _name, _width, _slot in _B_LAYOUT:
    B_SLOTS[_name] = (_off, _width)
    _off += _slot
B_COLS = _off        # 1408


# ---------------------------------------------------------------------------
# Fused kernel: wavefront over the 3 LSTM recurrences + MLP head, all in VMEM.
# ---------------------------------------------------------------------------
def _fused_lstm_mlp_kernel(x_ref, w_ref, b_ref, out_ref, *, B, T):
    f32, bf16 = jnp.float32, jnp.bfloat16

    def w(name):                                   # static, tile-aligned slice
        r0, nr, nc = W_SLOTS[name]
        return w_ref[r0:r0 + nr, 0:nc]             # bf16 (nr, nc)

    def bias(name):                                # hoisted sublane broadcast
        c0, width = B_SLOTS[name]
        return jnp.broadcast_to(b_ref[0:1, c0:c0 + width], (B, width))

    wih1, whh1 = w("wih1"), w("whh1")
    wih2, whh2 = w("wih2"), w("whh2")
    wih3, whh3 = w("wih3"), w("whh3")
    wf1, wf2, wf3 = w("wf1"), w("wf2"), w("wf3")
    b1, b2, b3 = bias("b1"), bias("b2"), bias("b3")
    bf1, bf2, bf3 = bias("bf1"), bias("bf2"), bias("bf3")

    x_all = x_ref[...]                             # (B, T, D) f32, tiny

    def mm(a_f32, w_bf16):
        # bf16 MXU operands, f32 accumulation.
        return jnp.dot(a_f32.astype(bf16), w_bf16, preferred_element_type=f32)

    def lstm_step(gates, c, H):
        """gates: (B, 4H) pre-activations, gate column order [i | f | o | g]."""
        ifo = jax.nn.sigmoid(gates[:, :3 * H])     # one contiguous EUP pass
        g = jnp.tanh(gates[:, 3 * H:])
        i, f, o = ifo[:, 0:H], ifo[:, H:2 * H], ifo[:, 2 * H:3 * H]
        c = f * c + i * g
        h = o * jnp.tanh(c)
        return h, c

    h1 = jnp.zeros((B, H1), f32); c1 = jnp.zeros((B, H1), f32)
    h2 = jnp.zeros((B, H2), f32); c2 = jnp.zeros((B, H2), f32)
    h3 = jnp.zeros((B, H3), f32); c3 = jnp.zeros((B, H3), f32)

    # TODO(synk): on v5e, drive the MXU explicitly (matmul_push_rhs once per
    # layer + matmul_acc_lhs per step) to keep whh weight-stationary.
    o1_prev = None   # relu(h1[t]) from the previous wavefront step
    o2_prev = None   # relu(h2[t]) from the previous wavefront step
    for s in range(T + 2):           # static unroll, skewed 3-layer pipeline
        o1_cur = None
        o2_cur = None
        if s < T:                    # layer 1, timestep t = s
            x_t = x_all[:, s, :]                                  # (B, D)
            g1 = mm(x_t, wih1) + mm(h1, whh1) + b1                # (B, 4*H1)
            h1, c1 = lstm_step(g1, c1, H1)
            o1_cur = jnp.maximum(h1, 0.0)                         # post-LSTM ReLU
        if 0 < s <= T:               # layer 2, timestep t = s - 1
            g2 = mm(o1_prev, wih2) + mm(h2, whh2) + b2            # (B, 4*H2)
            h2, c2 = lstm_step(g2, c2, H2)
            o2_cur = jnp.maximum(h2, 0.0)
        if s >= 2:                   # layer 3, timestep t = s - 2
            g3 = mm(o2_prev, wih3) + mm(h3, whh3) + b3            # (B, 4*H3)
            h3, c3 = lstm_step(g3, c3, H3)
        o1_prev, o2_prev = o1_cur, o2_cur

    last = jnp.maximum(h3, 0.0)      # ReLU'd last layer-3 output, (B, H3)

    # MLP head: fc1 -> ReLU -> fc2 -> ReLU -> fc3 (fc2/fc3 lane-padded to 128).
    m1 = jnp.maximum(mm(last, wf1) + bf1, 0.0)                    # (B, 64)
    m2 = jnp.maximum(mm(m1, wf2) + bf2, 0.0)                      # (B, 128)
    out_ref[...] = mm(m2, wf3) + bf3                              # (B, 128)


# ---------------------------------------------------------------------------
# One-time weight preparation: transpose, combine biases, reorder gates to
# [i|f|o|g], pad fc2/fc3 to 128 lanes, pack into two operands.
# ---------------------------------------------------------------------------
def _pad_cols(w, cols):
    if w.shape[1] == cols:
        return w
    return jnp.concatenate([w, jnp.zeros((w.shape[0], cols - w.shape[1]), w.dtype)], axis=1)


def _pad_rows(w, rows):
    if w.shape[0] == rows:
        return w
    return jnp.concatenate([w, jnp.zeros((rows - w.shape[0], w.shape[1]), w.dtype)], axis=0)


def _reorder_gate_cols(w):
    """(K, 4H) gate column blocks [i|f|g|o] (PyTorch order) -> [i|f|o|g]."""
    H = w.shape[1] // 4
    return jnp.concatenate([w[:, :2 * H], w[:, 3 * H:], w[:, 2 * H:3 * H]], axis=1)


def prepare_kernel_params(params):
    """Transform PyTorch-layout params into two packed kernel operands (ONCE)."""
    def prep_lstm(p):
        wih = _reorder_gate_cols(jnp.transpose(p["w_ih"]))       # (in, 4H)
        whh = _reorder_gate_cols(jnp.transpose(p["w_hh"]))       # (H, 4H)
        b = _reorder_gate_cols((p["b_ih"] + p["b_hh"]).reshape(1, -1))
        return wih, whh, b

    wih1, whh1, b1 = prep_lstm(params["lstm1"])
    wih2, whh2, b2 = prep_lstm(params["lstm2"])
    wih3, whh3, b3 = prep_lstm(params["lstm3"])
    wf1 = jnp.transpose(params["fc1"]["w"])
    bf1 = params["fc1"]["b"].reshape(1, -1)
    wf2 = _pad_cols(jnp.transpose(params["fc2"]["w"]), F_PAD)
    bf2 = _pad_cols(params["fc2"]["b"].reshape(1, -1), F_PAD)
    wf3 = _pad_rows(_pad_cols(jnp.transpose(params["fc3"]["w"]), F_PAD), F_PAD)
    bf3 = _pad_cols(params["fc3"]["b"].reshape(1, -1), F_PAD)

    weights = dict(wih1=wih1, whh1=whh1, wih2=wih2, whh2=whh2,
                   wih3=wih3, whh3=whh3, wf1=wf1, wf2=wf2, wf3=wf3)
    w_packed = jnp.zeros((W_ROWS_TOTAL, W_COLS), jnp.float32)
    for name, (r0, nr, nc) in W_SLOTS.items():
        wv = weights[name].astype(jnp.float32)
        assert wv.shape == (nr, nc), (name, wv.shape, (nr, nc))
        w_packed = w_packed.at[r0:r0 + nr, 0:nc].set(wv)

    biases = dict(b1=b1, b2=b2, b3=b3, bf1=bf1, bf2=bf2, bf3=bf3)
    b_packed = jnp.zeros((1, B_COLS), jnp.float32)
    for name, (c0, width) in B_SLOTS.items():
        bv = biases[name].astype(jnp.float32)
        assert bv.shape == (1, width), (name, bv.shape, width)
        b_packed = b_packed.at[0:1, c0:c0 + width].set(bv)

    # bf16 matmul operands (full-rate MXU passes); biases / elementwise stay f32.
    return dict(w=w_packed.astype(jnp.bfloat16), b=b_packed)


# ---------------------------------------------------------------------------
# Forward pass: raw (B,T,D) input + 2 packed operands, one pallas_call.
# ---------------------------------------------------------------------------
@jax.jit
def _forward_padded(kparams, x_btd):
    B, T, D = x_btd.shape
    assert D == D_IN, (D, D_IN)
    kernel = functools.partial(_fused_lstm_mlp_kernel, B=B, T=T)
    # TODO(synk): for real batch sizes (B >= ~16) add a leading "parallel"
    # batch grid axis so v7x's two TensorCores each take half the batch.
    return pl.pallas_call(
        kernel,
        out_shape=jax.ShapeDtypeStruct((B, F_PAD), jnp.float32),
    )(x_btd.astype(jnp.float32), kparams["w"], kparams["b"])


def lstm_model_forward(kparams, x_btd, num_classes=NUM_CLASSES):
    """x_btd: (B, T, D) batch-first, as in the PyTorch module. Returns (B, C)."""
    return _forward_padded(kparams, x_btd)[:, :num_classes]


# ---------------------------------------------------------------------------
# Parameter init (deterministic, PyTorch-style uniform(-1/sqrt(H), 1/sqrt(H)))
# ---------------------------------------------------------------------------
def init_lstm_params(key, input_size, hidden_size):
    k = 1.0 / jnp.sqrt(hidden_size)
    ks = jax.random.split(key, 4)
    return dict(
        w_ih=jax.random.uniform(ks[0], (4 * hidden_size, input_size), jnp.float32, -k, k),
        w_hh=jax.random.uniform(ks[1], (4 * hidden_size, hidden_size), jnp.float32, -k, k),
        b_ih=jax.random.uniform(ks[2], (4 * hidden_size,), jnp.float32, -k, k),
        b_hh=jax.random.uniform(ks[3], (4 * hidden_size,), jnp.float32, -k, k),
    )


def init_linear_params(key, in_features, out_features):
    k = 1.0 / jnp.sqrt(in_features)
    ks = jax.random.split(key, 2)
    return dict(
        w=jax.random.uniform(ks[0], (out_features, in_features), jnp.float32, -k, k),
        b=jax.random.uniform(ks[1], (out_features,), jnp.float32, -k, k),
    )


def init_model_params(key, input_dim=INPUT_DIM, num_classes=NUM_CLASSES):
    ks = jax.random.split(key, 6)
    return dict(
        lstm1=init_lstm_params(ks[0], input_dim, H1),
        lstm2=init_lstm_params(ks[1], H1, H2),
        lstm3=init_lstm_params(ks[2], H2, H3),
        fc1=init_linear_params(ks[3], H3, F1_OUT),
        fc2=init_linear_params(ks[4], F1_OUT, 32),
        fc3=init_linear_params(ks[5], 32, num_classes),
    )


# ---------------------------------------------------------------------------
# Pure-JAX reference (correctness spot check for the fused kernel)
# ---------------------------------------------------------------------------
def _reference_forward(params, x_btd):
    def lstm_ref(x_tbd, p):
        B = x_tbd.shape[1]
        H = p["w_hh"].shape[1]
        wih_t, whh_t = p["w_ih"].T, p["w_hh"].T
        b = p["b_ih"] + p["b_hh"]

        def step(carry, x_t):
            h, c = carry
            gates = x_t @ wih_t + h @ whh_t + b
            i, f, g, o = jnp.split(gates, 4, axis=-1)
            c = jax.nn.sigmoid(f) * c + jax.nn.sigmoid(i) * jnp.tanh(g)
            h = jax.nn.sigmoid(o) * jnp.tanh(c)
            return (h, c), h

        init = (jnp.zeros((B, H), jnp.float32), jnp.zeros((B, H), jnp.float32))
        _, hs = jax.lax.scan(step, init, x_tbd)
        return hs                                             # (T, B, H)

    x = jnp.transpose(x_btd, (1, 0, 2)).astype(jnp.float32)
    h = jax.nn.relu(lstm_ref(x, params["lstm1"]))
    h = jax.nn.relu(lstm_ref(h, params["lstm2"]))
    h = jax.nn.relu(lstm_ref(h, params["lstm3"]))
    last = h[-1]
    h = jax.nn.relu(last @ params["fc1"]["w"].T + params["fc1"]["b"])
    h = jax.nn.relu(h @ params["fc2"]["w"].T + params["fc2"]["b"])
    return h @ params["fc3"]["w"].T + params["fc3"]["b"]


if __name__ == "__main__":
    key = jax.random.PRNGKey(0)
    k_params, k_x = jax.random.split(key)

    B, T, D = 2, 8, INPUT_DIM
    params = init_model_params(k_params, input_dim=D, num_classes=NUM_CLASSES)
    kparams = prepare_kernel_params(params)          # one-time weight prep
    x = jax.random.normal(k_x, (B, T, D), dtype=jnp.float32)

    y = lstm_model_forward(kparams, x)
    jax.block_until_ready(y)
    assert y.shape == (B, NUM_CLASSES), y.shape

    y_ref = _reference_forward(params, x)
    assert bool(jnp.all(jnp.isfinite(y)))
    # bf16 MXU operands vs. f32 reference: comfortably inside 3e-2 for T=8.
    assert bool(jnp.allclose(y, y_ref, rtol=3e-2, atol=3e-2)), (y, y_ref)

    print("KERNEL_OK")
</pallas_src>

<mosaic_0001>
module attributes {stable_mosaic.version = 11 : i64} {
  func.func @_fused_lstm_mlp_kernel(%arg0: memref<2x8x16xf32, #tpu.memory_space<vmem>>, %arg1: memref<720x512xbf16, #tpu.memory_space<vmem>>, %arg2: memref<1x1408xf32, #tpu.memory_space<vmem>>, %arg3: memref<2x128xf32, #tpu.memory_space<vmem>>) attributes {dimension_semantics = [], scalar_prefetch = 0 : i64, scratch_operands = 0 : i64, tpu.core_type = #tpu.core_type<tc>} {
    %c0 = arith.constant 0 : index
    %c0_0 = arith.constant 0 : index
    %0 = vector.load %arg1[%c0, %c0_0] : memref<720x512xbf16, #tpu.memory_space<vmem>>, vector<16x256xbf16>
    %c16 = arith.constant 16 : index
    %c0_1 = arith.constant 0 : index
    %1 = vector.load %arg1[%c16, %c0_1] : memref<720x512xbf16, #tpu.memory_space<vmem>>, vector<64x256xbf16>
    %c80 = arith.constant 80 : index
    %c0_2 = arith.constant 0 : index
    %2 = vector.load %arg1[%c80, %c0_2] : memref<720x512xbf16, #tpu.memory_space<vmem>>, vector<64x512xbf16>
    %c144 = arith.constant 144 : index
    %c0_3 = arith.constant 0 : index
    %3 = vector.load %arg1[%c144, %c0_3] : memref<720x512xbf16, #tpu.memory_space<vmem>>, vector<128x512xbf16>
    %c272 = arith.constant 272 : index
    %c0_4 = arith.constant 0 : index
    %4 = vector.load %arg1[%c272, %c0_4] : memref<720x512xbf16, #tpu.memory_space<vmem>>, vector<128x256xbf16>
    %c400 = arith.constant 400 : index
    %c0_5 = arith.constant 0 : index
    %5 = vector.load %arg1[%c400, %c0_5] : memref<720x512xbf16, #tpu.memory_space<vmem>>, vector<64x256xbf16>
    %c464 = arith.constant 464 : index
    %c0_6 = arith.constant 0 : index
    %6 = vector.load %arg1[%c464, %c0_6] : memref<720x512xbf16, #tpu.memory_space<vmem>>, vector<64x64xbf16>
    %c528 = arith.constant 528 : index
    %c0_7 = arith.constant 0 : index
    %7 = vector.load %arg1[%c528, %c0_7] : memref<720x512xbf16, #tpu.memory_space<vmem>>, vector<64x128xbf16>
    %c592 = arith.constant 592 : index
    %c0_8 = arith.constant 0 : index
    %8 = vector.load %arg1[%c592, %c0_8] : memref<720x512xbf16, #tpu.memory_space<vmem>>, vector<128x128xbf16>
    %c0_9 = arith.constant 0 : index
    %c0_10 = arith.constant 0 : index
    %9 = vector.load %arg2[%c0_9, %c0_10] : memref<1x1408xf32, #tpu.memory_space<vmem>>, vector<1x256xf32>
    %10 = vector.shape_cast %9 : vector<1x256xf32> to vector<1x256xf32>
    %11 = vector.broadcast %10 : vector<1x256xf32> to vector<2x256xf32>
    %c0_11 = arith.constant 0 : index
    %c256 = arith.constant 256 : index
    %12 = vector.load %arg2[%c0_11, %c256] : memref<1x1408xf32, #tpu.memory_space<vmem>>, vector<1x512xf32>
    %13 = vector.shape_cast %12 : vector<1x512xf32> to vector<1x512xf32>
    %14 = vector.broadcast %13 : vector<1x512xf32> to vector<2x512xf32>
    %c0_12 = arith.constant 0 : index
    %c768 = arith.constant 768 : index
    %15 = vector.load %arg2[%c0_12, %c768] : memref<1x1408xf32, #tpu.memory_space<vmem>>, vector<1x256xf32>
    %16 = vector.shape_cast %15 : vector<1x256xf32> to vector<1x256xf32>
    %17 = vector.broadcast %16 : vector<1x256xf32> to vector<2x256xf32>
    %c0_13 = arith.constant 0 : index
    %c1024 = arith.constant 1024 : index
    %18 = vector.load %arg2[%c0_13, %c1024] : memref<1x1408xf32, #tpu.memory_space<vmem>>, vector<1x64xf32>
    %19 = vector.shape_cast %18 : vector<1x64xf32> to vector<1x64xf32>
    %20 = vector.broadcast %19 : vector<1x64xf32> to vector<2x64xf32>
    %c0_14 = arith.constant 0 : index
    %c1152 = arith.constant 1152 : index
    %21 = vector.load %arg2[%c0_14, %c1152] : memref<1x1408xf32, #tpu.memory_space<vmem>>, vector<1x128xf32>
    %22 = vector.shape_cast %21 : vector<1x128xf32> to vector<1x128xf32>
    %23 = vector.broadcast %22 : vector<1x128xf32> to vector<2x128xf32>
    %c0_15 = arith.constant 0 : index
    %c1280 = arith.constant 1280 : index
    %24 = vector.load %arg2[%c0_15, %c1280] : memref<1x1408xf32, #tpu.memory_space<vmem>>, vector<1x128xf32>
    %25 = vector.shape_cast %24 : vector<1x128xf32> to vector<1x128xf32>
    %26 = vector.broadcast %25 : vector<1x128xf32> to vector<2x128xf32>
    %c0_16 = arith.constant 0 : index
    %c0_17 = arith.constant 0 : index
    %c0_18 = arith.constant 0 : index
    %27 = vector.load %arg0[%c0_16, %c0_17, %c0_18] : memref<2x8x16xf32, #tpu.memory_space<vmem>>, vector<2x8x16xf32>
    %cst = arith.constant 0.000000e+00 : f32
    %28 = vector.broadcast %cst : f32 to vector<2x64xf32>
    %cst_19 = arith.constant 0.000000e+00 : f32
    %29 = vector.broadcast %cst_19 : f32 to vector<2x64xf32>
    %cst_20 = arith.constant 0.000000e+00 : f32
    %30 = vector.broadcast %cst_20 : f32 to vector<2x128xf32>
    %cst_21 = arith.constant 0.000000e+00 : f32
    %31 = vector.broadcast %cst_21 : f32 to vector<2x128xf32>
    %cst_22 = arith.constant 0.000000e+00 : f32
    %32 = vector.broadcast %cst_22 : f32 to vector<2x64xf32>
    %cst_23 = arith.constant 0.000000e+00 : f32
    %33 = vector.broadcast %cst_23 : f32 to vector<2x64xf32>
    %34 = vector.extract_strided_slice %27 {offsets = [0, 0, 0], sizes = [2, 1, 16], strides = [1, 1, 1]} : vector<2x8x16xf32> to vector<2x1x16xf32>
    %35 = vector.shape_cast %34 : vector<2x1x16xf32> to vector<2x16xf32>
    %36 = arith.truncf %35 : vector<2x16xf32> to vector<2x16xbf16>
    %cst_24 = arith.constant dense<0.000000e+00> : vector<2x256xf32>
    %37 = tpu.matmul %36, %0, %cst_24 {dimension_numbers = #tpu.dot_dimension_numbers<[1], [0], [0], [1], [0, 0, 1, 1], [], []>} : vector<2x16xbf16>, vector<16x256xbf16>, vector<2x256xf32> -> vector<2x256xf32>
    %38 = arith.truncf %28 : vector<2x64xf32> to vector<2x64xbf16>
    %cst_25 = arith.constant dense<0.000000e+00> : vector<2x256xf32>
    %39 = tpu.matmul %38, %1, %cst_25 {dimension_numbers = #tpu.dot_dimension_numbers<[1], [0], [0], [1], [0, 0, 1, 1], [], []>} : vector<2x64xbf16>, vector<64x256xbf16>, vector<2x256xf32> -> vector<2x256xf32>
    %40 = arith.addf %37, %39 : vector<2x256xf32>
    %41 = arith.addf %40, %11 : vector<2x256xf32>
    %42 = vector.extract_strided_slice %41 {offsets = [0, 0], sizes = [2, 192], strides = [1, 1]} : vector<2x256xf32> to vector<2x192xf32>
    %43 = arith.negf %42 : vector<2x192xf32>
    %44 = math.exp %43 : vector<2x192xf32>
    %cst_26 = arith.constant 1.000000e+00 : f32
    %45 = vector.broadcast %cst_26 : f32 to vector<2x192xf32>
    %46 = arith.addf %45, %44 : vector<2x192xf32>
    %47 = arith.divf %45, %46 : vector<2x192xf32>
    %48 = vector.extract_strided_slice %41 {offsets = [0, 192], sizes = [2, 64], strides = [1, 1]} : vector<2x256xf32> to vector<2x64xf32>
    %49 = math.tanh %48 : vector<2x64xf32>
    %50 = vector.extract_strided_slice %47 {offsets = [0, 0], sizes = [2, 64], strides = [1, 1]} : vector<2x192xf32> to vector<2x64xf32>
    %51 = vector.extract_strided_slice %47 {offsets = [0, 64], sizes = [2, 64], strides = [1, 1]} : vector<2x192xf32> to vector<2x64xf32>
    %52 = vector.extract_strided_slice %47 {offsets = [0, 128], sizes = [2, 64], strides = [1, 1]} : vector<2x192xf32> to vector<2x64xf32>
    %53 = arith.mulf %51, %29 : vector<2x64xf32>
    %54 = arith.mulf %50, %49 : vector<2x64xf32>
    %55 = arith.addf %53, %54 : vector<2x64xf32>
    %56 = math.tanh %55 : vector<2x64xf32>
    %57 = arith.mulf %52, %56 : vector<2x64xf32>
    %cst_27 = arith.constant 0.000000e+00 : f32
    %58 = vector.broadcast %cst_27 : f32 to vector<2x64xf32>
    %59 = arith.maximumf %57, %58 : vector<2x64xf32>
    %60 = vector.extract_strided_slice %27 {offsets = [0, 1, 0], sizes = [2, 1, 16], strides = [1, 1, 1]} : vector<2x8x16xf32> to vector<2x1x16xf32>
    %61 = vector.shape_cast %60 : vector<2x1x16xf32> to vector<2x16xf32>
    %62 = arith.truncf %61 : vector<2x16xf32> to vector<2x16xbf16>
    %cst_28 = arith.constant dense<0.000000e+00> : vector<2x256xf32>
    %63 = tpu.matmul %62, %0, %cst_28 {dimension_numbers = #tpu.dot_dimension_numbers<[1], [0], [0], [1], [0, 0, 1, 1], [], []>} : vector<2x16xbf16>, vector<16x256xbf16>, vector<2x256xf32> -> vector<2x256xf32>
    %64 = arith.truncf %57 : vector<2x64xf32> to vector<2x64xbf16>
    %cst_29 = arith.constant dense<0.000000e+00> : vector<2x256xf32>
    %65 = tpu.matmul %64, %1, %cst_29 {dimension_numbers = #tpu.dot_dimension_numbers<[1], [0], [0], [1], [0, 0, 1, 1], [], []>} : vector<2x64xbf16>, vector<64x256xbf16>, vector<2x256xf32> -> vector<2x256xf32>
    %66 = arith.addf %63, %65 : vector<2x256xf32>
    %67 = arith.addf %66, %11 : vector<2x256xf32>
    %68 = vector.extract_strided_slice %67 {offsets = [0, 0], sizes = [2, 192], strides = [1, 1]} : vector<2x256xf32> to vector<2x192xf32>
    %69 = arith.negf %68 : vector<2x192xf32>
    %70 = math.exp %69 : vector<2x192xf32>
    %cst_30 = arith.constant 1.000000e+00 : f32
    %71 = vector.broadcast %cst_30 : f32 to vector<2x192xf32>
    %72 = arith.addf %71, %70 : vector<2x192xf32>
    %73 = arith.divf %71, %72 : vector<2x192xf32>
    %74 = vector.extract_strided_slice %67 {offsets = [0, 192], sizes = [2, 64], strides = [1, 1]} : vector<2x256xf32> to vector<2x64xf32>
    %75 = math.tanh %74 : vector<2x64xf32>
    %76 = vector.extract_strided_slice %73 {offsets = [0, 0], sizes = [2, 64], strides = [1, 1]} : vector<2x192xf32> to vector<2x64xf32>
    %77 = vector.extract_strided_slice %73 {offsets = [0, 64], sizes = [2, 64], strides = [1, 1]} : vector<2x192xf32> to vector<2x64xf32>
    %78 = vector.extract_strided_slice %73 {offsets = [0, 128], sizes = [2, 64], strides = [1, 1]} : vector<2x192xf32> to vector<2x64xf32>
    %79 = arith.mulf %77, %55 : vector<2x64xf32>
    %80 = arith.mulf %76, %75 : vector<2x64xf32>
    %81 = arith.addf %79, %80 : vector<2x64xf32>
    %82 = math.tanh %81 : vector<2x64xf32>
    %83 = arith.mulf %78, %82 : vector<2x64xf32>
    %cst_31 = arith.constant 0.000000e+00 : f32
    %84 = vector.broadcast %cst_31 : f32 to vector<2x64xf32>
    %85 = arith.maximumf %83, %84 : vector<2x64xf32>
    %86 = arith.truncf %59 : vector<2x64xf32> to vector<2x64xbf16>
    %cst_32 = arith.constant dense<0.000000e+00> : vector<2x512xf32>
    %87 = tpu.matmul %86, %2, %cst_32 {dimension_numbers = #tpu.dot_dimension_numbers<[1], [0], [0], [1], [0, 0, 1, 1], [], []>} : vector<2x64xbf16>, vector<64x512xbf16>, vector<2x512xf32> -> vector<2x512xf32>
    %88 = arith.truncf %30 : vector<2x128xf32> to vector<2x128xbf16>
    %cst_33 = arith.constant dense<0.000000e+00> : vector<2x512xf32>
    %89 = tpu.matmul %88, %3, %cst_33 {dimension_numbers = #tpu.dot_dimension_numbers<[1], [0], [0], [1], [0, 0, 1, 1], [], []>} : vector<2x128xbf16>, vector<128x512xbf16>, vector<2x512xf32> -> vector<2x512xf32>
    %90 = arith.addf %87, %89 : vector<2x512xf32>
    %91 = arith.addf %90, %14 : vector<2x512xf32>
    %92 = vector.extract_strided_slice %91 {offsets = [0, 0], sizes = [2, 384], strides = [1, 1]} : vector<2x512xf32> to vector<2x384xf32>
    %93 = arith.negf %92 : vector<2x384xf32>
    %94 = math.exp %93 : vector<2x384xf32>
    %cst_34 = arith.constant 1.000000e+00 : f32
    %95 = vector.broadcast %cst_34 : f32 to vector<2x384xf32>
    %96 = arith.addf %95, %94 : vector<2x384xf32>
    %97 = arith.divf %95, %96 : vector<2x384xf32>
    %98 = vector.extract_strided_slice %91 {offsets = [0, 384], sizes = [2, 128], strides = [1, 1]} : vector<2x512xf32> to vector<2x128xf32>
    %99 = math.tanh %98 : vector<2x128xf32>
    %100 = vector.extract_strided_slice %97 {offsets = [0, 0], sizes = [2, 128], strides = [1, 1]} : vector<2x384xf32> to vector<2x128xf32>
    %101 = vector.extract_strided_slice %97 {offsets = [0, 128], sizes = [2, 128], strides = [1, 1]} : vector<2x384xf32> to vector<2x128xf32>
    %102 = vector.extract_strided_slice %97 {offsets = [0, 256], sizes = [2, 128], strides = [1, 1]} : vector<2x384xf32> to vector<2x128xf32>
    %103 = arith.mulf %101, %31 : vector<2x128xf32>
    %104 = arith.mulf %100, %99 : vector<2x128xf32>
    %105 = arith.addf %103, %104 : vector<2x128xf32>
    %106 = math.tanh %105 : vector<2x128xf32>
    %107 = arith.mulf %102, %106 : vector<2x128xf32>
    %cst_35 = arith.constant 0.000000e+00 : f32
    %108 = vector.broadcast %cst_35 : f32 to vector<2x128xf32>
    %109 = arith.maximumf %107, %108 : vector<2x128xf32>
    %110 = vector.extract_strided_slice %27 {offsets = [0, 2, 0], sizes = [2, 1, 16], strides = [1, 1, 1]} : vector<2x8x16xf32> to vector<2x1x16xf32>
    %111 = vector.shape_cast %110 : vector<2x1x16xf32> to vector<2x16xf32>
    %112 = arith.truncf %111 : vector<2x16xf32> to vector<2x16xbf16>
    %cst_36 = arith.constant dense<0.000000e+00> : vector<2x256xf32>
    %113 = tpu.matmul %112, %0, %cst_36 {dimension_numbers = #tpu.dot_dimension_numbers<[1], [0], [0], [1], [0, 0, 1, 1], [], []>} : vector<2x16xbf16>, vector<16x256xbf16>, vector<2x256xf32> -> vector<2x256xf32>
    %114 = arith.truncf %83 : vector<2x64xf32> to vector<2x64xbf16>
    %cst_37 = arith.constant dense<0.000000e+00> : vector<2x256xf32>
    %115 = tpu.matmul %114, %1, %cst_37 {dimension_numbers = #tpu.dot_dimension_numbers<[1], [0], [0], [1], [0, 0, 1, 1], [], []>} : vector<2x64xbf16>, vector<64x256xbf16>, vector<2x256xf32> -> vector<2x256xf32>
    %116 = arith.addf %113, %115 : vector<2x256xf32>
    %117 = arith.addf %116, %11 : vector<2x256xf32>
    %118 = vector.extract_strided_slice %117 {offsets = [0, 0], sizes = [2, 192], strides = [1, 1]} : vector<2x256xf32> to vector<2x192xf32>
    %119 = arith.negf %118 : vector<2x192xf32>
    %120 = math.exp %119 : vector<2x192xf32>
    %cst_38 = arith.constant 1.000000e+00 : f32
    %121 = vector.broadcast %cst_38 : f32 to vector<2x192xf32>
    %122 = arith.addf %121, %120 : vector<2x192xf32>
    %123 = arith.divf %121, %122 : vector<2x192xf32>
    %124 = vector.extract_strided_slice %117 {offsets = [0, 192], sizes = [2, 64], strides = [1, 1]} : vector<2x256xf32> to vector<2x64xf32>
    %125 = math.tanh %124 : vector<2x64xf32>
    %126 = vector.extract_strided_slice %123 {offsets = [0, 0], sizes = [2, 64], strides = [1, 1]} : vector<2x192xf32> to vector<2x64xf32>
    %127 = vector.extract_strided_slice %123 {offsets = [0, 64], sizes = [2, 64], strides = [1, 1]} : vector<2x192xf32> to vector<2x64xf32>
    %128 = vector.extract_strided_slice %123 {offsets = [0, 128], sizes = [2, 64], strides = [1, 1]} : vector<2x192xf32> to vector<2x64xf32>
    %129 = arith.mulf %127, %81 : vector<2x64xf32>
    %130 = arith.mulf %126, %125 : vector<2x64xf32>
    %131 = arith.addf %129, %130 : vector<2x64xf32>
    %132 = math.tanh %131 : vector<2x64xf32>
    %133 = arith.mulf %128, %132 : vector<2x64xf32>
    %cst_39 = arith.constant 0.000000e+00 : f32
    %134 = vector.broadcast %cst_39 : f32 to vector<2x64xf32>
    %135 = arith.maximumf %133, %134 : vector<2x64xf32>
    %136 = arith.truncf %85 : vector<2x64xf32> to vector<2x64xbf16>
    %cst_40 = arith.constant dense<0.000000e+00> : vector<2x512xf32>
    %137 = tpu.matmul %136, %2, %cst_40 {dimension_numbers = #tpu.dot_dimension_numbers<[1], [0], [0], [1], [0, 0, 1, 1], [], []>} : vector<2x64xbf16>, vector<64x512xbf16>, vector<2x512xf32> -> vector<2x512xf32>
    %138 = arith.truncf %107 : vector<2x128xf32> to vector<2x128xbf16>
    %cst_41 = arith.constant dense<0.000000e+00> : vector<2x512xf32>
    %139 = tpu.matmul %138, %3, %cst_41 {dimension_numbers = #tpu.dot_dimension_numbers<[1], [0], [0], [1], [0, 0, 1, 1], [], []>} : vector<2x128xbf16>, vector<128x512xbf16>, vector<2x512xf32> -> vector<2x512xf32>
    %140 = arith.addf %137, %139 : vector<2x512xf32>
    %141 = arith.addf %140, %14 : vector<2x512xf32>
    %142 = vector.extract_strided_slice %141 {offsets = [0, 0], sizes = [2, 384], strides = [1, 1]} : vector<2x512xf32> to vector<2x384xf32>
    %143 = arith.negf %142 : vector<2x384xf32>
    %144 = math.exp %143 : vector<2x384xf32>
    %cst_42 = arith.constant 1.000000e+00 : f32
    %145 = vector.broadcast %cst_42 : f32 to vector<2x384xf32>
    %146 = arith.addf %145, %144 : vector<2x384xf32>
    %147 = arith.divf %145, %146 : vector<2x384xf32>
    %148 = vector.extract_strided_slice %141 {offsets = [0, 384], sizes = [2, 128], strides = [1, 1]} : vector<2x512xf32> to vector<2x128xf32>
    %149 = math.tanh %148 : vector<2x128xf32>
    %150 = vector.extract_strided_slice %147 {offsets = [0, 0], sizes = [2, 128], strides = [1, 1]} : vector<2x384xf32> to vector<2x128xf32>
    %151 = vector.extract_strided_slice %147 {offsets = [0, 128], sizes = [2, 128], strides = [1, 1]} : vector<2x384xf32> to vector<2x128xf32>
    %152 = vector.extract_strided_slice %147 {offsets = [0, 256], sizes = [2, 128], strides = [1, 1]} : vector<2x384xf32> to vector<2x128xf32>
    %153 = arith.mulf %151, %105 : vector<2x128xf32>
    %154 = arith.mulf %150, %149 : vector<2x128xf32>
    %155 = arith.addf %153, %154 : vector<2x128xf32>
    %156 = math.tanh %155 : vector<2x128xf32>
    %157 = arith.mulf %152, %156 : vector<2x128xf32>
    %cst_43 = arith.constant 0.000000e+00 : f32
    %158 = vector.broadcast %cst_43 : f32 to vector<2x128xf32>
    %159 = arith.maximumf %157, %158 : vector<2x128xf32>
    %160 = arith.truncf %109 : vector<2x128xf32> to vector<2x128xbf16>
    %cst_44 = arith.constant dense<0.000000e+00> : vector<2x256xf32>
    %161 = tpu.matmul %160, %4, %cst_44 {dimension_numbers = #tpu.dot_dimension_numbers<[1], [0], [0], [1], [0, 0, 1, 1], [], []>} : vector<2x128xbf16>, vector<128x256xbf16>, vector<2x256xf32> -> vector<2x256xf32>
    %162 = arith.truncf %32 : vector<2x64xf32> to vector<2x64xbf16>
    %cst_45 = arith.constant dense<0.000000e+00> : vector<2x256xf32>
    %163 = tpu.matmul %162, %5, %cst_45 {dimension_numbers = #tpu.dot_dimension_numbers<[1], [0], [0], [1], [0, 0, 1, 1], [], []>} : vector<2x64xbf16>, vector<64x256xbf16>, vector<2x256xf32> -> vector<2x256xf32>
    %164 = arith.addf %161, %163 : vector<2x256xf32>
    %165 = arith.addf %164, %17 : vector<2x256xf32>
    %166 = vector.extract_strided_slice %165 {offsets = [0, 0], sizes = [2, 192], strides = [1, 1]} : vector<2x256xf32> to vector<2x192xf32>
    %167 = arith.negf %166 : vector<2x192xf32>
    %168 = math.exp %167 : vector<2x192xf32>
    %cst_46 = arith.constant 1.000000e+00 : f32
    %169 = vector.broadcast %cst_46 : f32 to vector<2x192xf32>
    %170 = arith.addf %169, %168 : vector<2x192xf32>
    %171 = arith.divf %169, %170 : vector<2x192xf32>
    %172 = vector.extract_strided_slice %165 {offsets = [0, 192], sizes = [2, 64], strides = [1, 1]} : vector<2x256xf32> to vector<2x64xf32>
    %173 = math.tanh %172 : vector<2x64xf32>
    %174 = vector.extract_strided_slice %171 {offsets = [0, 0], sizes = [2, 64], strides = [1, 1]} : vector<2x192xf32> to vector<2x64xf32>
    %175 = vector.extract_strided_slice %171 {offsets = [0, 64], sizes = [2, 64], strides = [1, 1]} : vector<2x192xf32> to vector<2x64xf32>
    %176 = vector.extract_strided_slice %171 {offsets = [0, 128], sizes = [2, 64], strides = [1, 1]} : vector<2x192xf32> to vector<2x64xf32>
    %177 = arith.mulf %175, %33 : vector<2x64xf32>
    %178 = arith.mulf %174, %173 : vector<2x64xf32>
    %179 = arith.addf %177, %178 : vector<2x64xf32>
    %180 = math.tanh %179 : vector<2x64xf32>
    %181 = arith.mulf %176, %180 : vector<2x64xf32>
    %182 = vector.extract_strided_slice %27 {offsets = [0, 3, 0], sizes = [2, 1, 16], strides = [1, 1, 1]} : vector<2x8x16xf32> to vector<2x1x16xf32>
    %183 = vector.shape_cast %182 : vector<2x1x16xf32> to vector<2x16xf32>
    %184 = arith.truncf %183 : vector<2x16xf32> to vector<2x16xbf16>
    %cst_47 = arith.constant dense<0.000000e+00> : vector<2x256xf32>
    %185 = tpu.matmul %184, %0, %cst_47 {dimension_numbers = #tpu.dot_dimension_numbers<[1], [0], [0], [1], [0, 0, 1, 1], [], []>} : vector<2x16xbf16>, vector<16x256xbf16>, vector<2x256xf32> -> vector<2x256xf32>
    %186 = arith.truncf %133 : vector<2x64xf32> to vector<2x64xbf16>
    %cst_48 = arith.constant dense<0.000000e+00> : vector<2x256xf32>
    %187 = tpu.matmul %186, %1, %cst_48 {dimension_numbers = #tpu.dot_dimension_numbers<[1], [0], [0], [1], [0, 0, 1, 1], [], []>} : vector<2x64xbf16>, vector<64x256xbf16>, vector<2x256xf32> -> vector<2x256xf32>
    %188 = arith.addf %185, %187 : vector<2x256xf32>
    %189 = arith.addf %188, %11 : vector<2x256xf32>
    %190 = vector.extract_strided_slice %189 {offsets = [0, 0], sizes = [2, 192], strides = [1, 1]} : vector<2x256xf32> to vector<2x192xf32>
    %191 = arith.negf %190 : vector<2x192xf32>
    %192 = math.exp %191 : vector<2x192xf32>
    %cst_49 = arith.constant 1.000000e+00 : f32
    %193 = vector.broadcast %cst_49 : f32 to vector<2x192xf32>
    %194 = arith.addf %193, %192 : vector<2x192xf32>
    %195 = arith.divf %193, %194 : vector<2x192xf32>
    %196 = vector.extract_strided_slice %189 {offsets = [0, 192], sizes = [2, 64], strides = [1, 1]} : vector<2x256xf32> to vector<2x64xf32>
    %197 = math.tanh %196 : vector<2x64xf32>
    %198 = vector.extract_strided_slice %195 {offsets = [0, 0], sizes = [2, 64], strides = [1, 1]} : vector<2x192xf32> to vector<2x64xf32>
    %199 = vector.extract_strided_slice %195 {offsets = [0, 64], sizes = [2, 64], strides = [1, 1]} : vector<2x192xf32> to vector<2x64xf32>
    %200 = vector.extract_strided_slice %195 {offsets = [0, 128], sizes = [2, 64], strides = [1, 1]} : vector<2x192xf32> to vector<2x64xf32>
    %201 = arith.mulf %199, %131 : vector<2x64xf32>
    %202 = arith.mulf %198, %197 : vector<2x64xf32>
    %203 = arith.addf %201, %202 : vector<2x64xf32>
    %204 = math.tanh %203 : vector<2x64xf32>
    %205 = arith.mulf %200, %204 : vector<2x64xf32>
    %cst_50 = arith.constant 0.000000e+00 : f32
    %206 = vector.broadcast %cst_50 : f32 to vector<2x64xf32>
    %207 = arith.maximumf %205, %206 : vector<2x64xf32>
    %208 = arith.truncf %135 : vector<2x64xf32> to vector<2x64xbf16>
    %cst_51 = arith.constant dense<0.000000e+00> : vector<2x512xf32>
    %209 = tpu.matmul %208, %2, %cst_51 {dimension_numbers = #tpu.dot_dimension_numbers<[1], [0], [0], [1], [0, 0, 1, 1], [], []>} : vector<2x64xbf16>, vector<64x512xbf16>, vector<2x512xf32> -> vector<2x512xf32>
    %210 = arith.truncf %157 : vector<2x128xf32> to vector<2x128xbf16>
    %cst_52 = arith.constant dense<0.000000e+00> : vector<2x512xf32>
    %211 = tpu.matmul %210, %3, %cst_52 {dimension_numbers = #tpu.dot_dimension_numbers<[1], [0], [0], [1], [0, 0, 1, 1], [], []>} : vector<2x128xbf16>, vector<128x512xbf16>, vector<2x512xf32> -> vector<2x512xf32>
    %212 = arith.addf %209, %211 : vector<2x512xf32>
    %213 = arith.addf %212, %14 : vector<2x512xf32>
    %214 = vector.extract_strided_slice %213 {offsets = [0, 0], sizes = [2, 384], strides = [1, 1]} : vector<2x512xf32> to vector<2x384xf32>
    %215 = arith.negf %214 : vector<2x384xf32>
    %216 = math.exp %215 : vector<2x384xf32>
    %cst_53 = arith.constant 1.000000e+00 : f32
    %217 = vector.broadcast %cst_53 : f32 to vector<2x384xf32>
    %218 = arith.addf %217, %216 : vector<2x384xf32>
    %219 = arith.divf %217, %218 : vector<2x384xf32>
    %220 = vector.extract_strided_slice %213 {offsets = [0, 384], sizes = [2, 128], strides = [1, 1]} : vector<2x512xf32> to vector<2x128xf32>
    %221 = math.tanh %220 : vector<2x128xf32>
    %222 = vector.extract_strided_slice %219 {offsets = [0, 0], sizes = [2, 128], strides = [1, 1]} : vector<2x384xf32> to vector<2x128xf32>
    %223 = vector.extract_strided_slice %219 {offsets = [0, 128], sizes = [2, 128], strides = [1, 1]} : vector<2x384xf32> to vector<2x128xf32>
    %224 = vector.extract_strided_slice %219 {offsets = [0, 256], sizes = [2, 128], strides = [1, 1]} : vector<2x384xf32> to vector<2x128xf32>
    %225 = arith.mulf %223, %155 : vector<2x128xf32>
    %226 = arith.mulf %222, %221 : vector<2x128xf32>
    %227 = arith.addf %225, %226 : vector<2x128xf32>
    %228 = math.tanh %227 : vector<2x128xf32>
    %229 = arith.mulf %224, %228 : vector<2x128xf32>
    %cst_54 = arith.constant 0.000000e+00 : f32
    %230 = vector.broadcast %cst_54 : f32 to vector<2x128xf32>
    %231 = arith.maximumf %229, %230 : vector<2x128xf32>
    %232 = arith.truncf %159 : vector<2x128xf32> to vector<2x128xbf16>
    %cst_55 = arith.constant dense<0.000000e+00> : vector<2x256xf32>
    %233 = tpu.matmul %232, %4, %cst_55 {dimension_numbers = #tpu.dot_dimension_numbers<[1], [0], [0], [1], [0, 0, 1, 1], [], []>} : vector<2x128xbf16>, vector<128x256xbf16>, vector<2x256xf32> -> vector<2x256xf32>
    %234 = arith.truncf %181 : vector<2x64xf32> to vector<2x64xbf16>
    %cst_56 = arith.constant dense<0.000000e+00> : vector<2x256xf32>
    %235 = tpu.matmul %234, %5, %cst_56 {dimension_numbers = #tpu.dot_dimension_numbers<[1], [0], [0], [1], [0, 0, 1, 1], [], []>} : vector<2x64xbf16>, vector<64x256xbf16>, vector<2x256xf32> -> vector<2x256xf32>
    %236 = arith.addf %233, %235 : vector<2x256xf32>
    %237 = arith.addf %236, %17 : vector<2x256xf32>
    %238 = vector.extract_strided_slice %237 {offsets = [0, 0], sizes = [2, 192], strides = [1, 1]} : vector<2x256xf32> to vector<2x192xf32>
    %239 = arith.negf %238 : vector<2x192xf32>
    %240 = math.exp %239 : vector<2x192xf32>
    %cst_57 = arith.constant 1.000000e+00 : f32
    %241 = vector.broadcast %cst_57 : f32 to vector<2x192xf32>
    %242 = arith.addf %241, %240 : vector<2x192xf32>
    %243 = arith.divf %241, %242 : vector<2x192xf32>
    %244 = vector.extract_strided_slice %237 {offsets = [0, 192], sizes = [2, 64], strides = [1, 1]} : vector<2x256xf32> to vector<2x64xf32>
    %245 = math.tanh %244 : vector<2x64xf32>
    %246 = vector.extract_strided_slice %243 {offsets = [0, 0], sizes = [2, 64], strides = [1, 1]} : vector<2x192xf32> to vector<2x64xf32>
    %247 = vector.extract_strided_slice %243 {offsets = [0, 64], sizes = [2, 64], strides = [1, 1]} : vector<2x192xf32> to vector<2x64xf32>
    %248 = vector.extract_strided_slice %243 {offsets = [0, 128], sizes = [2, 64], strides = [1, 1]} : vector<2x192xf32> to vector<2x64xf32>
    %249 = arith.mulf %247, %179 : vector<2x64xf32>
    %250 = arith.mulf %246, %245 : vector<2x64xf32>
    %251 = arith.addf %249, %250 : vector<2x64xf32>
    %252 = math.tanh %251 : vector<2x64xf32>
    %253 = arith.mulf %248, %252 : vector<2x64xf32>
    %254 = vector.extract_strided_slice %27 {offsets = [0, 4, 0], sizes = [2, 1, 16], strides = [1, 1, 1]} : vector<2x8x16xf32> to vector<2x1x16xf32>
    %255 = vector.shape_cast %254 : vector<2x1x16xf32> to vector<2x16xf32>
    %256 = arith.truncf %255 : vector<2x16xf32> to vector<2x16xbf16>
    %cst_58 = arith.constant dense<0.000000e+00> : vector<2x256xf32>
    %257 = tpu.matmul %256, %0, %cst_58 {dimension_numbers = #tpu.dot_dimension_numbers<[1], [0], [0], [1], [0, 0, 1, 1], [], []>} : vector<2x16xbf16>, vector<16x256xbf16>, vector<2x256xf32> -> vector<2x256xf32>
    %258 = arith.truncf %205 : vector<2x64xf32> to vector<2x64xbf16>
    %cst_59 = arith.constant dense<0.000000e+00> : vector<2x256xf32>
    %259 = tpu.matmul %258, %1, %cst_59 {dimension_numbers = #tpu.dot_dimension_numbers<[1], [0], [0], [1], [0, 0, 1, 1], [], []>} : vector<2x64xbf16>, vector<64x256xbf16>, vector<2x256xf32> -> vector<2x256xf32>
    %260 = arith.addf %257, %259 : vector<2x256xf32>
    %261 = arith.addf %260, %11 : vector<2x256xf32>
    %262 = vector.extract_strided_slice %261 {offsets = [0, 0], sizes = [2, 192], strides = [1, 1]} : vector<2x256xf32> to vector<2x192xf32>
    %263 = arith.negf %262 : vector<2x192xf32>
    %264 = math.exp %263 : vector<2x192xf32>
    %cst_60 = arith.constant 1.000000e+00 : f32
    %265 = vector.broadcast %cst_60 : f32 to vector<2x192xf32>
    %266 = arith.addf %265, %264 : vector<2x192xf32>
    %267 = arith.divf %265, %266 : vector<2x192xf32>
    %268 = vector.extract_strided_slice %261 {offsets = [0, 192], sizes = [2, 64], strides = [1, 1]} : vector<2x256xf32> to vector<2x64xf32>
    %269 = math.tanh %268 : vector<2x64xf32>
    %270 = vector.extract_strided_slice %267 {offsets = [0, 0], sizes = [2, 64], strides = [1, 1]} : vector<2x192xf32> to vector<2x64xf32>
    %271 = vector.extract_strided_slice %267 {offsets = [0, 64], sizes = [2, 64], strides = [1, 1]} : vector<2x192xf32> to vector<2x64xf32>
    %272 = vector.extract_strided_slice %267 {offsets = [0, 128], sizes = [2, 64], strides = [1, 1]} : vector<2x192xf32> to vector<2x64xf32>
    %273 = arith.mulf %271, %203 : vector<2x64xf32>
    %274 = arith.mulf %270, %269 : vector<2x64xf32>
    %275 = arith.addf %273, %274 : vector<2x64xf32>
    %276 = math.tanh %275 : vector<2x64xf32>
    %277 = arith.mulf %272, %276 : vector<2x64xf32>
    %cst_61 = arith.constant 0.000000e+00 : f32
    %278 = vector.broadcast %cst_61 : f32 to vector<2x64xf32>
    %279 = arith.maximumf %277, %278 : vector<2x64xf32>
    %280 = arith.truncf %207 : vector<2x64xf32> to vector<2x64xbf16>
    %cst_62 = arith.constant dense<0.000000e+00> : vector<2x512xf32>
    %281 = tpu.matmul %280, %2, %cst_62 {dimension_numbers = #tpu.dot_dimension_numbers<[1], [0], [0], [1], [0, 0, 1, 1], [], []>} : vector<2x64xbf16>, vector<64x512xbf16>, vector<2x512xf32> -> vector<2x512xf32>
    %282 = arith.truncf %229 : vector<2x128xf32> to vector<2x128xbf16>
    %cst_63 = arith.constant dense<0.000000e+00> : vector<2x512xf32>
    %283 = tpu.matmul %282, %3, %cst_63 {dimension_numbers = #tpu.dot_dimension_numbers<[1], [0], [0], [1], [0, 0, 1, 1], [], []>} : vector<2x128xbf16>, vector<128x512xbf16>, vector<2x512xf32> -> vector<2x512xf32>
    %284 = arith.addf %281, %283 : vector<2x512xf32>
    %285 = arith.addf %284, %14 : vector<2x512xf32>
    %286 = vector.extract_strided_slice %285 {offsets = [0, 0], sizes = [2, 384], strides = [1, 1]} : vector<2x512xf32> to vector<2x384xf32>
    %287 = arith.negf %286 : vector<2x384xf32>
    %288 = math.exp %287 : vector<2x384xf32>
    %cst_64 = arith.constant 1.000000e+00 : f32
    %289 = vector.broadcast %cst_64 : f32 to vector<2x384xf32>
    %290 = arith.addf %289, %288 : vector<2x384xf32>
    %291 = arith.divf %289, %290 : vector<2x384xf32>
    %292 = vector.extract_strided_slice %285 {offsets = [0, 384], sizes = [2, 128], strides = [1, 1]} : vector<2x512xf32> to vector<2x128xf32>
    %293 = math.tanh %292 : vector<2x128xf32>
    %294 = vector.extract_strided_slice %291 {offsets = [0, 0], sizes = [2, 128], strides = [1, 1]} : vector<2x384xf32> to vector<2x128xf32>
    %295 = vector.extract_strided_slice %291 {offsets = [0, 128], sizes = [2, 128], strides = [1, 1]} : vector<2x384xf32> to vector<2x128xf32>
    %296 = vector.extract_strided_slice %291 {offsets = [0, 256], sizes = [2, 128], strides = [1, 1]} : vector<2x384xf32> to vector<2x128xf32>
    %297 = arith.mulf %295, %227 : vector<2x128xf32>
    %298 = arith.mulf %294, %293 : vector<2x128xf32>
    %299 = arith.addf %297, %298 : vector<2x128xf32>
    %300 = math.tanh %299 : vector<2x128xf32>
    %301 = arith.mulf %296, %300 : vector<2x128xf32>
    %cst_65 = arith.constant 0.000000e+00 : f32
    %302 = vector.broadcast %cst_65 : f32 to vector<2x128xf32>
    %303 = arith.maximumf %301, %302 : vector<2x128xf32>
    %304 = arith.truncf %231 : vector<2x128xf32> to vector<2x128xbf16>
    %cst_66 = arith.constant dense<0.000000e+00> : vector<2x256xf32>
    %305 = tpu.matmul %304, %4, %cst_66 {dimension_numbers = #tpu.dot_dimension_numbers<[1], [0], [0], [1], [0, 0, 1, 1], [], []>} : vector<2x128xbf16>, vector<128x256xbf16>, vector<2x256xf32> -> vector<2x256xf32>
    %306 = arith.truncf %253 : vector<2x64xf32> to vector<2x64xbf16>
    %cst_67 = arith.constant dense<0.000000e+00> : vector<2x256xf32>
    %307 = tpu.matmul %306, %5, %cst_67 {dimension_numbers = #tpu.dot_dimension_numbers<[1], [0], [0], [1], [0, 0, 1, 1], [], []>} : vector<2x64xbf16>, vector<64x256xbf16>, vector<2x256xf32> -> vector<2x256xf32>
    %308 = arith.addf %305, %307 : vector<2x256xf32>
    %309 = arith.addf %308, %17 : vector<2x256xf32>
    %310 = vector.extract_strided_slice %309 {offsets = [0, 0], sizes = [2, 192], strides = [1, 1]} : vector<2x256xf32> to vector<2x192xf32>
    %311 = arith.negf %310 : vector<2x192xf32>
    %312 = math.exp %311 : vector<2x192xf32>
    %cst_68 = arith.constant 1.000000e+00 : f32
    %313 = vector.broadcast %cst_68 : f32 to vector<2x192xf32>
    %314 = arith.addf %313, %312 : vector<2x192xf32>
    %315 = arith.divf %313, %314 : vector<2x192xf32>
    %316 = vector.extract_strided_slice %309 {offsets = [0, 192], sizes = [2, 64], strides = [1, 1]} : vector<2x256xf32> to vector<2x64xf32>
    %317 = math.tanh %316 : vector<2x64xf32>
    %318 = vector.extract_strided_slice %315 {offsets = [0, 0], sizes = [2, 64], strides = [1, 1]} : vector<2x192xf32> to vector<2x64xf32>
    %319 = vector.extract_strided_slice %315 {offsets = [0, 64], sizes = [2, 64], strides = [1, 1]} : vector<2x192xf32> to vector<2x64xf32>
    %320 = vector.extract_strided_slice %315 {offsets = [0, 128], sizes = [2, 64], strides = [1, 1]} : vector<2x192xf32> to vector<2x64xf32>
    %321 = arith.mulf %319, %251 : vector<2x64xf32>
    %322 = arith.mulf %318, %317 : vector<2x64xf32>
    %323 = arith.addf %321, %322 : vector<2x64xf32>
    %324 = math.tanh %323 : vector<2x64xf32>
    %325 = arith.mulf %320, %324 : vector<2x64xf32>
    %326 = vector.extract_strided_slice %27 {offsets = [0, 5, 0], sizes = [2, 1, 16], strides = [1, 1, 1]} : vector<2x8x16xf32> to vector<2x1x16xf32>
    %327 = vector.shape_cast %326 : vector<2x1x16xf32> to vector<2x16xf32>
    %328 = arith.truncf %327 : vector<2x16xf32> to vector<2x16xbf16>
    %cst_69 = arith.constant dense<0.000000e+00> : vector<2x256xf32>
    %329 = tpu.matmul %328, %0, %cst_69 {dimension_numbers = #tpu.dot_dimension_numbers<[1], [0], [0], [1], [0, 0, 1, 1], [], []>} : vector<2x16xbf16>, vector<16x256xbf16>, vector<2x256xf32> -> vector<2x256xf32>
    %330 = arith.truncf %277 : vector<2x64xf32> to vector<2x64xbf16>
    %cst_70 = arith.constant dense<0.000000e+00> : vector<2x256xf32>
    %331 = tpu.matmul %330, %1, %cst_70 {dimension_numbers = #tpu.dot_dimension_numbers<[1], [0], [0], [1], [0, 0, 1, 1], [], []>} : vector<2x64xbf16>, vector<64x256xbf16>, vector<2x256xf32> -> vector<2x256xf32>
    %332 = arith.addf %329, %331 : vector<2x256xf32>
    %333 = arith.addf %332, %11 : vector<2x256xf32>
    %334 = vector.extract_strided_slice %333 {offsets = [0, 0], sizes = [2, 192], strides = [1, 1]} : vector<2x256xf32> to vector<2x192xf32>
    %335 = arith.negf %334 : vector<2x192xf32>
    %336 = math.exp %335 : vector<2x192xf32>
    %cst_71 = arith.constant 1.000000e+00 : f32
    %337 = vector.broadcast %cst_71 : f32 to vector<2x192xf32>
    %338 = arith.addf %337, %336 : vector<2x192xf32>
    %339 = arith.divf %337, %338 : vector<2x192xf32>
    %340 = vector.extract_strided_slice %333 {offsets = [0, 192], sizes = [2, 64], strides = [1, 1]} : vector<2x256xf32> to vector<2x64xf32>
    %341 = math.tanh %340 : vector<2x64xf32>
    %342 = vector.extract_strided_slice %339 {offsets = [0, 0], sizes = [2, 64], strides = [1, 1]} : vector<2x192xf32> to vector<2x64xf32>
    %343 = vector.extract_strided_slice %339 {offsets = [0, 64], sizes = [2, 64], strides = [1, 1]} : vector<2x192xf32> to vector<2x64xf32>
    %344 = vector.extract_strided_slice %339 {offsets = [0, 128], sizes = [2, 64], strides = [1, 1]} : vector<2x192xf32> to vector<2x64xf32>
    %345 = arith.mulf %343, %275 : vector<2x64xf32>
    %346 = arith.mulf %342, %341 : vector<2x64xf32>
    %347 = arith.addf %345, %346 : vector<2x64xf32>
    %348 = math.tanh %347 : vector<2x64xf32>
    %349 = arith.mulf %344, %348 : vector<2x64xf32>
    %cst_72 = arith.constant 0.000000e+00 : f32
    %350 = vector.broadcast %cst_72 : f32 to vector<2x64xf32>
    %351 = arith.maximumf %349, %350 : vector<2x64xf32>
    %352 = arith.truncf %279 : vector<2x64xf32> to vector<2x64xbf16>
    %cst_73 = arith.constant dense<0.000000e+00> : vector<2x512xf32>
    %353 = tpu.matmul %352, %2, %cst_73 {dimension_numbers = #tpu.dot_dimension_numbers<[1], [0], [0], [1], [0, 0, 1, 1], [], []>} : vector<2x64xbf16>, vector<64x512xbf16>, vector<2x512xf32> -> vector<2x512xf32>
    %354 = arith.truncf %301 : vector<2x128xf32> to vector<2x128xbf16>
    %cst_74 = arith.constant dense<0.000000e+00> : vector<2x512xf32>
    %355 = tpu.matmul %354, %3, %cst_74 {dimension_numbers = #tpu.dot_dimension_numbers<[1], [0], [0], [1], [0, 0, 1, 1], [], []>} : vector<2x128xbf16>, vector<128x512xbf16>, vector<2x512xf32> -> vector<2x512xf32>
    %356 = arith.addf %353, %355 : vector<2x512xf32>
    %357 = arith.addf %356, %14 : vector<2x512xf32>
    %358 = vector.extract_strided_slice %357 {offsets = [0, 0], sizes = [2, 384], strides = [1, 1]} : vector<2x512xf32> to vector<2x384xf32>
    %359 = arith.negf %358 : vector<2x384xf32>
    %360 = math.exp %359 : vector<2x384xf32>
    %cst_75 = arith.constant 1.000000e+00 : f32
    %361 = vector.broadcast %cst_75 : f32 to vector<2x384xf32>
    %362 = arith.addf %361, %360 : vector<2x384xf32>
    %363 = arith.divf %361, %362 : vector<2x384xf32>
    %364 = vector.extract_strided_slice %357 {offsets = [0, 384], sizes = [2, 128], strides = [1, 1]} : vector<2x512xf32> to vector<2x128xf32>
    %365 = math.tanh %364 : vector<2x128xf32>
    %366 = vector.extract_strided_slice %363 {offsets = [0, 0], sizes = [2, 128], strides = [1, 1]} : vector<2x384xf32> to vector<2x128xf32>
    %367 = vector.extract_strided_slice %363 {offsets = [0, 128], sizes = [2, 128], strides = [1, 1]} : vector<2x384xf32> to vector<2x128xf32>
    %368 = vector.extract_strided_slice %363 {offsets = [0, 256], sizes = [2, 128], strides = [1, 1]} : vector<2x384xf32> to vector<2x128xf32>
    %369 = arith.mulf %367, %299 : vector<2x128xf32>
    %370 = arith.mulf %366, %365 : vector<2x128xf32>
    %371 = arith.addf %369, %370 : vector<2x128xf32>
    %372 = math.tanh %371 : vector<2x128xf32>
    %373 = arith.mulf %368, %372 : vector<2x128xf32>
    %cst_76 = arith.constant 0.000000e+00 : f32
    %374 = vector.broadcast %cst_76 : f32 to vector<2x128xf32>
    %375 = arith.maximumf %373, %374 : vector<2x128xf32>
    %376 = arith.truncf %303 : vector<2x128xf32> to vector<2x128xbf16>
    %cst_77 = arith.constant dense<0.000000e+00> : vector<2x256xf32>
    %377 = tpu.matmul %376, %4, %cst_77 {dimension_numbers = #tpu.dot_dimension_numbers<[1], [0], [0], [1], [0, 0, 1, 1], [], []>} : vector<2x128xbf16>, vector<128x256xbf16>, vector<2x256xf32> -> vector<2x256xf32>
    %378 = arith.truncf %325 : vector<2x64xf32> to vector<2x64xbf16>
    %cst_78 = arith.constant dense<0.000000e+00> : vector<2x256xf32>
    %379 = tpu.matmul %378, %5, %cst_78 {dimension_numbers = #tpu.dot_dimension_numbers<[1], [0], [0], [1], [0, 0, 1, 1], [], []>} : vector<2x64xbf16>, vector<64x256xbf16>, vector<2x256xf32> -> vector<2x256xf32>
    %380 = arith.addf %377, %379 : vector<2x256xf32>
    %381 = arith.addf %380, %17 : vector<2x256xf32>
    %382 = vector.extract_strided_slice %381 {offsets = [0, 0], sizes = [2, 192], strides = [1, 1]} : vector<2x256xf32> to vector<2x192xf32>
    %383 = arith.negf %382 : vector<2x192xf32>
    %384 = math.exp %383 : vector<2x192xf32>
    %cst_79 = arith.constant 1.000000e+00 : f32
    %385 = vector.broadcast %cst_79 : f32 to vector<2x192xf32>
    %386 = arith.addf %385, %384 : vector<2x192xf32>
    %387 = arith.divf %385, %386 : vector<2x192xf32>
    %388 = vector.extract_strided_slice %381 {offsets = [0, 192], sizes = [2, 64], strides = [1, 1]} : vector<2x256xf32> to vector<2x64xf32>
    %389 = math.tanh %388 : vector<2x64xf32>
    %390 = vector.extract_strided_slice %387 {offsets = [0, 0], sizes = [2, 64], strides = [1, 1]} : vector<2x192xf32> to vector<2x64xf32>
    %391 = vector.extract_strided_slice %387 {offsets = [0, 64], sizes = [2, 64], strides = [1, 1]} : vector<2x192xf32> to vector<2x64xf32>
    %392 = vector.extract_strided_slice %387 {offsets = [0, 128], sizes = [2, 64], strides = [1, 1]} : vector<2x192xf32> to vector<2x64xf32>
    %393 = arith.mulf %391, %323 : vector<2x64xf32>
    %394 = arith.mulf %390, %389 : vector<2x64xf32>
    %395 = arith.addf %393, %394 : vector<2x64xf32>
    %396 = math.tanh %395 : vector<2x64xf32>
    %397 = arith.mulf %392, %396 : vector<2x64xf32>
    %398 = vector.extract_strided_slice %27 {offsets = [0, 6, 0], sizes = [2, 1, 16], strides = [1, 1, 1]} : vector<2x8x16xf32> to vector<2x1x16xf32>
    %399 = vector.shape_cast %398 : vector<2x1x16xf32> to vector<2x16xf32>
    %400 = arith.truncf %399 : vector<2x16xf32> to vector<2x16xbf16>
    %cst_80 = arith.constant dense<0.000000e+00> : vector<2x256xf32>
    %401 = tpu.matmul %400, %0, %cst_80 {dimension_numbers = #tpu.dot_dimension_numbers<[1], [0], [0], [1], [0, 0, 1, 1], [], []>} : vector<2x16xbf16>, vector<16x256xbf16>, vector<2x256xf32> -> vector<2x256xf32>
    %402 = arith.truncf %349 : vector<2x64xf32> to vector<2x64xbf16>
    %cst_81 = arith.constant dense<0.000000e+00> : vector<2x256xf32>
    %403 = tpu.matmul %402, %1, %cst_81 {dimension_numbers = #tpu.dot_dimension_numbers<[1], [0], [0], [1], [0, 0, 1, 1], [], []>} : vector<2x64xbf16>, vector<64x256xbf16>, vector<2x256xf32> -> vector<2x256xf32>
    %404 = arith.addf %401, %403 : vector<2x256xf32>
    %405 = arith.addf %404, %11 : vector<2x256xf32>
    %406 = vector.extract_strided_slice %405 {offsets = [0, 0], sizes = [2, 192], strides = [1, 1]} : vector<2x256xf32> to vector<2x192xf32>
    %407 = arith.negf %406 : vector<2x192xf32>
    %408 = math.exp %407 : vector<2x192xf32>
    %cst_82 = arith.constant 1.000000e+00 : f32
    %409 = vector.broadcast %cst_82 : f32 to vector<2x192xf32>
    %410 = arith.addf %409, %408 : vector<2x192xf32>
    %411 = arith.divf %409, %410 : vector<2x192xf32>
    %412 = vector.extract_strided_slice %405 {offsets = [0, 192], sizes = [2, 64], strides = [1, 1]} : vector<2x256xf32> to vector<2x64xf32>
    %413 = math.tanh %412 : vector<2x64xf32>
    %414 = vector.extract_strided_slice %411 {offsets = [0, 0], sizes = [2, 64], strides = [1, 1]} : vector<2x192xf32> to vector<2x64xf32>
    %415 = vector.extract_strided_slice %411 {offsets = [0, 64], sizes = [2, 64], strides = [1, 1]} : vector<2x192xf32> to vector<2x64xf32>
    %416 = vector.extract_strided_slice %411 {offsets = [0, 128], sizes = [2, 64], strides = [1, 1]} : vector<2x192xf32> to vector<2x64xf32>
    %417 = arith.mulf %415, %347 : vector<2x64xf32>
    %418 = arith.mulf %414, %413 : vector<2x64xf32>
    %419 = arith.addf %417, %418 : vector<2x64xf32>
    %420 = math.tanh %419 : vector<2x64xf32>
    %421 = arith.mulf %416, %420 : vector<2x64xf32>
    %cst_83 = arith.constant 0.000000e+00 : f32
    %422 = vector.broadcast %cst_83 : f32 to vector<2x64xf32>
    %423 = arith.maximumf %421, %422 : vector<2x64xf32>
    %424 = arith.truncf %351 : vector<2x64xf32> to vector<2x64xbf16>
    %cst_84 = arith.constant dense<0.000000e+00> : vector<2x512xf32>
    %425 = tpu.matmul %424, %2, %cst_84 {dimension_numbers = #tpu.dot_dimension_numbers<[1], [0], [0], [1], [0, 0, 1, 1], [], []>} : vector<2x64xbf16>, vector<64x512xbf16>, vector<2x512xf32> -> vector<2x512xf32>
    %426 = arith.truncf %373 : vector<2x128xf32> to vector<2x128xbf16>
    %cst_85 = arith.constant dense<0.000000e+00> : vector<2x512xf32>
    %427 = tpu.matmul %426, %3, %cst_85 {dimension_numbers = #tpu.dot_dimension_numbers<[1], [0], [0], [1], [0, 0, 1, 1], [], []>} : vector<2x128xbf16>, vector<128x512xbf16>, vector<2x512xf32> -> vector<2x512xf32>
    %428 = arith.addf %425, %427 : vector<2x512xf32>
    %429 = arith.addf %428, %14 : vector<2x512xf32>
    %430 = vector.extract_strided_slice %429 {offsets = [0, 0], sizes = [2, 384], strides = [1, 1]} : vector<2x512xf32> to vector<2x384xf32>
    %431 = arith.negf %430 : vector<2x384xf32>
    %432 = math.exp %431 : vector<2x384xf32>
    %cst_86 = arith.constant 1.000000e+00 : f32
    %433 = vector.broadcast %cst_86 : f32 to vector<2x384xf32>
    %434 = arith.addf %433, %432 : vector<2x384xf32>
    %435 = arith.divf %433, %434 : vector<2x384xf32>
    %436 = vector.extract_strided_slice %429 {offsets = [0, 384], sizes = [2, 128], strides = [1, 1]} : vector<2x512xf32> to vector<2x128xf32>
    %437 = math.tanh %436 : vector<2x128xf32>
    %438 = vector.extract_strided_slice %435 {offsets = [0, 0], sizes = [2, 128], strides = [1, 1]} : vector<2x384xf32> to vector<2x128xf32>
    %439 = vector.extract_strided_slice %435 {offsets = [0, 128], sizes = [2, 128], strides = [1, 1]} : vector<2x384xf32> to vector<2x128xf32>
    %440 = vector.extract_strided_slice %435 {offsets = [0, 256], sizes = [2, 128], strides = [1, 1]} : vector<2x384xf32> to vector<2x128xf32>
    %441 = arith.mulf %439, %371 : vector<2x128xf32>
    %442 = arith.mulf %438, %437 : vector<2x128xf32>
    %443 = arith.addf %441, %442 : vector<2x128xf32>
    %444 = math.tanh %443 : vector<2x128xf32>
    %445 = arith.mulf %440, %444 : vector<2x128xf32>
    %cst_87 = arith.constant 0.000000e+00 : f32
    %446 = vector.broadcast %cst_87 : f32 to vector<2x128xf32>
    %447 = arith.maximumf %445, %446 : vector<2x128xf32>
    %448 = arith.truncf %375 : vector<2x128xf32> to vector<2x128xbf16>
    %cst_88 = arith.constant dense<0.000000e+00> : vector<2x256xf32>
    %449 = tpu.matmul %448, %4, %cst_88 {dimension_numbers = #tpu.dot_dimension_numbers<[1], [0], [0], [1], [0, 0, 1, 1], [], []>} : vector<2x128xbf16>, vector<128x256xbf16>, vector<2x256xf32> -> vector<2x256xf32>
    %450 = arith.truncf %397 : vector<2x64xf32> to vector<2x64xbf16>
    %cst_89 = arith.constant dense<0.000000e+00> : vector<2x256xf32>
    %451 = tpu.matmul %450, %5, %cst_89 {dimension_numbers = #tpu.dot_dimension_numbers<[1], [0], [0], [1], [0, 0, 1, 1], [], []>} : vector<2x64xbf16>, vector<64x256xbf16>, vector<2x256xf32> -> vector<2x256xf32>
    %452 = arith.addf %449, %451 : vector<2x256xf32>
    %453 = arith.addf %452, %17 : vector<2x256xf32>
    %454 = vector.extract_strided_slice %453 {offsets = [0, 0], sizes = [2, 192], strides = [1, 1]} : vector<2x256xf32> to vector<2x192xf32>
    %455 = arith.negf %454 : vector<2x192xf32>
    %456 = math.exp %455 : vector<2x192xf32>
    %cst_90 = arith.constant 1.000000e+00 : f32
    %457 = vector.broadcast %cst_90 : f32 to vector<2x192xf32>
    %458 = arith.addf %457, %456 : vector<2x192xf32>
    %459 = arith.divf %457, %458 : vector<2x192xf32>
    %460 = vector.extract_strided_slice %453 {offsets = [0, 192], sizes = [2, 64], strides = [1, 1]} : vector<2x256xf32> to vector<2x64xf32>
    %461 = math.tanh %460 : vector<2x64xf32>
    %462 = vector.extract_strided_slice %459 {offsets = [0, 0], sizes = [2, 64], strides = [1, 1]} : vector<2x192xf32> to vector<2x64xf32>
    %463 = vector.extract_strided_slice %459 {offsets = [0, 64], sizes = [2, 64], strides = [1, 1]} : vector<2x192xf32> to vector<2x64xf32>
    %464 = vector.extract_strided_slice %459 {offsets = [0, 128], sizes = [2, 64], strides = [1, 1]} : vector<2x192xf32> to vector<2x64xf32>
    %465 = arith.mulf %463, %395 : vector<2x64xf32>
    %466 = arith.mulf %462, %461 : vector<2x64xf32>
    %467 = arith.addf %465, %466 : vector<2x64xf32>
    %468 = math.tanh %467 : vector<2x64xf32>
    %469 = arith.mulf %464, %468 : vector<2x64xf32>
    %470 = vector.extract_strided_slice %27 {offsets = [0, 7, 0], sizes = [2, 1, 16], strides = [1, 1, 1]} : vector<2x8x16xf32> to vector<2x1x16xf32>
    %471 = vector.shape_cast %470 : vector<2x1x16xf32> to vector<2x16xf32>
    %472 = arith.truncf %471 : vector<2x16xf32> to vector<2x16xbf16>
    %cst_91 = arith.constant dense<0.000000e+00> : vector<2x256xf32>
    %473 = tpu.matmul %472, %0, %cst_91 {dimension_numbers = #tpu.dot_dimension_numbers<[1], [0], [0], [1], [0, 0, 1, 1], [], []>} : vector<2x16xbf16>, vector<16x256xbf16>, vector<2x256xf32> -> vector<2x256xf32>
    %474 = arith.truncf %421 : vector<2x64xf32> to vector<2x64xbf16>
    %cst_92 = arith.constant dense<0.000000e+00> : vector<2x256xf32>
    %475 = tpu.matmul %474, %1, %cst_92 {dimension_numbers = #tpu.dot_dimension_numbers<[1], [0], [0], [1], [0, 0, 1, 1], [], []>} : vector<2x64xbf16>, vector<64x256xbf16>, vector<2x256xf32> -> vector<2x256xf32>
    %476 = arith.addf %473, %475 : vector<2x256xf32>
    %477 = arith.addf %476, %11 : vector<2x256xf32>
    %478 = vector.extract_strided_slice %477 {offsets = [0, 0], sizes = [2, 192], strides = [1, 1]} : vector<2x256xf32> to vector<2x192xf32>
    %479 = arith.negf %478 : vector<2x192xf32>
    %480 = math.exp %479 : vector<2x192xf32>
    %cst_93 = arith.constant 1.000000e+00 : f32
    %481 = vector.broadcast %cst_93 : f32 to vector<2x192xf32>
    %482 = arith.addf %481, %480 : vector<2x192xf32>
    %483 = arith.divf %481, %482 : vector<2x192xf32>
    %484 = vector.extract_strided_slice %477 {offsets = [0, 192], sizes = [2, 64], strides = [1, 1]} : vector<2x256xf32> to vector<2x64xf32>
    %485 = math.tanh %484 : vector<2x64xf32>
    %486 = vector.extract_strided_slice %483 {offsets = [0, 0], sizes = [2, 64], strides = [1, 1]} : vector<2x192xf32> to vector<2x64xf32>
    %487 = vector.extract_strided_slice %483 {offsets = [0, 64], sizes = [2, 64], strides = [1, 1]} : vector<2x192xf32> to vector<2x64xf32>
    %488 = vector.extract_strided_slice %483 {offsets = [0, 128], sizes = [2, 64], strides = [1, 1]} : vector<2x192xf32> to vector<2x64xf32>
    %489 = arith.mulf %487, %419 : vector<2x64xf32>
    %490 = arith.mulf %486, %485 : vector<2x64xf32>
    %491 = arith.addf %489, %490 : vector<2x64xf32>
    %492 = math.tanh %491 : vector<2x64xf32>
    %493 = arith.mulf %488, %492 : vector<2x64xf32>
    %cst_94 = arith.constant 0.000000e+00 : f32
    %494 = vector.broadcast %cst_94 : f32 to vector<2x64xf32>
    %495 = arith.maximumf %493, %494 : vector<2x64xf32>
    %496 = arith.truncf %423 : vector<2x64xf32> to vector<2x64xbf16>
    %cst_95 = arith.constant dense<0.000000e+00> : vector<2x512xf32>
    %497 = tpu.matmul %496, %2, %cst_95 {dimension_numbers = #tpu.dot_dimension_numbers<[1], [0], [0], [1], [0, 0, 1, 1], [], []>} : vector<2x64xbf16>, vector<64x512xbf16>, vector<2x512xf32> -> vector<2x512xf32>
    %498 = arith.truncf %445 : vector<2x128xf32> to vector<2x128xbf16>
    %cst_96 = arith.constant dense<0.000000e+00> : vector<2x512xf32>
    %499 = tpu.matmul %498, %3, %cst_96 {dimension_numbers = #tpu.dot_dimension_numbers<[1], [0], [0], [1], [0, 0, 1, 1], [], []>} : vector<2x128xbf16>, vector<128x512xbf16>, vector<2x512xf32> -> vector<2x512xf32>
    %500 = arith.addf %497, %499 : vector<2x512xf32>
    %501 = arith.addf %500, %14 : vector<2x512xf32>
    %502 = vector.extract_strided_slice %501 {offsets = [0, 0], sizes = [2, 384], strides = [1, 1]} : vector<2x512xf32> to vector<2x384xf32>
    %503 = arith.negf %502 : vector<2x384xf32>
    %504 = math.exp %503 : vector<2x384xf32>
    %cst_97 = arith.constant 1.000000e+00 : f32
    %505 = vector.broadcast %cst_97 : f32 to vector<2x384xf32>
    %506 = arith.addf %505, %504 : vector<2x384xf32>
    %507 = arith.divf %505, %506 : vector<2x384xf32>
    %508 = vector.extract_strided_slice %501 {offsets = [0, 384], sizes = [2, 128], strides = [1, 1]} : vector<2x512xf32> to vector<2x128xf32>
    %509 = math.tanh %508 : vector<2x128xf32>
    %510 = vector.extract_strided_slice %507 {offsets = [0, 0], sizes = [2, 128], strides = [1, 1]} : vector<2x384xf32> to vector<2x128xf32>
    %511 = vector.extract_strided_slice %507 {offsets = [0, 128], sizes = [2, 128], strides = [1, 1]} : vector<2x384xf32> to vector<2x128xf32>
    %512 = vector.extract_strided_slice %507 {offsets = [0, 256], sizes = [2, 128], strides = [1, 1]} : vector<2x384xf32> to vector<2x128xf32>
    %513 = arith.mulf %511, %443 : vector<2x128xf32>
    %514 = arith.mulf %510, %509 : vector<2x128xf32>
    %515 = arith.addf %513, %514 : vector<2x128xf32>
    %516 = math.tanh %515 : vector<2x128xf32>
    %517 = arith.mulf %512, %516 : vector<2x128xf32>
    %cst_98 = arith.constant 0.000000e+00 : f32
    %518 = vector.broadcast %cst_98 : f32 to vector<2x128xf32>
    %519 = arith.maximumf %517, %518 : vector<2x128xf32>
    %520 = arith.truncf %447 : vector<2x128xf32> to vector<2x128xbf16>
    %cst_99 = arith.constant dense<0.000000e+00> : vector<2x256xf32>
    %521 = tpu.matmul %520, %4, %cst_99 {dimension_numbers = #tpu.dot_dimension_numbers<[1], [0], [0], [1], [0, 0, 1, 1], [], []>} : vector<2x128xbf16>, vector<128x256xbf16>, vector<2x256xf32> -> vector<2x256xf32>
    %522 = arith.truncf %469 : vector<2x64xf32> to vector<2x64xbf16>
    %cst_100 = arith.constant dense<0.000000e+00> : vector<2x256xf32>
    %523 = tpu.matmul %522, %5, %cst_100 {dimension_numbers = #tpu.dot_dimension_numbers<[1], [0], [0], [1], [0, 0, 1, 1], [], []>} : vector<2x64xbf16>, vector<64x256xbf16>, vector<2x256xf32> -> vector<2x256xf32>
    %524 = arith.addf %521, %523 : vector<2x256xf32>
    %525 = arith.addf %524, %17 : vector<2x256xf32>
    %526 = vector.extract_strided_slice %525 {offsets = [0, 0], sizes = [2, 192], strides = [1, 1]} : vector<2x256xf32> to vector<2x192xf32>
    %527 = arith.negf %526 : vector<2x192xf32>
    %528 = math.exp %527 : vector<2x192xf32>
    %cst_101 = arith.constant 1.000000e+00 : f32
    %529 = vector.broadcast %cst_101 : f32 to vector<2x192xf32>
    %530 = arith.addf %529, %528 : vector<2x192xf32>
    %531 = arith.divf %529, %530 : vector<2x192xf32>
    %532 = vector.extract_strided_slice %525 {offsets = [0, 192], sizes = [2, 64], strides = [1, 1]} : vector<2x256xf32> to vector<2x64xf32>
    %533 = math.tanh %532 : vector<2x64xf32>
    %534 = vector.extract_strided_slice %531 {offsets = [0, 0], sizes = [2, 64], strides = [1, 1]} : vector<2x192xf32> to vector<2x64xf32>
    %535 = vector.extract_strided_slice %531 {offsets = [0, 64], sizes = [2, 64], strides = [1, 1]} : vector<2x192xf32> to vector<2x64xf32>
    %536 = vector.extract_strided_slice %531 {offsets = [0, 128], sizes = [2, 64], strides = [1, 1]} : vector<2x192xf32> to vector<2x64xf32>
    %537 = arith.mulf %535, %467 : vector<2x64xf32>
    %538 = arith.mulf %534, %533 : vector<2x64xf32>
    %539 = arith.addf %537, %538 : vector<2x64xf32>
    %540 = math.tanh %539 : vector<2x64xf32>
    %541 = arith.mulf %536, %540 : vector<2x64xf32>
    %542 = arith.truncf %495 : vector<2x64xf32> to vector<2x64xbf16>
    %cst_102 = arith.constant dense<0.000000e+00> : vector<2x512xf32>
    %543 = tpu.matmul %542, %2, %cst_102 {dimension_numbers = #tpu.dot_dimension_numbers<[1], [0], [0], [1], [0, 0, 1, 1], [], []>} : vector<2x64xbf16>, vector<64x512xbf16>, vector<2x512xf32> -> vector<2x512xf32>
    %544 = arith.truncf %517 : vector<2x128xf32> to vector<2x128xbf16>
    %cst_103 = arith.constant dense<0.000000e+00> : vector<2x512xf32>
    %545 = tpu.matmul %544, %3, %cst_103 {dimension_numbers = #tpu.dot_dimension_numbers<[1], [0], [0], [1], [0, 0, 1, 1], [], []>} : vector<2x128xbf16>, vector<128x512xbf16>, vector<2x512xf32> -> vector<2x512xf32>
    %546 = arith.addf %543, %545 : vector<2x512xf32>
    %547 = arith.addf %546, %14 : vector<2x512xf32>
    %548 = vector.extract_strided_slice %547 {offsets = [0, 0], sizes = [2, 384], strides = [1, 1]} : vector<2x512xf32> to vector<2x384xf32>
    %549 = arith.negf %548 : vector<2x384xf32>
    %550 = math.exp %549 : vector<2x384xf32>
    %cst_104 = arith.constant 1.000000e+00 : f32
    %551 = vector.broadcast %cst_104 : f32 to vector<2x384xf32>
    %552 = arith.addf %551, %550 : vector<2x384xf32>
    %553 = arith.divf %551, %552 : vector<2x384xf32>
    %554 = vector.extract_strided_slice %547 {offsets = [0, 384], sizes = [2, 128], strides = [1, 1]} : vector<2x512xf32> to vector<2x128xf32>
    %555 = math.tanh %554 : vector<2x128xf32>
    %556 = vector.extract_strided_slice %553 {offsets = [0, 0], sizes = [2, 128], strides = [1, 1]} : vector<2x384xf32> to vector<2x128xf32>
    %557 = vector.extract_strided_slice %553 {offsets = [0, 128], sizes = [2, 128], strides = [1, 1]} : vector<2x384xf32> to vector<2x128xf32>
    %558 = vector.extract_strided_slice %553 {offsets = [0, 256], sizes = [2, 128], strides = [1, 1]} : vector<2x384xf32> to vector<2x128xf32>
    %559 = arith.mulf %557, %515 : vector<2x128xf32>
    %560 = arith.mulf %556, %555 : vector<2x128xf32>
    %561 = arith.addf %559, %560 : vector<2x128xf32>
    %562 = math.tanh %561 : vector<2x128xf32>
    %563 = arith.mulf %558, %562 : vector<2x128xf32>
    %cst_105 = arith.constant 0.000000e+00 : f32
    %564 = vector.broadcast %cst_105 : f32 to vector<2x128xf32>
    %565 = arith.maximumf %563, %564 : vector<2x128xf32>
    %566 = arith.truncf %519 : vector<2x128xf32> to vector<2x128xbf16>
    %cst_106 = arith.constant dense<0.000000e+00> : vector<2x256xf32>
    %567 = tpu.matmul %566, %4, %cst_106 {dimension_numbers = #tpu.dot_dimension_numbers<[1], [0], [0], [1], [0, 0, 1, 1], [], []>} : vector<2x128xbf16>, vector<128x256xbf16>, vector<2x256xf32> -> vector<2x256xf32>
    %568 = arith.truncf %541 : vector<2x64xf32> to vector<2x64xbf16>
    %cst_107 = arith.constant dense<0.000000e+00> : vector<2x256xf32>
    %569 = tpu.matmul %568, %5, %cst_107 {dimension_numbers = #tpu.dot_dimension_numbers<[1], [0], [0], [1], [0, 0, 1, 1], [], []>} : vector<2x64xbf16>, vector<64x256xbf16>, vector<2x256xf32> -> vector<2x256xf32>
    %570 = arith.addf %567, %569 : vector<2x256xf32>
    %571 = arith.addf %570, %17 : vector<2x256xf32>
    %572 = vector.extract_strided_slice %571 {offsets = [0, 0], sizes = [2, 192], strides = [1, 1]} : vector<2x256xf32> to vector<2x192xf32>
    %573 = arith.negf %572 : vector<2x192xf32>
    %574 = math.exp %573 : vector<2x192xf32>
    %cst_108 = arith.constant 1.000000e+00 : f32
    %575 = vector.broadcast %cst_108 : f32 to vector<2x192xf32>
    %576 = arith.addf %575, %574 : vector<2x192xf32>
    %577 = arith.divf %575, %576 : vector<2x192xf32>
    %578 = vector.extract_strided_slice %571 {offsets = [0, 192], sizes = [2, 64], strides = [1, 1]} : vector<2x256xf32> to vector<2x64xf32>
    %579 = math.tanh %578 : vector<2x64xf32>
    %580 = vector.extract_strided_slice %577 {offsets = [0, 0], sizes = [2, 64], strides = [1, 1]} : vector<2x192xf32> to vector<2x64xf32>
    %581 = vector.extract_strided_slice %577 {offsets = [0, 64], sizes = [2, 64], strides = [1, 1]} : vector<2x192xf32> to vector<2x64xf32>
    %582 = vector.extract_strided_slice %577 {offsets = [0, 128], sizes = [2, 64], strides = [1, 1]} : vector<2x192xf32> to vector<2x64xf32>
    %583 = arith.mulf %581, %539 : vector<2x64xf32>
    %584 = arith.mulf %580, %579 : vector<2x64xf32>
    %585 = arith.addf %583, %584 : vector<2x64xf32>
    %586 = math.tanh %585 : vector<2x64xf32>
    %587 = arith.mulf %582, %586 : vector<2x64xf32>
    %588 = arith.truncf %565 : vector<2x128xf32> to vector<2x128xbf16>
    %cst_109 = arith.constant dense<0.000000e+00> : vector<2x256xf32>
    %589 = tpu.matmul %588, %4, %cst_109 {dimension_numbers = #tpu.dot_dimension_numbers<[1], [0], [0], [1], [0, 0, 1, 1], [], []>} : vector<2x128xbf16>, vector<128x256xbf16>, vector<2x256xf32> -> vector<2x256xf32>
    %590 = arith.truncf %587 : vector<2x64xf32> to vector<2x64xbf16>
    %cst_110 = arith.constant dense<0.000000e+00> : vector<2x256xf32>
    %591 = tpu.matmul %590, %5, %cst_110 {dimension_numbers = #tpu.dot_dimension_numbers<[1], [0], [0], [1], [0, 0, 1, 1], [], []>} : vector<2x64xbf16>, vector<64x256xbf16>, vector<2x256xf32> -> vector<2x256xf32>
    %592 = arith.addf %589, %591 : vector<2x256xf32>
    %593 = arith.addf %592, %17 : vector<2x256xf32>
    %594 = vector.extract_strided_slice %593 {offsets = [0, 0], sizes = [2, 192], strides = [1, 1]} : vector<2x256xf32> to vector<2x192xf32>
    %595 = arith.negf %594 : vector<2x192xf32>
    %596 = math.exp %595 : vector<2x192xf32>
    %cst_111 = arith.constant 1.000000e+00 : f32
    %597 = vector.broadcast %cst_111 : f32 to vector<2x192xf32>
    %598 = arith.addf %597, %596 : vector<2x192xf32>
    %599 = arith.divf %597, %598 : vector<2x192xf32>
    %600 = vector.extract_strided_slice %593 {offsets = [0, 192], sizes = [2, 64], strides = [1, 1]} : vector<2x256xf32> to vector<2x64xf32>
    %601 = math.tanh %600 : vector<2x64xf32>
    %602 = vector.extract_strided_slice %599 {offsets = [0, 0], sizes = [2, 64], strides = [1, 1]} : vector<2x192xf32> to vector<2x64xf32>
    %603 = vector.extract_strided_slice %599 {offsets = [0, 64], sizes = [2, 64], strides = [1, 1]} : vector<2x192xf32> to vector<2x64xf32>
    %604 = vector.extract_strided_slice %599 {offsets = [0, 128], sizes = [2, 64], strides = [1, 1]} : vector<2x192xf32> to vector<2x64xf32>
    %605 = arith.mulf %603, %585 : vector<2x64xf32>
    %606 = arith.mulf %602, %601 : vector<2x64xf32>
    %607 = arith.addf %605, %606 : vector<2x64xf32>
    %608 = math.tanh %607 : vector<2x64xf32>
    %609 = arith.mulf %604, %608 : vector<2x64xf32>
    %cst_112 = arith.constant 0.000000e+00 : f32
    %610 = vector.broadcast %cst_112 : f32 to vector<2x64xf32>
    %611 = arith.maximumf %609, %610 : vector<2x64xf32>
    %612 = arith.truncf %611 : vector<2x64xf32> to vector<2x64xbf16>
    %cst_113 = arith.constant dense<0.000000e+00> : vector<2x64xf32>
    %613 = tpu.matmul %612, %6, %cst_113 {dimension_numbers = #tpu.dot_dimension_numbers<[1], [0], [0], [1], [0, 0, 1, 1], [], []>} : vector<2x64xbf16>, vector<64x64xbf16>, vector<2x64xf32> -> vector<2x64xf32>
    %614 = arith.addf %613, %20 : vector<2x64xf32>
    %cst_114 = arith.constant 0.000000e+00 : f32
    %615 = vector.broadcast %cst_114 : f32 to vector<2x64xf32>
    %616 = arith.maximumf %614, %615 : vector<2x64xf32>
    %617 = arith.truncf %616 : vector<2x64xf32> to vector<2x64xbf16>
    %cst_115 = arith.constant dense<0.000000e+00> : vector<2x128xf32>
    %618 = tpu.matmul %617, %7, %cst_115 {dimension_numbers = #tpu.dot_dimension_numbers<[1], [0], [0], [1], [0, 0, 1, 1], [], []>} : vector<2x64xbf16>, vector<64x128xbf16>, vector<2x128xf32> -> vector<2x128xf32>
    %619 = arith.addf %618, %23 : vector<2x128xf32>
    %cst_116 = arith.constant 0.000000e+00 : f32
    %620 = vector.broadcast %cst_116 : f32 to vector<2x128xf32>
    %621 = arith.maximumf %619, %620 : vector<2x128xf32>
    %622 = arith.truncf %621 : vector<2x128xf32> to vector<2x128xbf16>
    %cst_117 = arith.constant dense<0.000000e+00> : vector<2x128xf32>
    %623 = tpu.matmul %622, %8, %cst_117 {dimension_numbers = #tpu.dot_dimension_numbers<[1], [0], [0], [1], [0, 0, 1, 1], [], []>} : vector<2x128xbf16>, vector<128x128xbf16>, vector<2x128xf32> -> vector<2x128xf32>
    %624 = arith.addf %623, %26 : vector<2x128xf32>
    %c0_118 = arith.constant 0 : index
    %c0_119 = arith.constant 0 : index
    %625 = vector.load %arg3[%c0_118, %c0_119] : memref<2x128xf32, #tpu.memory_space<vmem>>, vector<2x128xf32>
    tpu.vector_store %arg3[%c0_118, %c0_119], %624 {strides = array<i32>} : memref<2x128xf32, #tpu.memory_space<vmem>>, vector<2x128xf32>,
    return
  }
}

</mosaic_0001>

<llo_original>
// kernel: _forward_padded.1
$region0: #{_forward_padded.1}
  #allocation0 [shape = 'u32[]', space=smem, size = 0x4, offset = 0x4, fixed_abs, tag = 'smem constant byte address 0x4 - core index']
  #allocation1 [shape = 'u32[144,128]{1,0:T(1,128)}', space=vmem, size = 0x12000, scoped, tag = 'internal scratch']
  %s0 = inlined_call_operand.hbm [shape: f32[2,8,16], index: 0, kind: input, shape index: {}]
  %s1 = inlined_call_operand.hbm [shape: bf16[720,512], index: 1, kind: input, shape index: {}]
  %s2 = inlined_call_operand.hbm [shape: f32[1,1408], index: 2, kind: input, shape index: {}]
  %s3 = inlined_call_operand.hbm [shape: f32[2,128], index: 3, kind: output, shape index: {}]
  %s4 = sld [smem:[#allocation0]]
  $region34: #{_forward_padded.1} parent=0
    _
  %s6 = ssub.s32 1, %s4
  %s7 = scalar_select 0, %s6, %s4
  $region1: #{_forward_padded.1} parent=0
    #allocation2 [shape = 'u8[8192]{0}', space=vmem, size = 0x2000, scoped, tag = 'input window, operand 0, single buffered']
    #allocation3 [shape = 's32[1]{0}', space=sflag, size = 0x4, scoped, tag = 'scoped memory for _forward_padded.1']
    #allocation4 [shape = 's32[1]{0}', space=sflag, size = 0x4, scoped, tag = 'scoped memory for _forward_padded.1']
    #allocation5 [shape = 'u8[737280]{0}', space=vmem, size = 0xb4000, scoped, tag = 'input window, operand 1, single buffered']
    #allocation6 [shape = 's32[1]{0}', space=sflag, size = 0x4, scoped, tag = 'scoped memory for _forward_padded.1']
    #allocation7 [shape = 'u8[5632]{0}', space=vmem, size = 0x1800, scoped, tag = 'input window, operand 2, single buffered']
    #allocation8 [shape = 'u8[1024]{0}', space=vmem, size = 0x400, scoped, tag = 'output window, operand 0, single buffered']
    %8 = vsyncpa [#allocation3], 0
    %9 = vsyncpa [#allocation6], 0
    %10 = vsyncpa [#allocation4], 0
    // Predicated region
    $region2: #{_forward_padded.1} parent=1 // pred_check
      _
    $region3: #{_forward_padded.1} parent=1 // pred_check_branch
      %12 = sbr.rel (0) target = $region5
    $region4: #{_forward_padded.1} parent=1 // pred_region
      %s14 = ssub.s32 256, 256
      %15 = vsyncadd [#allocation3], %s14
      %s16 = sshll.u32 [#allocation2], 4
      %s17 = int_to_ptr.vmem [resolvable:$true] %s16
      %22 = dma.hbm_to_vmem [thread:$0]  %s0, 256, %s17, [#allocation3], 128, 128, 8
    $region5: #{_forward_padded.1} parent=1 // pred_fallthru
      _
    // Predicated region
    $region6: #{_forward_padded.1} parent=1 // pred_check
      _
    $region7: #{_forward_padded.1} parent=1 // pred_check_branch
      %24 = sbr.rel (0) target = $region9
    $region8: #{_forward_padded.1} parent=1 // pred_region
      %s26 = ssub.s32 23040, 23040
      %27 = vsyncadd [#allocation6], %s26
      %s28 = sshll.u32 [#allocation5], 4
      %s29 = int_to_ptr.vmem [resolvable:$true] %s28
      %34 = dma.hbm_to_vmem [thread:$0]  %s1, 23040, %s29, [#allocation6], 256, 256, 16
    $region9: #{_forward_padded.1} parent=1 // pred_fallthru
      _
    // Predicated region
    $region10: #{_forward_padded.1} parent=1 // pred_check
      _
    $region11: #{_forward_padded.1} parent=1 // pred_check_branch
      %36 = sbr.rel (0) target = $region13
    $region12: #{_forward_padded.1} parent=1 // pred_region
      %s38 = ssub.s32 176, 176
      %39 = vsyncadd [#allocation6], %s38
      %s41 = sshll.u32 [#allocation7], 4
      %s42 = int_to_ptr.vmem [resolvable:$true] %s41
      %44 = dma.hbm_to_vmem [thread:$0]  %s2, 176, %s42, [#allocation6]
    $region13: #{_forward_padded.1} parent=1 // pred_fallthru
      _
    // Predicated region
    $region14: #{_forward_padded.1} parent=1 // pred_check
      _
    $region15: #{_forward_padded.1} parent=1 // pred_check_branch
      %46 = sbr.rel (0) target = $region17
    $region16: #{_forward_padded.1} parent=1 // pred_region
      %47 = dma.done [#allocation3], 256
    $region17: #{_forward_padded.1} parent=1 // pred_fallthru
      _
    // Predicated region
    $region18: #{_forward_padded.1} parent=1 // pred_check
      _
    $region19: #{_forward_padded.1} parent=1 // pred_check_branch
      %49 = sbr.rel (0) target = $region21
    $region20: #{_forward_padded.1} parent=1 // pred_region
      %50 = dma.done [#allocation6], 23040
    $region21: #{_forward_padded.1} parent=1 // pred_fallthru
      _
    // Predicated region
    $region22: #{_forward_padded.1} parent=1 // pred_check
      _
    $region23: #{_forward_padded.1} parent=1 // pred_check_branch
      %52 = sbr.rel (0) target = $region25
    $region24: #{_forward_padded.1} parent=1 // pred_region
      %53 = dma.done [#allocation6], 176
    $region25: #{_forward_padded.1} parent=1 // pred_fallthru
      _
    %v55 = vld [vmem:[#allocation5] sm:$0xff]
    %v56 = vld [vmem:[#allocation5 + $0x10] sm:$0xff]
    %v57 = vld [vmem:[#allocation5 + $0x20] sm:$0xff]
    %v58 = vld [vmem:[#allocation5 + $0x30] sm:$0xff]
    %v59 = vld [vmem:[#allocation5 + $0x40] sm:$0xff]
    %v60 = vld [vmem:[#allocation5 + $0x50] sm:$0xff]
    %v61 = vld [vmem:[#allocation5 + $0x60] sm:$0xff]
    %v62 = vld [vmem:[#allocation5 + $0x70] sm:$0xff]
    %v63 = vld [vmem:[#allocation5 + $0x80] sm:$0xff]
    %v64 = vld [vmem:[#allocation5 + $0x90] sm:$0xff]
    %v65 = vld [vmem:[#allocation5 + $0xa0] sm:$0xff]
    %v66 = vld [vmem:[#allocation5 + $0xa8] sm:$0xff]
    %v67 = vld [vmem:[#allocation5 + $0xb0] sm:$0xff]
    %v68 = vld [vmem:[#allocation5 + $0xb8] sm:$0xff]
    %v69 = vld [vmem:[#allocation5 + $0xc0] sm:$0xff]
    %v70 = vld [vmem:[#allocation5 + $0xc8] sm:$0xff]
    %v71 = vld [vmem:[#allocation5 + $0xd0] sm:$0xff]
    %v72 = vld [vmem:[#allocation5 + $0xd8] sm:$0xff]
    %v73 = vld [vmem:[#allocation5 + $0xe0] sm:$0xff]
    %v74 = vld [vmem:[#allocation5 + $0xe8] sm:$0xff]
    %v75 = vld [vmem:[#allocation5 + $0xf0] sm:$0xff]
    %v76 = vld [vmem:[#allocation5 + $0xf8] sm:$0xff]
    %v77 = vld [vmem:[#allocation5 + $0x100] sm:$0xff]
    %v78 = vld [vmem:[#allocation5 + $0x108] sm:$0xff]
    %v79 = vld [vmem:[#allocation5 + $0x110] sm:$0xff]
    %v80 = vld [vmem:[#allocation5 + $0x118] sm:$0xff]
    %v81 = vld [vmem:[#allocation5 + $0x120] sm:$0xff]
    %v82 = vld [vmem:[#allocation5 + $0x128] sm:$0xff]
    %v83 = vld [vmem:[#allocation5 + $0x130] sm:$0xff]
    %v84 = vld [vmem:[#allocation5 + $0x138] sm:$0xff]
    %v85 = vld [vmem:[#allocation5 + $0x140] sm:$0xff]
    %v86 = vld [vmem:[#allocation5 + $0x148] sm:$0xff]
    %v87 = vld [vmem:[#allocation5 + $0x150] sm:$0xff]
    %v88 = vld [vmem:[#allocation5 + $0x158] sm:$0xff]
    %v89 = vld [vmem:[#allocation5 + $0x160] sm:$0xff]
    %v90 = vld [vmem:[#allocation5 + $0x168] sm:$0xff]
    %v91 = vld [vmem:[#allocation5 + $0x170] sm:$0xff]
    %v92 = vld [vmem:[#allocation5 + $0x178] sm:$0xff]
    %v93 = vld [vmem:[#allocation5 + $0x180] sm:$0xff]
    %v94 = vld [vmem:[#allocation5 + $0x188] sm:$0xff]
    %v95 = vld [vmem:[#allocation5 + $0x190] sm:$0xff]
    %v96 = vld [vmem:[#allocation5 + $0x198] sm:$0xff]
    %v97 = vld [vmem:[#allocation5 + $0x1a0] sm:$0xff]
    %v98 = vld [vmem:[#allocation5 + $0x1a8] sm:$0xff]
    %v99 = vld [vmem:[#allocation5 + $0x1b0] sm:$0xff]
    %v100 = vld [vmem:[#allocation5 + $0x1b8] sm:$0xff]
    %v101 = vld [vmem:[#allocation5 + $0x1c0] sm:$0xff]
    %v102 = vld [vmem:[#allocation5 + $0x1c8] sm:$0xff]
    %v103 = vld [vmem:[#allocation5 + $0x1d0] sm:$0xff]
    %v104 = vld [vmem:[#allocation5 + $0x1d8] sm:$0xff]
    %v105 = vld [vmem:[#allocation5 + $0x1e0] sm:$0xff]
    %v106 = vld [vmem:[#allocation5 + $0x1e8] sm:$0xff]
    %v107 = vld [vmem:[#allocation5 + $0x1f0] sm:$0xff]
    %v108 = vld [vmem:[#allocation5 + $0x1f8] sm:$0xff]
    %v109 = vld [vmem:[#allocation5 + $0x200] sm:$0xff]
    %v110 = vld [vmem:[#allocation5 + $0x208] sm:$0xff]
    %v111 = vld [vmem:[#allocation5 + $0x210] sm:$0xff]
    %v112 = vld [vmem:[#allocation5 + $0x218] sm:$0xff]
    %v113 = vld [vmem:[#allocation5 + $0x220] sm:$0xff]
    %v114 = vld [vmem:[#allocation5 + $0x230] sm:$0xff]
    %v115 = vld [vmem:[#allocation5 + $0x240] sm:$0xff]
    %v116 = vld [vmem:[#allocation5 + $0x250] sm:$0xff]
    %v117 = vld [vmem:[#allocation5 + $0x260] sm:$0xff]
    %v118 = vld [vmem:[#allocation5 + $0x270] sm:$0xff]
    %v119 = vld [vmem:[#allocation5 + $0x280] sm:$0xff]
    %v120 = vld [vmem:[#allocation5 + $0x290] sm:$0xff]
    %v121 = vld [vmem:[#allocation5 + $0x2a0] sm:$0xff]
    %v122 = vld [vmem:[#allocation5 + $0x2b0] sm:$0xff]
    %v123 = vld [vmem:[#allocation5 + $0x2c0] sm:$0xff]
    %v124 = vld [vmem:[#allocation5 + $0x2d0] sm:$0xff]
    %v125 = vld [vmem:[#allocation5 + $0x2e0] sm:$0xff]
    %v126 = vld [vmem:[#allocation5 + $0x2f0] sm:$0xff]
    %v127 = vld [vmem:[#allocation5 + $0x300] sm:$0xff]
    %v128 = vld [vmem:[#allocation5 + $0x310] sm:$0xff]
    %v129 = vld [vmem:[#allocation5 + $0x320] sm:$0xff]
    %v130 = vld [vmem:[#allocation5 + $0x330] sm:$0xff]
    %v131 = vld [vmem:[#allocation5 + $0x340] sm:$0xff]
    %v132 = vld [vmem:[#allocation5 + $0x350] sm:$0xff]
    %v133 = vld [vmem:[#allocation5 + $0x360] sm:$0xff]
    %v134 = vld [vmem:[#allocation5 + $0x370] sm:$0xff]
    %v135 = vld [vmem:[#allocation5 + $0x380] sm:$0xff]
    %v136 = vld [vmem:[#allocation5 + $0x390] sm:$0xff]
    %v137 = vld [vmem:[#allocation5 + $0x3a0] sm:$0xf]
    %v138 = vld [vmem:[#allocation5 + $0x3b0] sm:$0xf]
    %v139 = vld [vmem:[#allocation5 + $0x3c0] sm:$0xf]
    %v140 = vld [vmem:[#allocation5 + $0x3d0] sm:$0xf]
    %v141 = vld [vmem:[#allocation5 + $0x3e0] sm:$0xf]
    %v142 = vld [vmem:[#allocation5 + $0x3f0] sm:$0xf]
    %v143 = vld [vmem:[#allocation5 + $0x400] sm:$0xf]
    %v144 = vld [vmem:[#allocation5 + $0x410] sm:$0xf]
    %v145 = vld [vmem:[#allocation5 + $0x420] sm:$0xf]
    %v146 = vld [vmem:[#allocation5 + $0x430] sm:$0xf]
    %v147 = vld [vmem:[#allocation5 + $0x440] sm:$0xf]
    %v148 = vld [vmem:[#allocation5 + $0x450] sm:$0xf]
    %v149 = vld [vmem:[#allocation5 + $0x460] sm:$0xf]
    %v150 = vld [vmem:[#allocation5 + $0x470] sm:$0xf]
    %v151 = vld [vmem:[#allocation5 + $0x480] sm:$0xf]
    %v152 = vld [vmem:[#allocation5 + $0x490] sm:$0xf]
    %v153 = vld [vmem:[#allocation5 + $0x4a0] sm:$0xf]
    %v154 = vld [vmem:[#allocation5 + $0x4b0] sm:$0xf]
    %v155 = vld [vmem:[#allocation5 + $0x4c0] sm:$0xf]
    %v156 = vld [vmem:[#allocation5 + $0x4d0] sm:$0xf]
    %v157 = vld [vmem:[#allocation5 + $0x4e0] sm:$0xf]
    %v158 = vld [vmem:[#allocation5 + $0x4f0] sm:$0xf]
    %v159 = vld [vmem:[#allocation5 + $0x500] sm:$0xf]
    %v160 = vld [vmem:[#allocation5 + $0x510] sm:$0xf]
    %v161 = vld [vmem:[#allocation5 + $0x520] sm:$0xf]
    %v162 = vld [vmem:[#allocation5 + $0x530] sm:$0xf]
    %v163 = vld [vmem:[#allocation5 + $0x540] sm:$0xf]
    %v164 = vld [vmem:[#allocation5 + $0x550] sm:$0xf]
    %v165 = vld [vmem:[#allocation5 + $0x560] sm:$0xf]
    %v166 = vld [vmem:[#allocation5 + $0x570] sm:$0xf]
    %v167 = vld [vmem:[#allocation5 + $0x580] sm:$0xf]
    %v168 = vld [vmem:[#allocation5 + $0x590] sm:$0xf]
    %v169 = vld [vmem:[#allocation7] sm:$0x3]
    %v171 = vlaneseq
    %v172 = vshrl.u32 %v171, 7
    %v173 = vsub.s32 0, %v172
    %v174 = vrot.slane %v169, %v173
    %v175 = vlaneseq
    %v176 = vshrl.u32 %v175, 7
    %v177 = vsub.s32 1, %v176
    %v178 = vrot.slane %v169, %v177
    %v181 = vld [vmem:[#allocation7 + $0x2] sm:$0xf]
    %v183 = vlaneseq
    %v184 = vshrl.u32 %v183, 7
    %v185 = vsub.s32 0, %v184
    %v186 = vrot.slane %v181, %v185
    %v187 = vlaneseq
    %v188 = vshrl.u32 %v187, 7
    %v189 = vsub.s32 1, %v188
    %v190 = vrot.slane %v181, %v189
    %v191 = vlaneseq
    %v192 = vshrl.u32 %v191, 7
    %v193 = vsub.s32 2, %v192
    %v194 = vrot.slane %v181, %v193
    %v195 = vlaneseq
    %v196 = vshrl.u32 %v195, 7
    %v197 = vsub.s32 3, %v196
    %v198 = vrot.slane %v181, %v197
    %v203 = vld [vmem:[#allocation7 + $0x6] sm:$0x3]
    %v205 = vlaneseq
    %v206 = vshrl.u32 %v205, 7
    %v207 = vsub.s32 0, %v206
    %v208 = vrot.slane %v203, %v207
    %v209 = vlaneseq
    %v210 = vshrl.u32 %v209, 7
    %v211 = vsub.s32 1, %v210
    %v212 = vrot.slane %v203, %v211
    %v215 = vld [vmem:[#allocation7 + $0x8] sm:$0x1]
    %v217 = vlaneseq
    %v218 = vshrl.u32 %v217, 7
    %v219 = vsub.s32 0, %v218
    %v220 = vrot.slane %v215, %v219
    %v222 = vld [vmem:[#allocation7 + $0x9] sm:$0x1]
    %v224 = vlaneseq
    %v225 = vshrl.u32 %v224, 7
    %v226 = vsub.s32 0, %v225
    %v227 = vrot.slane %v222, %v226
    %v229 = vld [vmem:[#allocation7 + $0xa] sm:$0x1]
    %v231 = vlaneseq
    %v232 = vshrl.u32 %v231, 7
    %v233 = vsub.s32 0, %v232
    %v234 = vrot.slane %v229, %v233
    %v236 = vld [vmem:[#allocation2] sm:$0xff]
    %v237 = vld [vmem:[#allocation2 + $0x8] sm:$0xff]
    %v238 = vpack.c.bf16 %v236, %v236
    %v239 = vpack.c.bf16 %v237, %v237
    %v248 = vunpack.c.l.b16 %v57
    %v249 = vunpack.c.h.b16 %v57
    %v250 = vunpack.c.l.b16 %v58
    %v251 = vunpack.c.h.b16 %v58
    %v252 = vunpack.c.l.b16 %v59
    %v253 = vunpack.c.h.b16 %v59
    %v254 = vunpack.c.l.b16 %v60
    %v255 = vunpack.c.h.b16 %v60
    %v256 = vunpack.c.l.b16 %v61
    %v257 = vunpack.c.h.b16 %v61
    %v258 = vunpack.c.l.b16 %v62
    %v259 = vunpack.c.h.b16 %v62
    %v260 = vunpack.c.l.b16 %v63
    %v261 = vunpack.c.h.b16 %v63
    %v262 = vunpack.c.l.b16 %v64
    %v263 = vunpack.c.h.b16 %v64
    %v264 = vpack.c.b16 %v250, %v248
    %v265 = vpack.c.b16 %v251, %v249
    %v266 = vpack.c.b16 %v254, %v252
    %v267 = vpack.c.b16 %v255, %v253
    %v268 = vpack.c.b16 %v258, %v256
    %v269 = vpack.c.b16 %v259, %v257
    %v270 = vpack.c.b16 %v262, %v260
    %v271 = vpack.c.b16 %v263, %v261
    %vm280 = vcmask 523264
    %v282 = vsel %vm280, 0, 0
    %284 = vmatprep.subr.bf16.mxu0 0
    %285 = vmatpush1.bf16.msra.mxu0 0
    %286 = vmatprep.subr.bf16.mxu0 0
    %287 = vmatpush1.bf16.msra.mxu0 0
    %288 = vmatprep.subr.bf16.mxu0 0
    %289 = vmatpush1.bf16.msra.mxu0 0
    %290 = vmatprep.subr.bf16.mxu0 0
    %291 = vmatpush1.bf16.msra.mxu0 0
    %292 = vmatprep.subr.bf16.mxu0 %v271
    %293 = vmatpush1.bf16.msra.mxu0 %v270
    %294 = vmatprep.subr.bf16.mxu0 %v269
    %295 = vmatpush1.bf16.msra.mxu0 %v268
    %296 = vmatprep.subr.bf16.mxu0 %v267
    %297 = vmatpush1.bf16.msra.mxu0 %v266
    %298 = vmatprep.subr.bf16.mxu0 %v265
    %299 = vmatpush1.bf16.msra.mxu0 %v264
    %300 = vmatprep.subr.bf16.mxu0 0
    %301 = vmatpush2.bf16.msra.mxu0 0
    %302 = vmatprep.subr.bf16.mxu0 0
    %303 = vmatpush2.bf16.msra.mxu0 0
    %304 = vmatprep.subr.bf16.mxu0 0
    %305 = vmatpush2.bf16.msra.mxu0 0
    %306 = vmatprep.subr.bf16.mxu0 0
    %307 = vmatpush2.bf16.msra.mxu0 0
    %308 = vmatprep.subr.bf16.mxu0 0
    %309 = vmatpush2.bf16.msra.mxu0 0
    %310 = vmatprep.subr.bf16.mxu0 0
    %311 = vmatpush2.bf16.msra.mxu0 0
    %312 = vmatprep.subr.bf16.mxu0 0
    %313 = vmatpush2.bf16.msra.mxu0 0
    %314 = vmatprep.subr.bf16.mxu0 0
    %315 = vmatpush2.bf16.msra.mxu0 0
    %316 = vmatprep.mubr.bf16.mxu0 0
    %317 = vmatmul.mubr.bf16.gmra.mxu0 %v282
    %v318 = vpop.f32.mrf.mxu0
    %v319 = vadd.f32 0.0, %v318
    %v320 = vpop.f32.mrf.mxu0
    %v321 = vadd.f32 0.0, %v320
    %v322 = vpop.f32.mrf.mxu0
    %v323 = vpop.f32.mrf.mxu0
    %324 = vdwg.mxu0
    %v327 = vunpack.c.l.b16 %v238
    %v328 = vunpack.c.l.b16 %v239
    %v329 = vrot.slane %v328, 7
    %vm330 = vcmask 1041409
    %v331 = vsel %vm330, %v329, %v327
    %v332 = vpack.c.b16 %v331, %v331
    %v335 = vunpack.c.l.b16 %v55
    %v336 = vunpack.c.h.b16 %v55
    %v337 = vunpack.c.l.b16 %v56
    %v338 = vunpack.c.h.b16 %v56
    %v339 = vpack.c.b16 %v337, %v335
    %v340 = vpack.c.b16 %v338, %v336
    %vm343 = vcmask 130048
    %v345 = vsel %vm343, %v332, 0
    %347 = vmatprep.subr.bf16.mxu0 0
    %348 = vmatpush1.bf16.msra.mxu0 0
    %349 = vmatprep.subr.bf16.mxu0 0
    %350 = vmatpush1.bf16.msra.mxu0 0
    %351 = vmatprep.subr.bf16.mxu0 0
    %352 = vmatpush1.bf16.msra.mxu0 0
    %353 = vmatprep.subr.bf16.mxu0 0
    %354 = vmatpush1.bf16.msra.mxu0 0
    %355 = vmatprep.subr.bf16.mxu0 0
    %356 = vmatpush1.bf16.msra.mxu0 0
    %357 = vmatprep.subr.bf16.mxu0 0
    %358 = vmatpush1.bf16.msra.mxu0 0
    %359 = vmatprep.subr.bf16.mxu0 0
    %360 = vmatpush1.bf16.msra.mxu0 0
    %361 = vmatprep.subr.bf16.mxu0 %v340
    %362 = vmatpush1.bf16.msra.mxu0 %v339
    %363 = vmatprep.subr.bf16.mxu0 0
    %364 = vmatpush2.bf16.msra.mxu0 0
    %365 = vmatprep.subr.bf16.mxu0 0
    %366 = vmatpush2.bf16.msra.mxu0 0
    %367 = vmatprep.subr.bf16.mxu0 0
    %368 = vmatpush2.bf16.msra.mxu0 0
    %369 = vmatprep.subr.bf16.mxu0 0
    %370 = vmatpush2.bf16.msra.mxu0 0
    %371 = vmatprep.subr.bf16.mxu0 0
    %372 = vmatpush2.bf16.msra.mxu0 0
    %373 = vmatprep.subr.bf16.mxu0 0
    %374 = vmatpush2.bf16.msra.mxu0 0
    %375 = vmatprep.subr.bf16.mxu0 0
    %376 = vmatpush2.bf16.msra.mxu0 0
    %377 = vmatprep.subr.bf16.mxu0 0
    %378 = vmatpush2.bf16.msra.mxu0 0
    %379 = vmatprep.mubr.bf16.mxu0 0
    %380 = vmatmul.mubr.bf16.gmra.mxu0 %v345
    %v381 = vpop.f32.mrf.mxu0
    %v382 = vadd.f32 %v319, %v381
    %v383 = vpop.f32.mrf.mxu0
    %v384 = vadd.f32 %v321, %v383
    %v385 = vpop.f32.mrf.mxu0
    %v386 = vpop.f32.mrf.mxu0
    %387 = vdwg.mxu0
    %v388 = vadd.f32 %v382, %v174
    %v389 = vadd.f32 %v384, %v178
    %v390 = vxor.u32 %v388, 2147483648
    %v391 = vxor.u32 %v389, 2147483648
    %v392 = vmul.f32 %v390, 1.442695
    %v393 = vpow.pop %v392
    %v394 = vmul.f32 %v391, 1.442695
    %v395 = vpow.pop %v394
    %v396 = vadd.f32 %v393, 1.0
    %v397 = vadd.f32 %v395, 1.0
    %v398 = vrcp.pop %v396
    %v399 = vmul.f32 1.0, %v398
    %v400 = vrcp.pop %v397
    %v401 = vmul.f32 1.0, %v400
    %v402 = vtanh.pop %v389
    %v403 = vmul.f32 %v399, 0.0
    %405 = vrot.lane.b32.xlu0 %v402, 64
    %v406 = vpop.permute.xlu0 %405
    %v408 = vmul.f32 %v399, %v406
    %410 = vrot.lane.b32.xlu0 %v408, 64
    %v411 = vpop.permute.xlu0 %410
    %v413 = vadd.f32 %v403, %v411
    %v414 = vtanh.pop %v413
    %416 = vrot.lane.b32.xlu0 %v414, 64
    %v417 = vpop.permute.xlu0 %416
    %v419 = vmul.f32 %v401, %v417
    %v420 = vmax.f32 %v419, 0.0
    %v421 = vpack.c.bf16 %v419, %v419
    %v423 = vsel %vm280, %v421, 0
    %425 = vmatprep.subr.bf16.mxu0 0
    %426 = vmatpush1.bf16.msra.mxu0 0
    %427 = vmatprep.subr.bf16.mxu0 0
    %428 = vmatpush1.bf16.msra.mxu0 0
    %429 = vmatprep.subr.bf16.mxu0 0
    %430 = vmatpush1.bf16.msra.mxu0 0
    %431 = vmatprep.subr.bf16.mxu0 0
    %432 = vmatpush1.bf16.msra.mxu0 0
    %433 = vmatprep.subr.bf16.mxu0 %v271
    %434 = vmatpush1.bf16.msra.mxu0 %v270
    %435 = vmatprep.subr.bf16.mxu0 %v269
    %436 = vmatpush1.bf16.msra.mxu0 %v268
    %437 = vmatprep.subr.bf16.mxu0 %v267
    %438 = vmatpush1.bf16.msra.mxu0 %v266
    %439 = vmatprep.subr.bf16.mxu0 %v265
    %440 = vmatpush1.bf16.msra.mxu0 %v264
    %441 = vmatprep.subr.bf16.mxu0 0
    %442 = vmatpush2.bf16.msra.mxu0 0
    %443 = vmatprep.subr.bf16.mxu0 0
    %444 = vmatpush2.bf16.msra.mxu0 0
    %445 = vmatprep.subr.bf16.mxu0 0
    %446 = vmatpush2.bf16.msra.mxu0 0
    %447 = vmatprep.subr.bf16.mxu0 0
    %448 = vmatpush2.bf16.msra.mxu0 0
    %449 = vmatprep.subr.bf16.mxu0 0
    %450 = vmatpush2.bf16.msra.mxu0 0
    %451 = vmatprep.subr.bf16.mxu0 0
    %452 = vmatpush2.bf16.msra.mxu0 0
    %453 = vmatprep.subr.bf16.mxu0 0
    %454 = vmatpush2.bf16.msra.mxu0 0
    %455 = vmatprep.subr.bf16.mxu0 0
    %456 = vmatpush2.bf16.msra.mxu0 0
    %457 = vmatprep.mubr.bf16.mxu0 0
    %458 = vmatmul.mubr.bf16.gmra.mxu0 %v423
    %v459 = vpop.f32.mrf.mxu0
    %v460 = vadd.f32 0.0, %v459
    %v461 = vpop.f32.mrf.mxu0
    %v462 = vadd.f32 0.0, %v461
    %v463 = vpop.f32.mrf.mxu0
    %v464 = vpop.f32.mrf.mxu0
    %465 = vdwg.mxu0
    %v466 = vrot.slane %v327, 1
    %v467 = vsel %vm330, %v328, %v466
    %v468 = vpack.c.b16 %v467, %v467
    %v470 = vsel %vm343, %v468, 0
    %472 = vmatprep.subr.bf16.mxu0 0
    %473 = vmatpush1.bf16.msra.mxu0 0
    %474 = vmatprep.subr.bf16.mxu0 0
    %475 = vmatpush1.bf16.msra.mxu0 0
    %476 = vmatprep.subr.bf16.mxu0 0
    %477 = vmatpush1.bf16.msra.mxu0 0
    %478 = vmatprep.subr.bf16.mxu0 0
    %479 = vmatpush1.bf16.msra.mxu0 0
    %480 = vmatprep.subr.bf16.mxu0 0
    %481 = vmatpush1.bf16.msra.mxu0 0
    %482 = vmatprep.subr.bf16.mxu0 0
    %483 = vmatpush1.bf16.msra.mxu0 0
    %484 = vmatprep.subr.bf16.mxu0 0
    %485 = vmatpush1.bf16.msra.mxu0 0
    %486 = vmatprep.subr.bf16.mxu0 %v340
    %487 = vmatpush1.bf16.msra.mxu0 %v339
    %488 = vmatprep.subr.bf16.mxu0 0
    %489 = vmatpush2.bf16.msra.mxu0 0
    %490 = vmatprep.subr.bf16.mxu0 0
    %491 = vmatpush2.bf16.msra.mxu0 0
    %492 = vmatprep.subr.bf16.mxu0 0
    %493 = vmatpush2.bf16.msra.mxu0 0
    %494 = vmatprep.subr.bf16.mxu0 0
    %495 = vmatpush2.bf16.msra.mxu0 0
    %496 = vmatprep.subr.bf16.mxu0 0
    %497 = vmatpush2.bf16.msra.mxu0 0
    %498 = vmatprep.subr.bf16.mxu0 0
    %499 = vmatpush2.bf16.msra.mxu0 0
    %500 = vmatprep.subr.bf16.mxu0 0
    %501 = vmatpush2.bf16.msra.mxu0 0
    %502 = vmatprep.subr.bf16.mxu0 0
    %503 = vmatpush2.bf16.msra.mxu0 0
    %504 = vmatprep.mubr.bf16.mxu0 0
    %505 = vmatmul.mubr.bf16.gmra.mxu0 %v470
    %v506 = vpop.f32.mrf.mxu0
    %v507 = vadd.f32 %v460, %v506
    %v508 = vpop.f32.mrf.mxu0
    %v509 = vadd.f32 %v462, %v508
    %v510 = vpop.f32.mrf.mxu0
    %v511 = vpop.f32.mrf.mxu0
    %512 = vdwg.mxu0
    %v513 = vadd.f32 %v507, %v174
    %v514 = vadd.f32 %v509, %v178
    %v515 = vxor.u32 %v513, 2147483648
    %v516 = vxor.u32 %v514, 2147483648
    %v517 = vmul.f32 %v515, 1.442695
    %v518 = vpow.pop %v517
    %v519 = vmul.f32 %v516, 1.442695
    %v520 = vpow.pop %v519
    %v521 = vadd.f32 %v518, 1.0
    %v522 = vadd.f32 %v520, 1.0
    %v523 = vrcp.pop %v521
    %v524 = vmul.f32 1.0, %v523
    %v525 = vrcp.pop %v522
    %v526 = vmul.f32 1.0, %v525
    %v527 = vtanh.pop %v514
    %v528 = vmul.f32 %v524, %v413
    %530 = vrot.lane.b32.xlu0 %v527, 64
    %v531 = vpop.permute.xlu0 %530
    %v533 = vmul.f32 %v524, %v531
    %535 = vrot.lane.b32.xlu0 %v533, 64
    %v536 = vpop.permute.xlu0 %535
    %v538 = vadd.f32 %v528, %v536
    %v539 = vtanh.pop %v538
    %541 = vrot.lane.b32.xlu0 %v539, 64
    %v542 = vpop.permute.xlu0 %541
    %v544 = vmul.f32 %v526, %v542
    %v545 = vmax.f32 %v544, 0.0
    %v546 = vpack.c.bf16 %v420, %v420
    %v579 = vunpack.c.l.b16 %v81
    %v580 = vunpack.c.h.b16 %v81
    %v581 = vunpack.c.l.b16 %v82
    %v582 = vunpack.c.h.b16 %v82
    %v583 = vunpack.c.l.b16 %v83
    %v584 = vunpack.c.h.b16 %v83
    %v585 = vunpack.c.l.b16 %v84
    %v586 = vunpack.c.h.b16 %v84
    %v587 = vunpack.c.l.b16 %v85
    %v588 = vunpack.c.h.b16 %v85
    %v589 = vunpack.c.l.b16 %v86
    %v590 = vunpack.c.h.b16 %v86
    %v591 = vunpack.c.l.b16 %v87
    %v592 = vunpack.c.h.b16 %v87
    %v593 = vunpack.c.l.b16 %v88
    %v594 = vunpack.c.h.b16 %v88
    %v595 = vunpack.c.l.b16 %v89
    %v596 = vunpack.c.h.b16 %v89
    %v597 = vunpack.c.l.b16 %v90
    %v598 = vunpack.c.h.b16 %v90
    %v599 = vunpack.c.l.b16 %v91
    %v600 = vunpack.c.h.b16 %v91
    %v601 = vunpack.c.l.b16 %v92
    %v602 = vunpack.c.h.b16 %v92
    %v603 = vunpack.c.l.b16 %v93
    %v604 = vunpack.c.h.b16 %v93
    %v605 = vunpack.c.l.b16 %v94
    %v606 = vunpack.c.h.b16 %v94
    %v607 = vunpack.c.l.b16 %v95
    %v608 = vunpack.c.h.b16 %v95
    %v609 = vunpack.c.l.b16 %v96
    %v610 = vunpack.c.h.b16 %v96
    %v611 = vunpack.c.l.b16 %v97
    %v612 = vunpack.c.h.b16 %v97
    %v613 = vunpack.c.l.b16 %v98
    %v614 = vunpack.c.h.b16 %v98
    %v615 = vunpack.c.l.b16 %v99
    %v616 = vunpack.c.h.b16 %v99
    %v617 = vunpack.c.l.b16 %v100
    %v618 = vunpack.c.h.b16 %v100
    %v619 = vunpack.c.l.b16 %v101
    %v620 = vunpack.c.h.b16 %v101
    %v621 = vunpack.c.l.b16 %v102
    %v622 = vunpack.c.h.b16 %v102
    %v623 = vunpack.c.l.b16 %v103
    %v624 = vunpack.c.h.b16 %v103
    %v625 = vunpack.c.l.b16 %v104
    %v626 = vunpack.c.h.b16 %v104
    %v627 = vunpack.c.l.b16 %v105
    %v628 = vunpack.c.h.b16 %v105
    %v629 = vunpack.c.l.b16 %v106
    %v630 = vunpack.c.h.b16 %v106
    %v631 = vunpack.c.l.b16 %v107
    %v632 = vunpack.c.h.b16 %v107
    %v633 = vunpack.c.l.b16 %v108
    %v634 = vunpack.c.h.b16 %v108
    %v635 = vunpack.c.l.b16 %v109
    %v636 = vunpack.c.h.b16 %v109
    %v637 = vunpack.c.l.b16 %v110
    %v638 = vunpack.c.h.b16 %v110
    %v639 = vunpack.c.l.b16 %v111
    %v640 = vunpack.c.h.b16 %v111
    %v641 = vunpack.c.l.b16 %v112
    %v642 = vunpack.c.h.b16 %v112
    %v643 = vpack.c.b16 %v583, %v579
    %v644 = vpack.c.b16 %v584, %v580
    %v645 = vpack.c.b16 %v585, %v581
    %v646 = vpack.c.b16 %v586, %v582
    %v647 = vpack.c.b16 %v591, %v587
    %v648 = vpack.c.b16 %v592, %v588
    %v649 = vpack.c.b16 %v593, %v589
    %v650 = vpack.c.b16 %v594, %v590
    %v651 = vpack.c.b16 %v599, %v595
    %v652 = vpack.c.b16 %v600, %v596
    %v653 = vpack.c.b16 %v601, %v597
    %v654 = vpack.c.b16 %v602, %v598
    %v655 = vpack.c.b16 %v607, %v603
    %v656 = vpack.c.b16 %v608, %v604
    %v657 = vpack.c.b16 %v609, %v605
    %v658 = vpack.c.b16 %v610, %v606
    %v659 = vpack.c.b16 %v615, %v611
    %v660 = vpack.c.b16 %v616, %v612
    %v661 = vpack.c.b16 %v617, %v613
    %v662 = vpack.c.b16 %v618, %v614
    %v663 = vpack.c.b16 %v623, %v619
    %v664 = vpack.c.b16 %v624, %v620
    %v665 = vpack.c.b16 %v625, %v621
    %v666 = vpack.c.b16 %v626, %v622
    %v667 = vpack.c.b16 %v631, %v627
    %v668 = vpack.c.b16 %v632, %v628
    %v669 = vpack.c.b16 %v633, %v629
    %v670 = vpack.c.b16 %v634, %v630
    %v671 = vpack.c.b16 %v639, %v635
    %v672 = vpack.c.b16 %v640, %v636
    %v673 = vpack.c.b16 %v641, %v637
    %v674 = vpack.c.b16 %v642, %v638
    %707 = vmatprep.subr.bf16.mxu0 %v672
    %708 = vmatpush1.bf16.msra.mxu0 %v671
    %709 = vmatprep.subr.bf16.mxu0 %v668
    %710 = vmatpush1.bf16.msra.mxu0 %v667
    %711 = vmatprep.subr.bf16.mxu0 %v664
    %712 = vmatpush1.bf16.msra.mxu0 %v663
    %713 = vmatprep.subr.bf16.mxu0 %v660
    %714 = vmatpush1.bf16.msra.mxu0 %v659
    %715 = vmatprep.subr.bf16.mxu0 %v656
    %716 = vmatpush1.bf16.msra.mxu0 %v655
    %717 = vmatprep.subr.bf16.mxu0 %v652
    %718 = vmatpush1.bf16.msra.mxu0 %v651
    %719 = vmatprep.subr.bf16.mxu0 %v648
    %720 = vmatpush1.bf16.msra.mxu0 %v647
    %721 = vmatprep.subr.bf16.mxu0 %v644
    %722 = vmatpush1.bf16.msra.mxu0 %v643
    %723 = vmatprep.subr.bf16.mxu0 0
    %724 = vmatpush2.bf16.msra.mxu0 0
    %725 = vmatprep.subr.bf16.mxu0 0
    %726 = vmatpush2.bf16.msra.mxu0 0
    %727 = vmatprep.subr.bf16.mxu0 0
    %728 = vmatpush2.bf16.msra.mxu0 0
    %729 = vmatprep.subr.bf16.mxu0 0
    %730 = vmatpush2.bf16.msra.mxu0 0
    %731 = vmatprep.subr.bf16.mxu0 0
    %732 = vmatpush2.bf16.msra.mxu0 0
    %733 = vmatprep.subr.bf16.mxu0 0
    %734 = vmatpush2.bf16.msra.mxu0 0
    %735 = vmatprep.subr.bf16.mxu0 0
    %736 = vmatpush2.bf16.msra.mxu0 0
    %737 = vmatprep.subr.bf16.mxu0 0
    %738 = vmatpush2.bf16.msra.mxu0 0
    %739 = vmatprep.mubr.bf16.mxu0 0
    %740 = vmatmul.mubr.bf16.gmra.mxu0 0
    %v741 = vpop.f32.mrf.mxu0
    %v742 = vadd.f32 0.0, %v741
    %v743 = vpop.f32.mrf.mxu0
    %v744 = vadd.f32 0.0, %v743
    %v745 = vpop.f32.mrf.mxu0
    %v746 = vpop.f32.mrf.mxu0
    %747 = vdwg.mxu0
    %748 = vmatprep.subr.bf16.mxu0 %v674
    %749 = vmatpush1.bf16.msra.mxu0 %v673
    %750 = vmatprep.subr.bf16.mxu0 %v670
    %751 = vmatpush1.bf16.msra.mxu0 %v669
    %752 = vmatprep.subr.bf16.mxu0 %v666
    %753 = vmatpush1.bf16.msra.mxu0 %v665
    %754 = vmatprep.subr.bf16.mxu0 %v662
    %755 = vmatpush1.bf16.msra.mxu0 %v661
    %756 = vmatprep.subr.bf16.mxu0 %v658
    %757 = vmatpush1.bf16.msra.mxu0 %v657
    %758 = vmatprep.subr.bf16.mxu0 %v654
    %759 = vmatpush1.bf16.msra.mxu0 %v653
    %760 = vmatprep.subr.bf16.mxu0 %v650
    %761 = vmatpush1.bf16.msra.mxu0 %v649
    %762 = vmatprep.subr.bf16.mxu0 %v646
    %763 = vmatpush1.bf16.msra.mxu0 %v645
    %764 = vmatprep.subr.bf16.mxu0 0
    %765 = vmatpush2.bf16.msra.mxu0 0
    %766 = vmatprep.subr.bf16.mxu0 0
    %767 = vmatpush2.bf16.msra.mxu0 0
    %768 = vmatprep.subr.bf16.mxu0 0
    %769 = vmatpush2.bf16.msra.mxu0 0
    %770 = vmatprep.subr.bf16.mxu0 0
    %771 = vmatpush2.bf16.msra.mxu0 0
    %772 = vmatprep.subr.bf16.mxu0 0
    %773 = vmatpush2.bf16.msra.mxu0 0
    %774 = vmatprep.subr.bf16.mxu0 0
    %775 = vmatpush2.bf16.msra.mxu0 0
    %776 = vmatprep.subr.bf16.mxu0 0
    %777 = vmatpush2.bf16.msra.mxu0 0
    %778 = vmatprep.subr.bf16.mxu0 0
    %779 = vmatpush2.bf16.msra.mxu0 0
    %780 = vmatprep.mubr.bf16.mxu0 0
    %781 = vmatmul.mubr.bf16.gmra.mxu0 0
    %v782 = vpop.f32.mrf.mxu0
    %v783 = vadd.f32 0.0, %v782
    %v784 = vpop.f32.mrf.mxu0
    %v785 = vadd.f32 0.0, %v784
    %v786 = vpop.f32.mrf.mxu0
    %v787 = vpop.f32.mrf.mxu0
    %788 = vdwg.mxu0
    %v805 = vunpack.c.l.b16 %v65
    %v806 = vunpack.c.h.b16 %v65
    %v807 = vunpack.c.l.b16 %v66
    %v808 = vunpack.c.h.b16 %v66
    %v809 = vunpack.c.l.b16 %v67
    %v810 = vunpack.c.h.b16 %v67
    %v811 = vunpack.c.l.b16 %v68
    %v812 = vunpack.c.h.b16 %v68
    %v813 = vunpack.c.l.b16 %v69
    %v814 = vunpack.c.h.b16 %v69
    %v815 = vunpack.c.l.b16 %v70
    %v816 = vunpack.c.h.b16 %v70
    %v817 = vunpack.c.l.b16 %v71
    %v818 = vunpack.c.h.b16 %v71
    %v819 = vunpack.c.l.b16 %v72
    %v820 = vunpack.c.h.b16 %v72
    %v821 = vunpack.c.l.b16 %v73
    %v822 = vunpack.c.h.b16 %v73
    %v823 = vunpack.c.l.b16 %v74
    %v824 = vunpack.c.h.b16 %v74
    %v825 = vunpack.c.l.b16 %v75
    %v826 = vunpack.c.h.b16 %v75
    %v827 = vunpack.c.l.b16 %v76
    %v828 = vunpack.c.h.b16 %v76
    %v829 = vunpack.c.l.b16 %v77
    %v830 = vunpack.c.h.b16 %v77
    %v831 = vunpack.c.l.b16 %v78
    %v832 = vunpack.c.h.b16 %v78
    %v833 = vunpack.c.l.b16 %v79
    %v834 = vunpack.c.h.b16 %v79
    %v835 = vunpack.c.l.b16 %v80
    %v836 = vunpack.c.h.b16 %v80
    %v837 = vpack.c.b16 %v809, %v805
    %v838 = vpack.c.b16 %v810, %v806
    %v839 = vpack.c.b16 %v811, %v807
    %v840 = vpack.c.b16 %v812, %v808
    %v841 = vpack.c.b16 %v817, %v813
    %v842 = vpack.c.b16 %v818, %v814
    %v843 = vpack.c.b16 %v819, %v815
    %v844 = vpack.c.b16 %v820, %v816
    %v845 = vpack.c.b16 %v825, %v821
    %v846 = vpack.c.b16 %v826, %v822
    %v847 = vpack.c.b16 %v827, %v823
    %v848 = vpack.c.b16 %v828, %v824
    %v849 = vpack.c.b16 %v833, %v829
    %v850 = vpack.c.b16 %v834, %v830
    %v851 = vpack.c.b16 %v835, %v831
    %v852 = vpack.c.b16 %v836, %v832
    %v870 = vsel %vm280, %v546, 0
    %872 = vmatprep.subr.bf16.mxu0 0
    %873 = vmatpush1.bf16.msra.mxu0 0
    %874 = vmatprep.subr.bf16.mxu0 0
    %875 = vmatpush1.bf16.msra.mxu0 0
    %876 = vmatprep.subr.bf16.mxu0 0
    %877 = vmatpush1.bf16.msra.mxu0 0
    %878 = vmatprep.subr.bf16.mxu0 0
    %879 = vmatpush1.bf16.msra.mxu0 0
    %880 = vmatprep.subr.bf16.mxu0 %v850
    %881 = vmatpush1.bf16.msra.mxu0 %v849
    %882 = vmatprep.subr.bf16.mxu0 %v846
    %883 = vmatpush1.bf16.msra.mxu0 %v845
    %884 = vmatprep.subr.bf16.mxu0 %v842
    %885 = vmatpush1.bf16.msra.mxu0 %v841
    %886 = vmatprep.subr.bf16.mxu0 %v838
    %887 = vmatpush1.bf16.msra.mxu0 %v837
    %888 = vmatprep.subr.bf16.mxu0 0
    %889 = vmatpush2.bf16.msra.mxu0 0
    %890 = vmatprep.subr.bf16.mxu0 0
    %891 = vmatpush2.bf16.msra.mxu0 0
    %892 = vmatprep.subr.bf16.mxu0 0
    %893 = vmatpush2.bf16.msra.mxu0 0
    %894 = vmatprep.subr.bf16.mxu0 0
    %895 = vmatpush2.bf16.msra.mxu0 0
    %896 = vmatprep.subr.bf16.mxu0 0
    %897 = vmatpush2.bf16.msra.mxu0 0
    %898 = vmatprep.subr.bf16.mxu0 0
    %899 = vmatpush2.bf16.msra.mxu0 0
    %900 = vmatprep.subr.bf16.mxu0 0
    %901 = vmatpush2.bf16.msra.mxu0 0
    %902 = vmatprep.subr.bf16.mxu0 0
    %903 = vmatpush2.bf16.msra.mxu0 0
    %904 = vmatprep.mubr.bf16.mxu0 0
    %905 = vmatmul.mubr.bf16.gmra.mxu0 %v870
    %v906 = vpop.f32.mrf.mxu0
    %v907 = vadd.f32 %v742, %v906
    %v908 = vpop.f32.mrf.mxu0
    %v909 = vadd.f32 %v744, %v908
    %v910 = vpop.f32.mrf.mxu0
    %v911 = vpop.f32.mrf.mxu0
    %912 = vdwg.mxu0
    %913 = vmatprep.subr.bf16.mxu0 0
    %914 = vmatpush1.bf16.msra.mxu0 0
    %915 = vmatprep.subr.bf16.mxu0 0
    %916 = vmatpush1.bf16.msra.mxu0 0
    %917 = vmatprep.subr.bf16.mxu0 0
    %918 = vmatpush1.bf16.msra.mxu0 0
    %919 = vmatprep.subr.bf16.mxu0 0
    %920 = vmatpush1.bf16.msra.mxu0 0
    %921 = vmatprep.subr.bf16.mxu0 %v852
    %922 = vmatpush1.bf16.msra.mxu0 %v851
    %923 = vmatprep.subr.bf16.mxu0 %v848
    %924 = vmatpush1.bf16.msra.mxu0 %v847
    %925 = vmatprep.subr.bf16.mxu0 %v844
    %926 = vmatpush1.bf16.msra.mxu0 %v843
    %927 = vmatprep.subr.bf16.mxu0 %v840
    %928 = vmatpush1.bf16.msra.mxu0 %v839
    %929 = vmatprep.subr.bf16.mxu0 0
    %930 = vmatpush2.bf16.msra.mxu0 0
    %931 = vmatprep.subr.bf16.mxu0 0
    %932 = vmatpush2.bf16.msra.mxu0 0
    %933 = vmatprep.subr.bf16.mxu0 0
    %934 = vmatpush2.bf16.msra.mxu0 0
    %935 = vmatprep.subr.bf16.mxu0 0
    %936 = vmatpush2.bf16.msra.mxu0 0
    %937 = vmatprep.subr.bf16.mxu0 0
    %938 = vmatpush2.bf16.msra.mxu0 0
    %939 = vmatprep.subr.bf16.mxu0 0
    %940 = vmatpush2.bf16.msra.mxu0 0
    %941 = vmatprep.subr.bf16.mxu0 0
    %942 = vmatpush2.bf16.msra.mxu0 0
    %943 = vmatprep.subr.bf16.mxu0 0
    %944 = vmatpush2.bf16.msra.mxu0 0
    %945 = vmatprep.mubr.bf16.mxu0 0
    %946 = vmatmul.mubr.bf16.gmra.mxu0 %v870
    %v947 = vpop.f32.mrf.mxu0
    %v948 = vadd.f32 %v783, %v947
    %v949 = vpop.f32.mrf.mxu0
    %v950 = vadd.f32 %v785, %v949
    %v951 = vpop.f32.mrf.mxu0
    %v952 = vpop.f32.mrf.mxu0
    %953 = vdwg.mxu0
    %v954 = vadd.f32 %v907, %v186
    %v955 = vadd.f32 %v909, %v190
    %v956 = vadd.f32 %v948, %v194
    %v957 = vadd.f32 %v950, %v198
    %v958 = vxor.u32 %v954, 2147483648
    %v959 = vxor.u32 %v955, 2147483648
    %v960 = vxor.u32 %v956, 2147483648
    %v961 = vmul.f32 %v958, 1.442695
    %v962 = vpow.pop %v961
    %v963 = vmul.f32 %v959, 1.442695
    %v964 = vpow.pop %v963
    %v965 = vmul.f32 %v960, 1.442695
    %v966 = vpow.pop %v965
    %v967 = vadd.f32 %v962, 1.0
    %v968 = vadd.f32 %v964, 1.0
    %v969 = vadd.f32 %v966, 1.0
    %v970 = vrcp.pop %v967
    %v971 = vmul.f32 1.0, %v970
    %v972 = vrcp.pop %v968
    %v973 = vmul.f32 1.0, %v972
    %v974 = vrcp.pop %v969
    %v975 = vmul.f32 1.0, %v974
    %v976 = vtanh.pop %v957
    %v977 = vmul.f32 %v973, 0.0
    %v978 = vmul.f32 %v971, %v976
    %v979 = vadd.f32 %v977, %v978
    %v980 = vtanh.pop %v979
    %v981 = vmul.f32 %v975, %v980
    %v982 = vmax.f32 %v981, 0.0
    %v983 = vpack.c.bf16 %v544, %v544
    %v985 = vsel %vm280, %v983, 0
    %987 = vmatprep.subr.bf16.mxu0 0
    %988 = vmatpush1.bf16.msra.mxu0 0
    %989 = vmatprep.subr.bf16.mxu0 0
    %990 = vmatpush1.bf16.msra.mxu0 0
    %991 = vmatprep.subr.bf16.mxu0 0
    %992 = vmatpush1.bf16.msra.mxu0 0
    %993 = vmatprep.subr.bf16.mxu0 0
    %994 = vmatpush1.bf16.msra.mxu0 0
    %995 = vmatprep.subr.bf16.mxu0 %v271
    %996 = vmatpush1.bf16.msra.mxu0 %v270
    %997 = vmatprep.subr.bf16.mxu0 %v269
    %998 = vmatpush1.bf16.msra.mxu0 %v268
    %999 = vmatprep.subr.bf16.mxu0 %v267
    %1000 = vmatpush1.bf16.msra.mxu0 %v266
    %1001 = vmatprep.subr.bf16.mxu0 %v265
    %1002 = vmatpush1.bf16.msra.mxu0 %v264
    %1003 = vmatprep.subr.bf16.mxu0 0
    %1004 = vmatpush2.bf16.msra.mxu0 0
    %1005 = vmatprep.subr.bf16.mxu0 0
    %1006 = vmatpush2.bf16.msra.mxu0 0
    %1007 = vmatprep.subr.bf16.mxu0 0
    %1008 = vmatpush2.bf16.msra.mxu0 0
    %1009 = vmatprep.subr.bf16.mxu0 0
    %1010 = vmatpush2.bf16.msra.mxu0 0
    %1011 = vmatprep.subr.bf16.mxu0 0
    %1012 = vmatpush2.bf16.msra.mxu0 0
    %1013 = vmatprep.subr.bf16.mxu0 0
    %1014 = vmatpush2.bf16.msra.mxu0 0
    %1015 = vmatprep.subr.bf16.mxu0 0
    %1016 = vmatpush2.bf16.msra.mxu0 0
    %1017 = vmatprep.subr.bf16.mxu0 0
    %1018 = vmatpush2.bf16.msra.mxu0 0
    %1019 = vmatprep.mubr.bf16.mxu0 0
    %1020 = vmatmul.mubr.bf16.gmra.mxu0 %v985
    %v1021 = vpop.f32.mrf.mxu0
    %v1022 = vadd.f32 0.0, %v1021
    %v1023 = vpop.f32.mrf.mxu0
    %v1024 = vadd.f32 0.0, %v1023
    %v1025 = vpop.f32.mrf.mxu0
    %v1026 = vpop.f32.mrf.mxu0
    %1027 = vdwg.mxu0
    %v1028 = vrot.slane %v327, 2
    %v1029 = vrot.slane %v328, 1
    %v1030 = vsel %vm330, %v1029, %v1028
    %v1031 = vpack.c.b16 %v1030, %v1030
    %v1033 = vsel %vm343, %v1031, 0
    %1035 = vmatprep.subr.bf16.mxu0 0
    %1036 = vmatpush1.bf16.msra.mxu0 0
    %1037 = vmatprep.subr.bf16.mxu0 0
    %1038 = vmatpush1.bf16.msra.mxu0 0
    %1039 = vmatprep.subr.bf16.mxu0 0
    %1040 = vmatpush1.bf16.msra.mxu0 0
    %1041 = vmatprep.subr.bf16.mxu0 0
    %1042 = vmatpush1.bf16.msra.mxu0 0
    %1043 = vmatprep.subr.bf16.mxu0 0
    %1044 = vmatpush1.bf16.msra.mxu0 0
    %1045 = vmatprep.subr.bf16.mxu0 0
    %1046 = vmatpush1.bf16.msra.mxu0 0
    %1047 = vmatprep.subr.bf16.mxu0 0
    %1048 = vmatpush1.bf16.msra.mxu0 0
    %1049 = vmatprep.subr.bf16.mxu0 %v340
    %1050 = vmatpush1.bf16.msra.mxu0 %v339
    %1051 = vmatprep.subr.bf16.mxu0 0
    %1052 = vmatpush2.bf16.msra.mxu0 0
    %1053 = vmatprep.subr.bf16.mxu0 0
    %1054 = vmatpush2.bf16.msra.mxu0 0
    %1055 = vmatprep.subr.bf16.mxu0 0
    %1056 = vmatpush2.bf16.msra.mxu0 0
    %1057 = vmatprep.subr.bf16.mxu0 0
    %1058 = vmatpush2.bf16.msra.mxu0 0
    %1059 = vmatprep.subr.bf16.mxu0 0
    %1060 = vmatpush2.bf16.msra.mxu0 0
    %1061 = vmatprep.subr.bf16.mxu0 0
    %1062 = vmatpush2.bf16.msra.mxu0 0
    %1063 = vmatprep.subr.bf16.mxu0 0
    %1064 = vmatpush2.bf16.msra.mxu0 0
    %1065 = vmatprep.subr.bf16.mxu0 0
    %1066 = vmatpush2.bf16.msra.mxu0 0
    %1067 = vmatprep.mubr.bf16.mxu0 0
    %1068 = vmatmul.mubr.bf16.gmra.mxu0 %v1033
    %v1069 = vpop.f32.mrf.mxu0
    %v1070 = vadd.f32 %v1022, %v1069
    %v1071 = vpop.f32.mrf.mxu0
    %v1072 = vadd.f32 %v1024, %v1071
    %v1073 = vpop.f32.mrf.mxu0
    %v1074 = vpop.f32.mrf.mxu0
    %1075 = vdwg.mxu0
    %v1076 = vadd.f32 %v1070, %v174
    %v1077 = vadd.f32 %v1072, %v178
    %v1078 = vxor.u32 %v1076, 2147483648
    %v1079 = vxor.u32 %v1077, 2147483648
    %v1080 = vmul.f32 %v1078, 1.442695
    %v1081 = vpow.pop %v1080
    %v1082 = vmul.f32 %v1079, 1.442695
    %v1083 = vpow.pop %v1082
    %v1084 = vadd.f32 %v1081, 1.0
    %v1085 = vadd.f32 %v1083, 1.0
    %v1086 = vrcp.pop %v1084
    %v1087 = vmul.f32 1.0, %v1086
    %v1088 = vrcp.pop %v1085
    %v1089 = vmul.f32 1.0, %v1088
    %v1090 = vtanh.pop %v1077
    %v1091 = vmul.f32 %v1087, %v538
    %1093 = vrot.lane.b32.xlu0 %v1090, 64
    %v1094 = vpop.permute.xlu0 %1093
    %v1096 = vmul.f32 %v1087, %v1094
    %1098 = vrot.lane.b32.xlu0 %v1096, 64
    %v1099 = vpop.permute.xlu0 %1098
    %v1101 = vadd.f32 %v1091, %v1099
    %v1102 = vtanh.pop %v1101
    %1104 = vrot.lane.b32.xlu0 %v1102, 64
    %v1105 = vpop.permute.xlu0 %1104
    %v1107 = vmul.f32 %v1089, %v1105
    %v1108 = vmax.f32 %v1107, 0.0
    %v1109 = vpack.c.bf16 %v545, %v545
    %v1110 = vpack.c.bf16 %v981, %v981
    %1111 = vmatprep.subr.bf16.mxu0 %v672
    %1112 = vmatpush1.bf16.msra.mxu0 %v671
    %1113 = vmatprep.subr.bf16.mxu0 %v668
    %1114 = vmatpush1.bf16.msra.mxu0 %v667
    %1115 = vmatprep.subr.bf16.mxu0 %v664
    %1116 = vmatpush1.bf16.msra.mxu0 %v663
    %1117 = vmatprep.subr.bf16.mxu0 %v660
    %1118 = vmatpush1.bf16.msra.mxu0 %v659
    %1119 = vmatprep.subr.bf16.mxu0 %v656
    %1120 = vmatpush1.bf16.msra.mxu0 %v655
    %1121 = vmatprep.subr.bf16.mxu0 %v652
    %1122 = vmatpush1.bf16.msra.mxu0 %v651
    %1123 = vmatprep.subr.bf16.mxu0 %v648
    %1124 = vmatpush1.bf16.msra.mxu0 %v647
    %1125 = vmatprep.subr.bf16.mxu0 %v644
    %1126 = vmatpush1.bf16.msra.mxu0 %v643
    %1127 = vmatprep.subr.bf16.mxu0 0
    %1128 = vmatpush2.bf16.msra.mxu0 0
    %1129 = vmatprep.subr.bf16.mxu0 0
    %1130 = vmatpush2.bf16.msra.mxu0 0
    %1131 = vmatprep.subr.bf16.mxu0 0
    %1132 = vmatpush2.bf16.msra.mxu0 0
    %1133 = vmatprep.subr.bf16.mxu0 0
    %1134 = vmatpush2.bf16.msra.mxu0 0
    %1135 = vmatprep.subr.bf16.mxu0 0
    %1136 = vmatpush2.bf16.msra.mxu0 0
    %1137 = vmatprep.subr.bf16.mxu0 0
    %1138 = vmatpush2.bf16.msra.mxu0 0
    %1139 = vmatprep.subr.bf16.mxu0 0
    %1140 = vmatpush2.bf16.msra.mxu0 0
    %1141 = vmatprep.subr.bf16.mxu0 0
    %1142 = vmatpush2.bf16.msra.mxu0 0
    %1143 = vmatprep.mubr.bf16.mxu0 0
    %1144 = vmatmul.mubr.bf16.gmra.mxu0 %v1110
    %v1145 = vpop.f32.mrf.mxu0
    %v1146 = vadd.f32 0.0, %v1145
    %v1147 = vpop.f32.mrf.mxu0
    %v1148 = vadd.f32 0.0, %v1147
    %v1149 = vpop.f32.mrf.mxu0
    %v1150 = vpop.f32.mrf.mxu0
    %1151 = vdwg.mxu0
    %1152 = vmatprep.subr.bf16.mxu0 %v674
    %1153 = vmatpush1.bf16.msra.mxu0 %v673
    %1154 = vmatprep.subr.bf16.mxu0 %v670
    %1155 = vmatpush1.bf16.msra.mxu0 %v669
    %1156 = vmatprep.subr.bf16.mxu0 %v666
    %1157 = vmatpush1.bf16.msra.mxu0 %v665
    %1158 = vmatprep.subr.bf16.mxu0 %v662
    %1159 = vmatpush1.bf16.msra.mxu0 %v661
    %1160 = vmatprep.subr.bf16.mxu0 %v658
    %1161 = vmatpush1.bf16.msra.mxu0 %v657
    %1162 = vmatprep.subr.bf16.mxu0 %v654
    %1163 = vmatpush1.bf16.msra.mxu0 %v653
    %1164 = vmatprep.subr.bf16.mxu0 %v650
    %1165 = vmatpush1.bf16.msra.mxu0 %v649
    %1166 = vmatprep.subr.bf16.mxu0 %v646
    %1167 = vmatpush1.bf16.msra.mxu0 %v645
    %1168 = vmatprep.subr.bf16.mxu0 0
    %1169 = vmatpush2.bf16.msra.mxu0 0
    %1170 = vmatprep.subr.bf16.mxu0 0
    %1171 = vmatpush2.bf16.msra.mxu0 0
    %1172 = vmatprep.subr.bf16.mxu0 0
    %1173 = vmatpush2.bf16.msra.mxu0 0
    %1174 = vmatprep.subr.bf16.mxu0 0
    %1175 = vmatpush2.bf16.msra.mxu0 0
    %1176 = vmatprep.subr.bf16.mxu0 0
    %1177 = vmatpush2.bf16.msra.mxu0 0
    %1178 = vmatprep.subr.bf16.mxu0 0
    %1179 = vmatpush2.bf16.msra.mxu0 0
    %1180 = vmatprep.subr.bf16.mxu0 0
    %1181 = vmatpush2.bf16.msra.mxu0 0
    %1182 = vmatprep.subr.bf16.mxu0 0
    %1183 = vmatpush2.bf16.msra.mxu0 0
    %1184 = vmatprep.mubr.bf16.mxu0 0
    %1185 = vmatmul.mubr.bf16.gmra.mxu0 %v1110
    %v1186 = vpop.f32.mrf.mxu0
    %v1187 = vadd.f32 0.0, %v1186
    %v1188 = vpop.f32.mrf.mxu0
    %v1189 = vadd.f32 0.0, %v1188
    %v1190 = vpop.f32.mrf.mxu0
    %v1191 = vpop.f32.mrf.mxu0
    %1192 = vdwg.mxu0
    %v1194 = vsel %vm280, %v1109, 0
    %1196 = vmatprep.subr.bf16.mxu0 0
    %1197 = vmatpush1.bf16.msra.mxu0 0
    %1198 = vmatprep.subr.bf16.mxu0 0
    %1199 = vmatpush1.bf16.msra.mxu0 0
    %1200 = vmatprep.subr.bf16.mxu0 0
    %1201 = vmatpush1.bf16.msra.mxu0 0
    %1202 = vmatprep.subr.bf16.mxu0 0
    %1203 = vmatpush1.bf16.msra.mxu0 0
    %1204 = vmatprep.subr.bf16.mxu0 %v850
    %1205 = vmatpush1.bf16.msra.mxu0 %v849
    %1206 = vmatprep.subr.bf16.mxu0 %v846
    %1207 = vmatpush1.bf16.msra.mxu0 %v845
    %1208 = vmatprep.subr.bf16.mxu0 %v842
    %1209 = vmatpush1.bf16.msra.mxu0 %v841
    %1210 = vmatprep.subr.bf16.mxu0 %v838
    %1211 = vmatpush1.bf16.msra.mxu0 %v837
    %1212 = vmatprep.subr.bf16.mxu0 0
    %1213 = vmatpush2.bf16.msra.mxu0 0
    %1214 = vmatprep.subr.bf16.mxu0 0
    %1215 = vmatpush2.bf16.msra.mxu0 0
    %1216 = vmatprep.subr.bf16.mxu0 0
    %1217 = vmatpush2.bf16.msra.mxu0 0
    %1218 = vmatprep.subr.bf16.mxu0 0
    %1219 = vmatpush2.bf16.msra.mxu0 0
    %1220 = vmatprep.subr.bf16.mxu0 0
    %1221 = vmatpush2.bf16.msra.mxu0 0
    %1222 = vmatprep.subr.bf16.mxu0 0
    %1223 = vmatpush2.bf16.msra.mxu0 0
    %1224 = vmatprep.subr.bf16.mxu0 0
    %1225 = vmatpush2.bf16.msra.mxu0 0
    %1226 = vmatprep.subr.bf16.mxu0 0
    %1227 = vmatpush2.bf16.msra.mxu0 0
    %1228 = vmatprep.mubr.bf16.mxu0 0
    %1229 = vmatmul.mubr.bf16.gmra.mxu0 %v1194
    %v1230 = vpop.f32.mrf.mxu0
    %v1231 = vadd.f32 %v1146, %v1230
    %v1232 = vpop.f32.mrf.mxu0
    %v1233 = vadd.f32 %v1148, %v1232
    %v1234 = vpop.f32.mrf.mxu0
    %v1235 = vpop.f32.mrf.mxu0
    %1236 = vdwg.mxu0
    %1237 = vmatprep.subr.bf16.mxu0 0
    %1238 = vmatpush1.bf16.msra.mxu0 0
    %1239 = vmatprep.subr.bf16.mxu0 0
    %1240 = vmatpush1.bf16.msra.mxu0 0
    %1241 = vmatprep.subr.bf16.mxu0 0
    %1242 = vmatpush1.bf16.msra.mxu0 0
    %1243 = vmatprep.subr.bf16.mxu0 0
    %1244 = vmatpush1.bf16.msra.mxu0 0
    %1245 = vmatprep.subr.bf16.mxu0 %v852
    %1246 = vmatpush1.bf16.msra.mxu0 %v851
    %1247 = vmatprep.subr.bf16.mxu0 %v848
    %1248 = vmatpush1.bf16.msra.mxu0 %v847
    %1249 = vmatprep.subr.bf16.mxu0 %v844
    %1250 = vmatpush1.bf16.msra.mxu0 %v843
    %1251 = vmatprep.subr.bf16.mxu0 %v840
    %1252 = vmatpush1.bf16.msra.mxu0 %v839
    %1253 = vmatprep.subr.bf16.mxu0 0
    %1254 = vmatpush2.bf16.msra.mxu0 0
    %1255 = vmatprep.subr.bf16.mxu0 0
    %1256 = vmatpush2.bf16.msra.mxu0 0
    %1257 = vmatprep.subr.bf16.mxu0 0
    %1258 = vmatpush2.bf16.msra.mxu0 0
    %1259 = vmatprep.subr.bf16.mxu0 0
    %1260 = vmatpush2.bf16.msra.mxu0 0
    %1261 = vmatprep.subr.bf16.mxu0 0
    %1262 = vmatpush2.bf16.msra.mxu0 0
    %1263 = vmatprep.subr.bf16.mxu0 0
    %1264 = vmatpush2.bf16.msra.mxu0 0
    %1265 = vmatprep.subr.bf16.mxu0 0
    %1266 = vmatpush2.bf16.msra.mxu0 0
    %1267 = vmatprep.subr.bf16.mxu0 0
    %1268 = vmatpush2.bf16.msra.mxu0 0
    %1269 = vmatprep.mubr.bf16.mxu0 0
    %1270 = vmatmul.mubr.bf16.gmra.mxu0 %v1194
    %v1271 = vpop.f32.mrf.mxu0
    %v1272 = vadd.f32 %v1187, %v1271
    %v1273 = vpop.f32.mrf.mxu0
    %v1274 = vadd.f32 %v1189, %v1273
    %v1275 = vpop.f32.mrf.mxu0
    %v1276 = vpop.f32.mrf.mxu0
    %1277 = vdwg.mxu0
    %v1278 = vadd.f32 %v1231, %v186
    %v1279 = vadd.f32 %v1233, %v190
    %v1280 = vadd.f32 %v1272, %v194
    %v1281 = vadd.f32 %v1274, %v198
    %v1282 = vxor.u32 %v1278, 2147483648
    %v1283 = vxor.u32 %v1279, 2147483648
    %v1284 = vxor.u32 %v1280, 2147483648
    %v1285 = vmul.f32 %v1282, 1.442695
    %v1286 = vpow.pop %v1285
    %v1287 = vmul.f32 %v1283, 1.442695
    %v1288 = vpow.pop %v1287
    %v1289 = vmul.f32 %v1284, 1.442695
    %v1290 = vpow.pop %v1289
    %v1291 = vadd.f32 %v1286, 1.0
    %v1292 = vadd.f32 %v1288, 1.0
    %v1293 = vadd.f32 %v1290, 1.0
    %v1294 = vrcp.pop %v1291
    %v1295 = vmul.f32 1.0, %v1294
    %v1296 = vrcp.pop %v1292
    %v1297 = vmul.f32 1.0, %v1296
    %v1298 = vrcp.pop %v1293
    %v1299 = vmul.f32 1.0, %v1298
    %v1300 = vtanh.pop %v1281
    %v1301 = vmul.f32 %v1297, %v979
    %v1302 = vmul.f32 %v1295, %v1300
    %v1303 = vadd.f32 %v1301, %v1302
    %v1304 = vtanh.pop %v1303
    %v1305 = vmul.f32 %v1299, %v1304
    %v1306 = vmax.f32 %v1305, 0.0
    %v1307 = vpack.c.bf16 %v982, %v982
    %v1316 = vunpack.c.l.b16 %v129
    %v1317 = vunpack.c.h.b16 %v129
    %v1318 = vunpack.c.l.b16 %v130
    %v1319 = vunpack.c.h.b16 %v130
    %v1320 = vunpack.c.l.b16 %v131
    %v1321 = vunpack.c.h.b16 %v131
    %v1322 = vunpack.c.l.b16 %v132
    %v1323 = vunpack.c.h.b16 %v132
    %v1324 = vunpack.c.l.b16 %v133
    %v1325 = vunpack.c.h.b16 %v133
    %v1326 = vunpack.c.l.b16 %v134
    %v1327 = vunpack.c.h.b16 %v134
    %v1328 = vunpack.c.l.b16 %v135
    %v1329 = vunpack.c.h.b16 %v135
    %v1330 = vunpack.c.l.b16 %v136
    %v1331 = vunpack.c.h.b16 %v136
    %v1332 = vpack.c.b16 %v1318, %v1316
    %v1333 = vpack.c.b16 %v1319, %v1317
    %v1334 = vpack.c.b16 %v1322, %v1320
    %v1335 = vpack.c.b16 %v1323, %v1321
    %v1336 = vpack.c.b16 %v1326, %v1324
    %v1337 = vpack.c.b16 %v1327, %v1325
    %v1338 = vpack.c.b16 %v1330, %v1328
    %v1339 = vpack.c.b16 %v1331, %v1329
    %1348 = vmatprep.subr.bf16.mxu0 0
    %1349 = vmatpush1.bf16.msra.mxu0 0
    %1350 = vmatprep.subr.bf16.mxu0 0
    %1351 = vmatpush1.bf16.msra.mxu0 0
    %1352 = vmatprep.subr.bf16.mxu0 0
    %1353 = vmatpush1.bf16.msra.mxu0 0
    %1354 = vmatprep.subr.bf16.mxu0 0
    %1355 = vmatpush1.bf16.msra.mxu0 0
    %1356 = vmatprep.subr.bf16.mxu0 %v1339
    %1357 = vmatpush1.bf16.msra.mxu0 %v1338
    %1358 = vmatprep.subr.bf16.mxu0 %v1337
    %1359 = vmatpush1.bf16.msra.mxu0 %v1336
    %1360 = vmatprep.subr.bf16.mxu0 %v1335
    %1361 = vmatpush1.bf16.msra.mxu0 %v1334
    %1362 = vmatprep.subr.bf16.mxu0 %v1333
    %1363 = vmatpush1.bf16.msra.mxu0 %v1332
    %1364 = vmatprep.subr.bf16.mxu0 0
    %1365 = vmatpush2.bf16.msra.mxu0 0
    %1366 = vmatprep.subr.bf16.mxu0 0
    %1367 = vmatpush2.bf16.msra.mxu0 0
    %1368 = vmatprep.subr.bf16.mxu0 0
    %1369 = vmatpush2.bf16.msra.mxu0 0
    %1370 = vmatprep.subr.bf16.mxu0 0
    %1371 = vmatpush2.bf16.msra.mxu0 0
    %1372 = vmatprep.subr.bf16.mxu0 0
    %1373 = vmatpush2.bf16.msra.mxu0 0
    %1374 = vmatprep.subr.bf16.mxu0 0
    %1375 = vmatpush2.bf16.msra.mxu0 0
    %1376 = vmatprep.subr.bf16.mxu0 0
    %1377 = vmatpush2.bf16.msra.mxu0 0
    %1378 = vmatprep.subr.bf16.mxu0 0
    %1379 = vmatpush2.bf16.msra.mxu0 0
    %1380 = vmatprep.mubr.bf16.mxu0 0
    %1381 = vmatmul.mubr.bf16.gmra.mxu0 %v282
    %v1382 = vpop.f32.mrf.mxu0
    %v1383 = vadd.f32 0.0, %v1382
    %v1384 = vpop.f32.mrf.mxu0
    %v1385 = vadd.f32 0.0, %v1384
    %v1386 = vpop.f32.mrf.mxu0
    %v1387 = vpop.f32.mrf.mxu0
    %1388 = vdwg.mxu0
    %v1405 = vunpack.c.l.b16 %v113
    %v1406 = vunpack.c.h.b16 %v113
    %v1407 = vunpack.c.l.b16 %v114
    %v1408 = vunpack.c.h.b16 %v114
    %v1409 = vunpack.c.l.b16 %v115
    %v1410 = vunpack.c.h.b16 %v115
    %v1411 = vunpack.c.l.b16 %v116
    %v1412 = vunpack.c.h.b16 %v116
    %v1413 = vunpack.c.l.b16 %v117
    %v1414 = vunpack.c.h.b16 %v117
    %v1415 = vunpack.c.l.b16 %v118
    %v1416 = vunpack.c.h.b16 %v118
    %v1417 = vunpack.c.l.b16 %v119
    %v1418 = vunpack.c.h.b16 %v119
    %v1419 = vunpack.c.l.b16 %v120
    %v1420 = vunpack.c.h.b16 %v120
    %v1421 = vunpack.c.l.b16 %v121
    %v1422 = vunpack.c.h.b16 %v121
    %v1423 = vunpack.c.l.b16 %v122
    %v1424 = vunpack.c.h.b16 %v122
    %v1425 = vunpack.c.l.b16 %v123
    %v1426 = vunpack.c.h.b16 %v123
    %v1427 = vunpack.c.l.b16 %v124
    %v1428 = vunpack.c.h.b16 %v124
    %v1429 = vunpack.c.l.b16 %v125
    %v1430 = vunpack.c.h.b16 %v125
    %v1431 = vunpack.c.l.b16 %v126
    %v1432 = vunpack.c.h.b16 %v126
    %v1433 = vunpack.c.l.b16 %v127
    %v1434 = vunpack.c.h.b16 %v127
    %v1435 = vunpack.c.l.b16 %v128
    %v1436 = vunpack.c.h.b16 %v128
    %v1437 = vpack.c.b16 %v1407, %v1405
    %v1438 = vpack.c.b16 %v1408, %v1406
    %v1439 = vpack.c.b16 %v1411, %v1409
    %v1440 = vpack.c.b16 %v1412, %v1410
    %v1441 = vpack.c.b16 %v1415, %v1413
    %v1442 = vpack.c.b16 %v1416, %v1414
    %v1443 = vpack.c.b16 %v1419, %v1417
    %v1444 = vpack.c.b16 %v1420, %v1418
    %v1445 = vpack.c.b16 %v1423, %v1421
    %v1446 = vpack.c.b16 %v1424, %v1422
    %v1447 = vpack.c.b16 %v1427, %v1425
    %v1448 = vpack.c.b16 %v1428, %v1426
    %v1449 = vpack.c.b16 %v1431, %v1429
    %v1450 = vpack.c.b16 %v1432, %v1430
    %v1451 = vpack.c.b16 %v1435, %v1433
    %v1452 = vpack.c.b16 %v1436, %v1434
    %1469 = vmatprep.subr.bf16.mxu0 %v1452
    %1470 = vmatpush1.bf16.msra.mxu0 %v1451
    %1471 = vmatprep.subr.bf16.mxu0 %v1450
    %1472 = vmatpush1.bf16.msra.mxu0 %v1449
    %1473 = vmatprep.subr.bf16.mxu0 %v1448
    %1474 = vmatpush1.bf16.msra.mxu0 %v1447
    %1475 = vmatprep.subr.bf16.mxu0 %v1446
    %1476 = vmatpush1.bf16.msra.mxu0 %v1445
    %1477 = vmatprep.subr.bf16.mxu0 %v1444
    %1478 = vmatpush1.bf16.msra.mxu0 %v1443
    %1479 = vmatprep.subr.bf16.mxu0 %v1442
    %1480 = vmatpush1.bf16.msra.mxu0 %v1441
    %1481 = vmatprep.subr.bf16.mxu0 %v1440
    %1482 = vmatpush1.bf16.msra.mxu0 %v1439
    %1483 = vmatprep.subr.bf16.mxu0 %v1438
    %1484 = vmatpush1.bf16.msra.mxu0 %v1437
    %1485 = vmatprep.subr.bf16.mxu0 0
    %1486 = vmatpush2.bf16.msra.mxu0 0
    %1487 = vmatprep.subr.bf16.mxu0 0
    %1488 = vmatpush2.bf16.msra.mxu0 0
    %1489 = vmatprep.subr.bf16.mxu0 0
    %1490 = vmatpush2.bf16.msra.mxu0 0
    %1491 = vmatprep.subr.bf16.mxu0 0
    %1492 = vmatpush2.bf16.msra.mxu0 0
    %1493 = vmatprep.subr.bf16.mxu0 0
    %1494 = vmatpush2.bf16.msra.mxu0 0
    %1495 = vmatprep.subr.bf16.mxu0 0
    %1496 = vmatpush2.bf16.msra.mxu0 0
    %1497 = vmatprep.subr.bf16.mxu0 0
    %1498 = vmatpush2.bf16.msra.mxu0 0
    %1499 = vmatprep.subr.bf16.mxu0 0
    %1500 = vmatpush2.bf16.msra.mxu0 0
    %1501 = vmatprep.mubr.bf16.mxu0 0
    %1502 = vmatmul.mubr.bf16.gmra.mxu0 %v1307
    %v1503 = vpop.f32.mrf.mxu0
    %v1504 = vadd.f32 %v1383, %v1503
    %v1505 = vpop.f32.mrf.mxu0
    %v1506 = vadd.f32 %v1385, %v1505
    %v1507 = vpop.f32.mrf.mxu0
    %v1508 = vpop.f32.mrf.mxu0
    %1509 = vdwg.mxu0
    %v1510 = vadd.f32 %v1504, %v208
    %v1511 = vadd.f32 %v1506, %v212
    %v1512 = vxor.u32 %v1510, 2147483648
    %v1513 = vxor.u32 %v1511, 2147483648
    %v1514 = vmul.f32 %v1512, 1.442695
    %v1515 = vpow.pop %v1514
    %v1516 = vmul.f32 %v1513, 1.442695
    %v1517 = vpow.pop %v1516
    %v1518 = vadd.f32 %v1515, 1.0
    %v1519 = vadd.f32 %v1517, 1.0
    %v1520 = vrcp.pop %v1518
    %v1521 = vmul.f32 1.0, %v1520
    %v1522 = vrcp.pop %v1519
    %v1523 = vmul.f32 1.0, %v1522
    %v1524 = vtanh.pop %v1511
    %v1525 = vmul.f32 %v1521, 0.0
    %1527 = vrot.lane.b32.xlu0 %v1524, 64
    %v1528 = vpop.permute.xlu0 %1527
    %v1530 = vmul.f32 %v1521, %v1528
    %1532 = vrot.lane.b32.xlu0 %v1530, 64
    %v1533 = vpop.permute.xlu0 %1532
    %v1535 = vadd.f32 %v1525, %v1533
    %v1536 = vtanh.pop %v1535
    %1538 = vrot.lane.b32.xlu0 %v1536, 64
    %v1539 = vpop.permute.xlu0 %1538
    %v1541 = vmul.f32 %v1523, %v1539
    %v1542 = vpack.c.bf16 %v1107, %v1107
    %v1544 = vsel %vm280, %v1542, 0
    %1546 = vmatprep.subr.bf16.mxu0 0
    %1547 = vmatpush1.bf16.msra.mxu0 0
    %1548 = vmatprep.subr.bf16.mxu0 0
    %1549 = vmatpush1.bf16.msra.mxu0 0
    %1550 = vmatprep.subr.bf16.mxu0 0
    %1551 = vmatpush1.bf16.msra.mxu0 0
    %1552 = vmatprep.subr.bf16.mxu0 0
    %1553 = vmatpush1.bf16.msra.mxu0 0
    %1554 = vmatprep.subr.bf16.mxu0 %v271
    %1555 = vmatpush1.bf16.msra.mxu0 %v270
    %1556 = vmatprep.subr.bf16.mxu0 %v269
    %1557 = vmatpush1.bf16.msra.mxu0 %v268
    %1558 = vmatprep.subr.bf16.mxu0 %v267
    %1559 = vmatpush1.bf16.msra.mxu0 %v266
    %1560 = vmatprep.subr.bf16.mxu0 %v265
    %1561 = vmatpush1.bf16.msra.mxu0 %v264
    %1562 = vmatprep.subr.bf16.mxu0 0
    %1563 = vmatpush2.bf16.msra.mxu0 0
    %1564 = vmatprep.subr.bf16.mxu0 0
    %1565 = vmatpush2.bf16.msra.mxu0 0
    %1566 = vmatprep.subr.bf16.mxu0 0
    %1567 = vmatpush2.bf16.msra.mxu0 0
    %1568 = vmatprep.subr.bf16.mxu0 0
    %1569 = vmatpush2.bf16.msra.mxu0 0
    %1570 = vmatprep.subr.bf16.mxu0 0
    %1571 = vmatpush2.bf16.msra.mxu0 0
    %1572 = vmatprep.subr.bf16.mxu0 0
    %1573 = vmatpush2.bf16.msra.mxu0 0
    %1574 = vmatprep.subr.bf16.mxu0 0
    %1575 = vmatpush2.bf16.msra.mxu0 0
    %1576 = vmatprep.subr.bf16.mxu0 0
    %1577 = vmatpush2.bf16.msra.mxu0 0
    %1578 = vmatprep.mubr.bf16.mxu0 0
    %1579 = vmatmul.mubr.bf16.gmra.mxu0 %v1544
    %v1580 = vpop.f32.mrf.mxu0
    %v1581 = vadd.f32 0.0, %v1580
    %v1582 = vpop.f32.mrf.mxu0
    %v1583 = vadd.f32 0.0, %v1582
    %v1584 = vpop.f32.mrf.mxu0
    %v1585 = vpop.f32.mrf.mxu0
    %1586 = vdwg.mxu0
    %v1587 = vrot.slane %v327, 3
    %v1588 = vrot.slane %v328, 2
    %v1589 = vsel %vm330, %v1588, %v1587
    %v1590 = vpack.c.b16 %v1589, %v1589
    %v1592 = vsel %vm343, %v1590, 0
    %1594 = vmatprep.subr.bf16.mxu0 0
    %1595 = vmatpush1.bf16.msra.mxu0 0
    %1596 = vmatprep.subr.bf16.mxu0 0
    %1597 = vmatpush1.bf16.msra.mxu0 0
    %1598 = vmatprep.subr.bf16.mxu0 0
    %1599 = vmatpush1.bf16.msra.mxu0 0
    %1600 = vmatprep.subr.bf16.mxu0 0
    %1601 = vmatpush1.bf16.msra.mxu0 0
    %1602 = vmatprep.subr.bf16.mxu0 0
    %1603 = vmatpush1.bf16.msra.mxu0 0
    %1604 = vmatprep.subr.bf16.mxu0 0
    %1605 = vmatpush1.bf16.msra.mxu0 0
    %1606 = vmatprep.subr.bf16.mxu0 0
    %1607 = vmatpush1.bf16.msra.mxu0 0
    %1608 = vmatprep.subr.bf16.mxu0 %v340
    %1609 = vmatpush1.bf16.msra.mxu0 %v339
    %1610 = vmatprep.subr.bf16.mxu0 0
    %1611 = vmatpush2.bf16.msra.mxu0 0
    %1612 = vmatprep.subr.bf16.mxu0 0
    %1613 = vmatpush2.bf16.msra.mxu0 0
    %1614 = vmatprep.subr.bf16.mxu0 0
    %1615 = vmatpush2.bf16.msra.mxu0 0
    %1616 = vmatprep.subr.bf16.mxu0 0
    %1617 = vmatpush2.bf16.msra.mxu0 0
    %1618 = vmatprep.subr.bf16.mxu0 0
    %1619 = vmatpush2.bf16.msra.mxu0 0
    %1620 = vmatprep.subr.bf16.mxu0 0
    %1621 = vmatpush2.bf16.msra.mxu0 0
    %1622 = vmatprep.subr.bf16.mxu0 0
    %1623 = vmatpush2.bf16.msra.mxu0 0
    %1624 = vmatprep.subr.bf16.mxu0 0
    %1625 = vmatpush2.bf16.msra.mxu0 0
    %1626 = vmatprep.mubr.bf16.mxu0 0
    %1627 = vmatmul.mubr.bf16.gmra.mxu0 %v1592
    %v1628 = vpop.f32.mrf.mxu0
    %v1629 = vadd.f32 %v1581, %v1628
    %v1630 = vpop.f32.mrf.mxu0
    %v1631 = vadd.f32 %v1583, %v1630
    %v1632 = vpop.f32.mrf.mxu0
    %v1633 = vpop.f32.mrf.mxu0
    %1634 = vdwg.mxu0
    %v1635 = vadd.f32 %v1629, %v174
    %v1636 = vadd.f32 %v1631, %v178
    %v1637 = vxor.u32 %v1635, 2147483648
    %v1638 = vxor.u32 %v1636, 2147483648
    %v1639 = vmul.f32 %v1637, 1.442695
    %v1640 = vpow.pop %v1639
    %v1641 = vmul.f32 %v1638, 1.442695
    %v1642 = vpow.pop %v1641
    %v1643 = vadd.f32 %v1640, 1.0
    %v1644 = vadd.f32 %v1642, 1.0
    %v1645 = vrcp.pop %v1643
    %v1646 = vmul.f32 1.0, %v1645
    %v1647 = vrcp.pop %v1644
    %v1648 = vmul.f32 1.0, %v1647
    %v1649 = vtanh.pop %v1636
    %v1650 = vmul.f32 %v1646, %v1101
    %1652 = vrot.lane.b32.xlu0 %v1649, 64
    %v1653 = vpop.permute.xlu0 %1652
    %v1655 = vmul.f32 %v1646, %v1653
    %1657 = vrot.lane.b32.xlu0 %v1655, 64
    %v1658 = vpop.permute.xlu0 %1657
    %v1660 = vadd.f32 %v1650, %v1658
    %v1661 = vtanh.pop %v1660
    %1663 = vrot.lane.b32.xlu0 %v1661, 64
    %v1664 = vpop.permute.xlu0 %1663
    %v1666 = vmul.f32 %v1648, %v1664
    %v1667 = vmax.f32 %v1666, 0.0
    %v1668 = vpack.c.bf16 %v1108, %v1108
    %v1669 = vpack.c.bf16 %v1305, %v1305
    %1670 = vmatprep.subr.bf16.mxu0 %v672
    %1671 = vmatpush1.bf16.msra.mxu0 %v671
    %1672 = vmatprep.subr.bf16.mxu0 %v668
    %1673 = vmatpush1.bf16.msra.mxu0 %v667
    %1674 = vmatprep.subr.bf16.mxu0 %v664
    %1675 = vmatpush1.bf16.msra.mxu0 %v663
    %1676 = vmatprep.subr.bf16.mxu0 %v660
    %1677 = vmatpush1.bf16.msra.mxu0 %v659
    %1678 = vmatprep.subr.bf16.mxu0 %v656
    %1679 = vmatpush1.bf16.msra.mxu0 %v655
    %1680 = vmatprep.subr.bf16.mxu0 %v652
    %1681 = vmatpush1.bf16.msra.mxu0 %v651
    %1682 = vmatprep.subr.bf16.mxu0 %v648
    %1683 = vmatpush1.bf16.msra.mxu0 %v647
    %1684 = vmatprep.subr.bf16.mxu0 %v644
    %1685 = vmatpush1.bf16.msra.mxu0 %v643
    %1686 = vmatprep.subr.bf16.mxu0 0
    %1687 = vmatpush2.bf16.msra.mxu0 0
    %1688 = vmatprep.subr.bf16.mxu0 0
    %1689 = vmatpush2.bf16.msra.mxu0 0
    %1690 = vmatprep.subr.bf16.mxu0 0
    %1691 = vmatpush2.bf16.msra.mxu0 0
    %1692 = vmatprep.subr.bf16.mxu0 0
    %1693 = vmatpush2.bf16.msra.mxu0 0
    %1694 = vmatprep.subr.bf16.mxu0 0
    %1695 = vmatpush2.bf16.msra.mxu0 0
    %1696 = vmatprep.subr.bf16.mxu0 0
    %1697 = vmatpush2.bf16.msra.mxu0 0
    %1698 = vmatprep.subr.bf16.mxu0 0
    %1699 = vmatpush2.bf16.msra.mxu0 0
    %1700 = vmatprep.subr.bf16.mxu0 0
    %1701 = vmatpush2.bf16.msra.mxu0 0
    %1702 = vmatprep.mubr.bf16.mxu0 0
    %1703 = vmatmul.mubr.bf16.gmra.mxu0 %v1669
    %v1704 = vpop.f32.mrf.mxu0
    %v1705 = vadd.f32 0.0, %v1704
    %v1706 = vpop.f32.mrf.mxu0
    %v1707 = vadd.f32 0.0, %v1706
    %v1708 = vpop.f32.mrf.mxu0
    %v1709 = vpop.f32.mrf.mxu0
    %1710 = vdwg.mxu0
    %1711 = vmatprep.subr.bf16.mxu0 %v674
    %1712 = vmatpush1.bf16.msra.mxu0 %v673
    %1713 = vmatprep.subr.bf16.mxu0 %v670
    %1714 = vmatpush1.bf16.msra.mxu0 %v669
    %1715 = vmatprep.subr.bf16.mxu0 %v666
    %1716 = vmatpush1.bf16.msra.mxu0 %v665
    %1717 = vmatprep.subr.bf16.mxu0 %v662
    %1718 = vmatpush1.bf16.msra.mxu0 %v661
    %1719 = vmatprep.subr.bf16.mxu0 %v658
    %1720 = vmatpush1.bf16.msra.mxu0 %v657
    %1721 = vmatprep.subr.bf16.mxu0 %v654
    %1722 = vmatpush1.bf16.msra.mxu0 %v653
    %1723 = vmatprep.subr.bf16.mxu0 %v650
    %1724 = vmatpush1.bf16.msra.mxu0 %v649
    %1725 = vmatprep.subr.bf16.mxu0 %v646
    %1726 = vmatpush1.bf16.msra.mxu0 %v645
    %1727 = vmatprep.subr.bf16.mxu0 0
    %1728 = vmatpush2.bf16.msra.mxu0 0
    %1729 = vmatprep.subr.bf16.mxu0 0
    %1730 = vmatpush2.bf16.msra.mxu0 0
    %1731 = vmatprep.subr.bf16.mxu0 0
    %1732 = vmatpush2.bf16.msra.mxu0 0
    %1733 = vmatprep.subr.bf16.mxu0 0
    %1734 = vmatpush2.bf16.msra.mxu0 0
    %1735 = vmatprep.subr.bf16.mxu0 0
    %1736 = vmatpush2.bf16.msra.mxu0 0
    %1737 = vmatprep.subr.bf16.mxu0 0
    %1738 = vmatpush2.bf16.msra.mxu0 0
    %1739 = vmatprep.subr.bf16.mxu0 0
    %1740 = vmatpush2.bf16.msra.mxu0 0
    %1741 = vmatprep.subr.bf16.mxu0 0
    %1742 = vmatpush2.bf16.msra.mxu0 0
    %1743 = vmatprep.mubr.bf16.mxu0 0
    %1744 = vmatmul.mubr.bf16.gmra.mxu0 %v1669
    %v1745 = vpop.f32.mrf.mxu0
    %v1746 = vadd.f32 0.0, %v1745
    %v1747 = vpop.f32.mrf.mxu0
    %v1748 = vadd.f32 0.0, %v1747
    %v1749 = vpop.f32.mrf.mxu0
    %v1750 = vpop.f32.mrf.mxu0
    %1751 = vdwg.mxu0
    %v1753 = vsel %vm280, %v1668, 0
    %1755 = vmatprep.subr.bf16.mxu0 0
    %1756 = vmatpush1.bf16.msra.mxu0 0
    %1757 = vmatprep.subr.bf16.mxu0 0
    %1758 = vmatpush1.bf16.msra.mxu0 0
    %1759 = vmatprep.subr.bf16.mxu0 0
    %1760 = vmatpush1.bf16.msra.mxu0 0
    %1761 = vmatprep.subr.bf16.mxu0 0
    %1762 = vmatpush1.bf16.msra.mxu0 0
    %1763 = vmatprep.subr.bf16.mxu0 %v850
    %1764 = vmatpush1.bf16.msra.mxu0 %v849
    %1765 = vmatprep.subr.bf16.mxu0 %v846
    %1766 = vmatpush1.bf16.msra.mxu0 %v845
    %1767 = vmatprep.subr.bf16.mxu0 %v842
    %1768 = vmatpush1.bf16.msra.mxu0 %v841
    %1769 = vmatprep.subr.bf16.mxu0 %v838
    %1770 = vmatpush1.bf16.msra.mxu0 %v837
    %1771 = vmatprep.subr.bf16.mxu0 0
    %1772 = vmatpush2.bf16.msra.mxu0 0
    %1773 = vmatprep.subr.bf16.mxu0 0
    %1774 = vmatpush2.bf16.msra.mxu0 0
    %1775 = vmatprep.subr.bf16.mxu0 0
    %1776 = vmatpush2.bf16.msra.mxu0 0
    %1777 = vmatprep.subr.bf16.mxu0 0
    %1778 = vmatpush2.bf16.msra.mxu0 0
    %1779 = vmatprep.subr.bf16.mxu0 0
    %1780 = vmatpush2.bf16.msra.mxu0 0
    %1781 = vmatprep.subr.bf16.mxu0 0
    %1782 = vmatpush2.bf16.msra.mxu0 0
    %1783 = vmatprep.subr.bf16.mxu0 0
    %1784 = vmatpush2.bf16.msra.mxu0 0
    %1785 = vmatprep.subr.bf16.mxu0 0
    %1786 = vmatpush2.bf16.msra.mxu0 0
    %1787 = vmatprep.mubr.bf16.mxu0 0
    %1788 = vmatmul.mubr.bf16.gmra.mxu0 %v1753
    %v1789 = vpop.f32.mrf.mxu0
    %v1790 = vadd.f32 %v1705, %v1789
    %v1791 = vpop.f32.mrf.mxu0
    %v1792 = vadd.f32 %v1707, %v1791
    %v1793 = vpop.f32.mrf.mxu0
    %v1794 = vpop.f32.mrf.mxu0
    %1795 = vdwg.mxu0
    %1796 = vmatprep.subr.bf16.mxu0 0
    %1797 = vmatpush1.bf16.msra.mxu0 0
    %1798 = vmatprep.subr.bf16.mxu0 0
    %1799 = vmatpush1.bf16.msra.mxu0 0
    %1800 = vmatprep.subr.bf16.mxu0 0
    %1801 = vmatpush1.bf16.msra.mxu0 0
    %1802 = vmatprep.subr.bf16.mxu0 0
    %1803 = vmatpush1.bf16.msra.mxu0 0
    %1804 = vmatprep.subr.bf16.mxu0 %v852
    %1805 = vmatpush1.bf16.msra.mxu0 %v851
    %1806 = vmatprep.subr.bf16.mxu0 %v848
    %1807 = vmatpush1.bf16.msra.mxu0 %v847
    %1808 = vmatprep.subr.bf16.mxu0 %v844
    %1809 = vmatpush1.bf16.msra.mxu0 %v843
    %1810 = vmatprep.subr.bf16.mxu0 %v840
    %1811 = vmatpush1.bf16.msra.mxu0 %v839
    %1812 = vmatprep.subr.bf16.mxu0 0
    %1813 = vmatpush2.bf16.msra.mxu0 0
    %1814 = vmatprep.subr.bf16.mxu0 0
    %1815 = vmatpush2.bf16.msra.mxu0 0
    %1816 = vmatprep.subr.bf16.mxu0 0
    %1817 = vmatpush2.bf16.msra.mxu0 0
    %1818 = vmatprep.subr.bf16.mxu0 0
    %1819 = vmatpush2.bf16.msra.mxu0 0
    %1820 = vmatprep.subr.bf16.mxu0 0
    %1821 = vmatpush2.bf16.msra.mxu0 0
    %1822 = vmatprep.subr.bf16.mxu0 0
    %1823 = vmatpush2.bf16.msra.mxu0 0
    %1824 = vmatprep.subr.bf16.mxu0 0
    %1825 = vmatpush2.bf16.msra.mxu0 0
    %1826 = vmatprep.subr.bf16.mxu0 0
    %1827 = vmatpush2.bf16.msra.mxu0 0
    %1828 = vmatprep.mubr.bf16.mxu0 0
    %1829 = vmatmul.mubr.bf16.gmra.mxu0 %v1753
    %v1830 = vpop.f32.mrf.mxu0
    %v1831 = vadd.f32 %v1746, %v1830
    %v1832 = vpop.f32.mrf.mxu0
    %v1833 = vadd.f32 %v1748, %v1832
    %v1834 = vpop.f32.mrf.mxu0
    %v1835 = vpop.f32.mrf.mxu0
    %1836 = vdwg.mxu0
    %v1837 = vadd.f32 %v1790, %v186
    %v1838 = vadd.f32 %v1792, %v190
    %v1839 = vadd.f32 %v1831, %v194
    %v1840 = vadd.f32 %v1833, %v198
    %v1841 = vxor.u32 %v1837, 2147483648
    %v1842 = vxor.u32 %v1838, 2147483648
    %v1843 = vxor.u32 %v1839, 2147483648
    %v1844 = vmul.f32 %v1841, 1.442695
    %v1845 = vpow.pop %v1844
    %v1846 = vmul.f32 %v1842, 1.442695
    %v1847 = vpow.pop %v1846
    %v1848 = vmul.f32 %v1843, 1.442695
    %v1849 = vpow.pop %v1848
    %v1850 = vadd.f32 %v1845, 1.0
    %v1851 = vadd.f32 %v1847, 1.0
    %v1852 = vadd.f32 %v1849, 1.0
    %v1853 = vrcp.pop %v1850
    %v1854 = vmul.f32 1.0, %v1853
    %v1855 = vrcp.pop %v1851
    %v1856 = vmul.f32 1.0, %v1855
    %v1857 = vrcp.pop %v1852
    %v1858 = vmul.f32 1.0, %v1857
    %v1859 = vtanh.pop %v1840
    %v1860 = vmul.f32 %v1856, %v1303
    %v1861 = vmul.f32 %v1854, %v1859
    %v1862 = vadd.f32 %v1860, %v1861
    %v1863 = vtanh.pop %v1862
    %v1864 = vmul.f32 %v1858, %v1863
    %v1865 = vmax.f32 %v1864, 0.0
    %v1866 = vpack.c.bf16 %v1306, %v1306
    %v1867 = vpack.c.bf16 %v1541, %v1541
    %v1869 = vsel %vm280, %v1867, 0
    %1871 = vmatprep.subr.bf16.mxu0 0
    %1872 = vmatpush1.bf16.msra.mxu0 0
    %1873 = vmatprep.subr.bf16.mxu0 0
    %1874 = vmatpush1.bf16.msra.mxu0 0
    %1875 = vmatprep.subr.bf16.mxu0 0
    %1876 = vmatpush1.bf16.msra.mxu0 0
    %1877 = vmatprep.subr.bf16.mxu0 0
    %1878 = vmatpush1.bf16.msra.mxu0 0
    %1879 = vmatprep.subr.bf16.mxu0 %v1339
    %1880 = vmatpush1.bf16.msra.mxu0 %v1338
    %1881 = vmatprep.subr.bf16.mxu0 %v1337
    %1882 = vmatpush1.bf16.msra.mxu0 %v1336
    %1883 = vmatprep.subr.bf16.mxu0 %v1335
    %1884 = vmatpush1.bf16.msra.mxu0 %v1334
    %1885 = vmatprep.subr.bf16.mxu0 %v1333
    %1886 = vmatpush1.bf16.msra.mxu0 %v1332
    %1887 = vmatprep.subr.bf16.mxu0 0
    %1888 = vmatpush2.bf16.msra.mxu0 0
    %1889 = vmatprep.subr.bf16.mxu0 0
    %1890 = vmatpush2.bf16.msra.mxu0 0
    %1891 = vmatprep.subr.bf16.mxu0 0
    %1892 = vmatpush2.bf16.msra.mxu0 0
    %1893 = vmatprep.subr.bf16.mxu0 0
    %1894 = vmatpush2.bf16.msra.mxu0 0
    %1895 = vmatprep.subr.bf16.mxu0 0
    %1896 = vmatpush2.bf16.msra.mxu0 0
    %1897 = vmatprep.subr.bf16.mxu0 0
    %1898 = vmatpush2.bf16.msra.mxu0 0
    %1899 = vmatprep.subr.bf16.mxu0 0
    %1900 = vmatpush2.bf16.msra.mxu0 0
    %1901 = vmatprep.subr.bf16.mxu0 0
    %1902 = vmatpush2.bf16.msra.mxu0 0
    %1903 = vmatprep.mubr.bf16.mxu0 0
    %1904 = vmatmul.mubr.bf16.gmra.mxu0 %v1869
    %v1905 = vpop.f32.mrf.mxu0
    %v1906 = vadd.f32 0.0, %v1905
    %v1907 = vpop.f32.mrf.mxu0
    %v1908 = vadd.f32 0.0, %v1907
    %v1909 = vpop.f32.mrf.mxu0
    %v1910 = vpop.f32.mrf.mxu0
    %1911 = vdwg.mxu0
    %1912 = vmatprep.subr.bf16.mxu0 %v1452
    %1913 = vmatpush1.bf16.msra.mxu0 %v1451
    %1914 = vmatprep.subr.bf16.mxu0 %v1450
    %1915 = vmatpush1.bf16.msra.mxu0 %v1449
    %1916 = vmatprep.subr.bf16.mxu0 %v1448
    %1917 = vmatpush1.bf16.msra.mxu0 %v1447
    %1918 = vmatprep.subr.bf16.mxu0 %v1446
    %1919 = vmatpush1.bf16.msra.mxu0 %v1445
    %1920 = vmatprep.subr.bf16.mxu0 %v1444
    %1921 = vmatpush1.bf16.msra.mxu0 %v1443
    %1922 = vmatprep.subr.bf16.mxu0 %v1442
    %1923 = vmatpush1.bf16.msra.mxu0 %v1441
    %1924 = vmatprep.subr.bf16.mxu0 %v1440
    %1925 = vmatpush1.bf16.msra.mxu0 %v1439
    %1926 = vmatprep.subr.bf16.mxu0 %v1438
    %1927 = vmatpush1.bf16.msra.mxu0 %v1437
    %1928 = vmatprep.subr.bf16.mxu0 0
    %1929 = vmatpush2.bf16.msra.mxu0 0
    %1930 = vmatprep.subr.bf16.mxu0 0
    %1931 = vmatpush2.bf16.msra.mxu0 0
    %1932 = vmatprep.subr.bf16.mxu0 0
    %1933 = vmatpush2.bf16.msra.mxu0 0
    %1934 = vmatprep.subr.bf16.mxu0 0
    %1935 = vmatpush2.bf16.msra.mxu0 0
    %1936 = vmatprep.subr.bf16.mxu0 0
    %1937 = vmatpush2.bf16.msra.mxu0 0
    %1938 = vmatprep.subr.bf16.mxu0 0
    %1939 = vmatpush2.bf16.msra.mxu0 0
    %1940 = vmatprep.subr.bf16.mxu0 0
    %1941 = vmatpush2.bf16.msra.mxu0 0
    %1942 = vmatprep.subr.bf16.mxu0 0
    %1943 = vmatpush2.bf16.msra.mxu0 0
    %1944 = vmatprep.mubr.bf16.mxu0 0
    %1945 = vmatmul.mubr.bf16.gmra.mxu0 %v1866
    %v1946 = vpop.f32.mrf.mxu0
    %v1947 = vadd.f32 %v1906, %v1946
    %v1948 = vpop.f32.mrf.mxu0
    %v1949 = vadd.f32 %v1908, %v1948
    %v1950 = vpop.f32.mrf.mxu0
    %v1951 = vpop.f32.mrf.mxu0
    %1952 = vdwg.mxu0
    %v1953 = vadd.f32 %v1947, %v208
    %v1954 = vadd.f32 %v1949, %v212
    %v1955 = vxor.u32 %v1953, 2147483648
    %v1956 = vxor.u32 %v1954, 2147483648
    %v1957 = vmul.f32 %v1955, 1.442695
    %v1958 = vpow.pop %v1957
    %v1959 = vmul.f32 %v1956, 1.442695
    %v1960 = vpow.pop %v1959
    %v1961 = vadd.f32 %v1958, 1.0
    %v1962 = vadd.f32 %v1960, 1.0
    %v1963 = vrcp.pop %v1961
    %v1964 = vmul.f32 1.0, %v1963
    %v1965 = vrcp.pop %v1962
    %v1966 = vmul.f32 1.0, %v1965
    %v1967 = vtanh.pop %v1954
    %v1968 = vmul.f32 %v1964, %v1535
    %1970 = vrot.lane.b32.xlu0 %v1967, 64
    %v1971 = vpop.permute.xlu0 %1970
    %v1973 = vmul.f32 %v1964, %v1971
    %1975 = vrot.lane.b32.xlu0 %v1973, 64
    %v1976 = vpop.permute.xlu0 %1975
    %v1978 = vadd.f32 %v1968, %v1976
    %v1979 = vtanh.pop %v1978
    %1981 = vrot.lane.b32.xlu0 %v1979, 64
    %v1982 = vpop.permute.xlu0 %1981
    %v1984 = vmul.f32 %v1966, %v1982
    %v1985 = vpack.c.bf16 %v1666, %v1666
    %v1987 = vsel %vm280, %v1985, 0
    %1989 = vmatprep.subr.bf16.mxu0 0
    %1990 = vmatpush1.bf16.msra.mxu0 0
    %1991 = vmatprep.subr.bf16.mxu0 0
    %1992 = vmatpush1.bf16.msra.mxu0 0
    %1993 = vmatprep.subr.bf16.mxu0 0
    %1994 = vmatpush1.bf16.msra.mxu0 0
    %1995 = vmatprep.subr.bf16.mxu0 0
    %1996 = vmatpush1.bf16.msra.mxu0 0
    %1997 = vmatprep.subr.bf16.mxu0 %v271
    %1998 = vmatpush1.bf16.msra.mxu0 %v270
    %1999 = vmatprep.subr.bf16.mxu0 %v269
    %2000 = vmatpush1.bf16.msra.mxu0 %v268
    %2001 = vmatprep.subr.bf16.mxu0 %v267
    %2002 = vmatpush1.bf16.msra.mxu0 %v266
    %2003 = vmatprep.subr.bf16.mxu0 %v265
    %2004 = vmatpush1.bf16.msra.mxu0 %v264
    %2005 = vmatprep.subr.bf16.mxu0 0
    %2006 = vmatpush2.bf16.msra.mxu0 0
    %2007 = vmatprep.subr.bf16.mxu0 0
    %2008 = vmatpush2.bf16.msra.mxu0 0
    %2009 = vmatprep.subr.bf16.mxu0 0
    %2010 = vmatpush2.bf16.msra.mxu0 0
    %2011 = vmatprep.subr.bf16.mxu0 0
    %2012 = vmatpush2.bf16.msra.mxu0 0
    %2013 = vmatprep.subr.bf16.mxu0 0
    %2014 = vmatpush2.bf16.msra.mxu0 0
    %2015 = vmatprep.subr.bf16.mxu0 0
    %2016 = vmatpush2.bf16.msra.mxu0 0
    %2017 = vmatprep.subr.bf16.mxu0 0
    %2018 = vmatpush2.bf16.msra.mxu0 0
    %2019 = vmatprep.subr.bf16.mxu0 0
    %2020 = vmatpush2.bf16.msra.mxu0 0
    %2021 = vmatprep.mubr.bf16.mxu0 0
    %2022 = vmatmul.mubr.bf16.gmra.mxu0 %v1987
    %v2023 = vpop.f32.mrf.mxu0
    %v2024 = vadd.f32 0.0, %v2023
    %v2025 = vpop.f32.mrf.mxu0
    %v2026 = vadd.f32 0.0, %v2025
    %v2027 = vpop.f32.mrf.mxu0
    %v2028 = vpop.f32.mrf.mxu0
    %2029 = vdwg.mxu0
    %v2030 = vrot.slane %v327, 4
    %v2031 = vrot.slane %v328, 3
    %v2032 = vsel %vm330, %v2031, %v2030
    %v2033 = vpack.c.b16 %v2032, %v2032
    %v2035 = vsel %vm343, %v2033, 0
    %2037 = vmatprep.subr.bf16.mxu0 0
    %2038 = vmatpush1.bf16.msra.mxu0 0
    %2039 = vmatprep.subr.bf16.mxu0 0
    %2040 = vmatpush1.bf16.msra.mxu0 0
    %2041 = vmatprep.subr.bf16.mxu0 0
    %2042 = vmatpush1.bf16.msra.mxu0 0
    %2043 = vmatprep.subr.bf16.mxu0 0
    %2044 = vmatpush1.bf16.msra.mxu0 0
    %2045 = vmatprep.subr.bf16.mxu0 0
    %2046 = vmatpush1.bf16.msra.mxu0 0
    %2047 = vmatprep.subr.bf16.mxu0 0
    %2048 = vmatpush1.bf16.msra.mxu0 0
    %2049 = vmatprep.subr.bf16.mxu0 0
    %2050 = vmatpush1.bf16.msra.mxu0 0
    %2051 = vmatprep.subr.bf16.mxu0 %v340
    %2052 = vmatpush1.bf16.msra.mxu0 %v339
    %2053 = vmatprep.subr.bf16.mxu0 0
    %2054 = vmatpush2.bf16.msra.mxu0 0
    %2055 = vmatprep.subr.bf16.mxu0 0
    %2056 = vmatpush2.bf16.msra.mxu0 0
    %2057 = vmatprep.subr.bf16.mxu0 0
    %2058 = vmatpush2.bf16.msra.mxu0 0
    %2059 = vmatprep.subr.bf16.mxu0 0
    %2060 = vmatpush2.bf16.msra.mxu0 0
    %2061 = vmatprep.subr.bf16.mxu0 0
    %2062 = vmatpush2.bf16.msra.mxu0 0
    %2063 = vmatprep.subr.bf16.mxu0 0
    %2064 = vmatpush2.bf16.msra.mxu0 0
    %2065 = vmatprep.subr.bf16.mxu0 0
    %2066 = vmatpush2.bf16.msra.mxu0 0
    %2067 = vmatprep.subr.bf16.mxu0 0
    %2068 = vmatpush2.bf16.msra.mxu0 0
    %2069 = vmatprep.mubr.bf16.mxu0 0
    %2070 = vmatmul.mubr.bf16.gmra.mxu0 %v2035
    %v2071 = vpop.f32.mrf.mxu0
    %v2072 = vadd.f32 %v2024, %v2071
    %v2073 = vpop.f32.mrf.mxu0
    %v2074 = vadd.f32 %v2026, %v2073
    %v2075 = vpop.f32.mrf.mxu0
    %v2076 = vpop.f32.mrf.mxu0
    %2077 = vdwg.mxu0
    %v2078 = vadd.f32 %v2072, %v174
    %v2079 = vadd.f32 %v2074, %v178
    %v2080 = vxor.u32 %v2078, 2147483648
    %v2081 = vxor.u32 %v2079, 2147483648
    %v2082 = vmul.f32 %v2080, 1.442695
    %v2083 = vpow.pop %v2082
    %v2084 = vmul.f32 %v2081, 1.442695
    %v2085 = vpow.pop %v2084
    %v2086 = vadd.f32 %v2083, 1.0
    %v2087 = vadd.f32 %v2085, 1.0
    %v2088 = vrcp.pop %v2086
    %v2089 = vmul.f32 1.0, %v2088
    %v2090 = vrcp.pop %v2087
    %v2091 = vmul.f32 1.0, %v2090
    %v2092 = vtanh.pop %v2079
    %v2093 = vmul.f32 %v2089, %v1660
    %2095 = vrot.lane.b32.xlu0 %v2092, 64
    %v2096 = vpop.permute.xlu0 %2095
    %v2098 = vmul.f32 %v2089, %v2096
    %2100 = vrot.lane.b32.xlu0 %v2098, 64
    %v2101 = vpop.permute.xlu0 %2100
    %v2103 = vadd.f32 %v2093, %v2101
    %v2104 = vtanh.pop %v2103
    %2106 = vrot.lane.b32.xlu0 %v2104, 64
    %v2107 = vpop.permute.xlu0 %2106
    %v2109 = vmul.f32 %v2091, %v2107
    %v2110 = vmax.f32 %v2109, 0.0
    %v2111 = vpack.c.bf16 %v1667, %v1667
    %v2112 = vpack.c.bf16 %v1864, %v1864
    %2113 = vmatprep.subr.bf16.mxu0 %v672
    %2114 = vmatpush1.bf16.msra.mxu0 %v671
    %2115 = vmatprep.subr.bf16.mxu0 %v668
    %2116 = vmatpush1.bf16.msra.mxu0 %v667
    %2117 = vmatprep.subr.bf16.mxu0 %v664
    %2118 = vmatpush1.bf16.msra.mxu0 %v663
    %2119 = vmatprep.subr.bf16.mxu0 %v660
    %2120 = vmatpush1.bf16.msra.mxu0 %v659
    %2121 = vmatprep.subr.bf16.mxu0 %v656
    %2122 = vmatpush1.bf16.msra.mxu0 %v655
    %2123 = vmatprep.subr.bf16.mxu0 %v652
    %2124 = vmatpush1.bf16.msra.mxu0 %v651
    %2125 = vmatprep.subr.bf16.mxu0 %v648
    %2126 = vmatpush1.bf16.msra.mxu0 %v647
    %2127 = vmatprep.subr.bf16.mxu0 %v644
    %2128 = vmatpush1.bf16.msra.mxu0 %v643
    %2129 = vmatprep.subr.bf16.mxu0 0
    %2130 = vmatpush2.bf16.msra.mxu0 0
    %2131 = vmatprep.subr.bf16.mxu0 0
    %2132 = vmatpush2.bf16.msra.mxu0 0
    %2133 = vmatprep.subr.bf16.mxu0 0
    %2134 = vmatpush2.bf16.msra.mxu0 0
    %2135 = vmatprep.subr.bf16.mxu0 0
    %2136 = vmatpush2.bf16.msra.mxu0 0
    %2137 = vmatprep.subr.bf16.mxu0 0
    %2138 = vmatpush2.bf16.msra.mxu0 0
    %2139 = vmatprep.subr.bf16.mxu0 0
    %2140 = vmatpush2.bf16.msra.mxu0 0
    %2141 = vmatprep.subr.bf16.mxu0 0
    %2142 = vmatpush2.bf16.msra.mxu0 0
    %2143 = vmatprep.subr.bf16.mxu0 0
    %2144 = vmatpush2.bf16.msra.mxu0 0
    %2145 = vmatprep.mubr.bf16.mxu0 0
    %2146 = vmatmul.mubr.bf16.gmra.mxu0 %v2112
    %v2147 = vpop.f32.mrf.mxu0
    %v2148 = vadd.f32 0.0, %v2147
    %v2149 = vpop.f32.mrf.mxu0
    %v2150 = vadd.f32 0.0, %v2149
    %v2151 = vpop.f32.mrf.mxu0
    %v2152 = vpop.f32.mrf.mxu0
    %2153 = vdwg.mxu0
    %2154 = vmatprep.subr.bf16.mxu0 %v674
    %2155 = vmatpush1.bf16.msra.mxu0 %v673
    %2156 = vmatprep.subr.bf16.mxu0 %v670
    %2157 = vmatpush1.bf16.msra.mxu0 %v669
    %2158 = vmatprep.subr.bf16.mxu0 %v666
    %2159 = vmatpush1.bf16.msra.mxu0 %v665
    %2160 = vmatprep.subr.bf16.mxu0 %v662
    %2161 = vmatpush1.bf16.msra.mxu0 %v661
    %2162 = vmatprep.subr.bf16.mxu0 %v658
    %2163 = vmatpush1.bf16.msra.mxu0 %v657
    %2164 = vmatprep.subr.bf16.mxu0 %v654
    %2165 = vmatpush1.bf16.msra.mxu0 %v653
    %2166 = vmatprep.subr.bf16.mxu0 %v650
    %2167 = vmatpush1.bf16.msra.mxu0 %v649
    %2168 = vmatprep.subr.bf16.mxu0 %v646
    %2169 = vmatpush1.bf16.msra.mxu0 %v645
    %2170 = vmatprep.subr.bf16.mxu0 0
    %2171 = vmatpush2.bf16.msra.mxu0 0
    %2172 = vmatprep.subr.bf16.mxu0 0
    %2173 = vmatpush2.bf16.msra.mxu0 0
    %2174 = vmatprep.subr.bf16.mxu0 0
    %2175 = vmatpush2.bf16.msra.mxu0 0
    %2176 = vmatprep.subr.bf16.mxu0 0
    %2177 = vmatpush2.bf16.msra.mxu0 0
    %2178 = vmatprep.subr.bf16.mxu0 0
    %2179 = vmatpush2.bf16.msra.mxu0 0
    %2180 = vmatprep.subr.bf16.mxu0 0
    %2181 = vmatpush2.bf16.msra.mxu0 0
    %2182 = vmatprep.subr.bf16.mxu0 0
    %2183 = vmatpush2.bf16.msra.mxu0 0
    %2184 = vmatprep.subr.bf16.mxu0 0
    %2185 = vmatpush2.bf16.msra.mxu0 0
    %2186 = vmatprep.mubr.bf16.mxu0 0
    %2187 = vmatmul.mubr.bf16.gmra.mxu0 %v2112
    %v2188 = vpop.f32.mrf.mxu0
    %v2189 = vadd.f32 0.0, %v2188
    %v2190 = vpop.f32.mrf.mxu0
    %v2191 = vadd.f32 0.0, %v2190
    %v2192 = vpop.f32.mrf.mxu0
    %v2193 = vpop.f32.mrf.mxu0
    %2194 = vdwg.mxu0
    %v2196 = vsel %vm280, %v2111, 0
    %2198 = vmatprep.subr.bf16.mxu0 0
    %2199 = vmatpush1.bf16.msra.mxu0 0
    %2200 = vmatprep.subr.bf16.mxu0 0
    %2201 = vmatpush1.bf16.msra.mxu0 0
    %2202 = vmatprep.subr.bf16.mxu0 0
    %2203 = vmatpush1.bf16.msra.mxu0 0
    %2204 = vmatprep.subr.bf16.mxu0 0
    %2205 = vmatpush1.bf16.msra.mxu0 0
    %2206 = vmatprep.subr.bf16.mxu0 %v850
    %2207 = vmatpush1.bf16.msra.mxu0 %v849
    %2208 = vmatprep.subr.bf16.mxu0 %v846
    %2209 = vmatpush1.bf16.msra.mxu0 %v845
    %2210 = vmatprep.subr.bf16.mxu0 %v842
    %2211 = vmatpush1.bf16.msra.mxu0 %v841
    %2212 = vmatprep.subr.bf16.mxu0 %v838
    %2213 = vmatpush1.bf16.msra.mxu0 %v837
    %2214 = vmatprep.subr.bf16.mxu0 0
    %2215 = vmatpush2.bf16.msra.mxu0 0
    %2216 = vmatprep.subr.bf16.mxu0 0
    %2217 = vmatpush2.bf16.msra.mxu0 0
    %2218 = vmatprep.subr.bf16.mxu0 0
    %2219 = vmatpush2.bf16.msra.mxu0 0
    %2220 = vmatprep.subr.bf16.mxu0 0
    %2221 = vmatpush2.bf16.msra.mxu0 0
    %2222 = vmatprep.subr.bf16.mxu0 0
    %2223 = vmatpush2.bf16.msra.mxu0 0
    %2224 = vmatprep.subr.bf16.mxu0 0
    %2225 = vmatpush2.bf16.msra.mxu0 0
    %2226 = vmatprep.subr.bf16.mxu0 0
    %2227 = vmatpush2.bf16.msra.mxu0 0
    %2228 = vmatprep.subr.bf16.mxu0 0
    %2229 = vmatpush2.bf16.msra.mxu0 0
    %2230 = vmatprep.mubr.bf16.mxu0 0
    %2231 = vmatmul.mubr.bf16.gmra.mxu0 %v2196
    %v2232 = vpop.f32.mrf.mxu0
    %v2233 = vadd.f32 %v2148, %v2232
    %v2234 = vpop.f32.mrf.mxu0
    %v2235 = vadd.f32 %v2150, %v2234
    %v2236 = vpop.f32.mrf.mxu0
    %v2237 = vpop.f32.mrf.mxu0
    %2238 = vdwg.mxu0
    %2239 = vmatprep.subr.bf16.mxu0 0
    %2240 = vmatpush1.bf16.msra.mxu0 0
    %2241 = vmatprep.subr.bf16.mxu0 0
    %2242 = vmatpush1.bf16.msra.mxu0 0
    %2243 = vmatprep.subr.bf16.mxu0 0
    %2244 = vmatpush1.bf16.msra.mxu0 0
    %2245 = vmatprep.subr.bf16.mxu0 0
    %2246 = vmatpush1.bf16.msra.mxu0 0
    %2247 = vmatprep.subr.bf16.mxu0 %v852
    %2248 = vmatpush1.bf16.msra.mxu0 %v851
    %2249 = vmatprep.subr.bf16.mxu0 %v848
    %2250 = vmatpush1.bf16.msra.mxu0 %v847
    %2251 = vmatprep.subr.bf16.mxu0 %v844
    %2252 = vmatpush1.bf16.msra.mxu0 %v843
    %2253 = vmatprep.subr.bf16.mxu0 %v840
    %2254 = vmatpush1.bf16.msra.mxu0 %v839
    %2255 = vmatprep.subr.bf16.mxu0 0
    %2256 = vmatpush2.bf16.msra.mxu0 0
    %2257 = vmatprep.subr.bf16.mxu0 0
    %2258 = vmatpush2.bf16.msra.mxu0 0
    %2259 = vmatprep.subr.bf16.mxu0 0
    %2260 = vmatpush2.bf16.msra.mxu0 0
    %2261 = vmatprep.subr.bf16.mxu0 0
    %2262 = vmatpush2.bf16.msra.mxu0 0
    %2263 = vmatprep.subr.bf16.mxu0 0
    %2264 = vmatpush2.bf16.msra.mxu0 0
    %2265 = vmatprep.subr.bf16.mxu0 0
    %2266 = vmatpush2.bf16.msra.mxu0 0
    %2267 = vmatprep.subr.bf16.mxu0 0
    %2268 = vmatpush2.bf16.msra.mxu0 0
    %2269 = vmatprep.subr.bf16.mxu0 0
    %2270 = vmatpush2.bf16.msra.mxu0 0
    %2271 = vmatprep.mubr.bf16.mxu0 0
    %2272 = vmatmul.mubr.bf16.gmra.mxu0 %v2196
    %v2273 = vpop.f32.mrf.mxu0
    %v2274 = vadd.f32 %v2189, %v2273
    %v2275 = vpop.f32.mrf.mxu0
    %v2276 = vadd.f32 %v2191, %v2275
    %v2277 = vpop.f32.mrf.mxu0
    %v2278 = vpop.f32.mrf.mxu0
    %2279 = vdwg.mxu0
    %v2280 = vadd.f32 %v2233, %v186
    %v2281 = vadd.f32 %v2235, %v190
    %v2282 = vadd.f32 %v2274, %v194
    %v2283 = vadd.f32 %v2276, %v198
    %v2284 = vxor.u32 %v2280, 2147483648
    %v2285 = vxor.u32 %v2281, 2147483648
    %v2286 = vxor.u32 %v2282, 2147483648
    %v2287 = vmul.f32 %v2284, 1.442695
    %v2288 = vpow.pop %v2287
    %v2289 = vmul.f32 %v2285, 1.442695
    %v2290 = vpow.pop %v2289
    %v2291 = vmul.f32 %v2286, 1.442695
    %v2292 = vpow.pop %v2291
    %v2293 = vadd.f32 %v2288, 1.0
    %v2294 = vadd.f32 %v2290, 1.0
    %v2295 = vadd.f32 %v2292, 1.0
    %v2296 = vrcp.pop %v2293
    %v2297 = vmul.f32 1.0, %v2296
    %v2298 = vrcp.pop %v2294
    %v2299 = vmul.f32 1.0, %v2298
    %v2300 = vrcp.pop %v2295
    %v2301 = vmul.f32 1.0, %v2300
    %v2302 = vtanh.pop %v2283
    %v2303 = vmul.f32 %v2299, %v1862
    %v2304 = vmul.f32 %v2297, %v2302
    %v2305 = vadd.f32 %v2303, %v2304
    %v2306 = vtanh.pop %v2305
    %v2307 = vmul.f32 %v2301, %v2306
    %v2308 = vmax.f32 %v2307, 0.0
    %v2309 = vpack.c.bf16 %v1865, %v1865
    %v2310 = vpack.c.bf16 %v1984, %v1984
    %v2312 = vsel %vm280, %v2310, 0
    %2314 = vmatprep.subr.bf16.mxu0 0
    %2315 = vmatpush1.bf16.msra.mxu0 0
    %2316 = vmatprep.subr.bf16.mxu0 0
    %2317 = vmatpush1.bf16.msra.mxu0 0
    %2318 = vmatprep.subr.bf16.mxu0 0
    %2319 = vmatpush1.bf16.msra.mxu0 0
    %2320 = vmatprep.subr.bf16.mxu0 0
    %2321 = vmatpush1.bf16.msra.mxu0 0
    %2322 = vmatprep.subr.bf16.mxu0 %v1339
    %2323 = vmatpush1.bf16.msra.mxu0 %v1338
    %2324 = vmatprep.subr.bf16.mxu0 %v1337
    %2325 = vmatpush1.bf16.msra.mxu0 %v1336
    %2326 = vmatprep.subr.bf16.mxu0 %v1335
    %2327 = vmatpush1.bf16.msra.mxu0 %v1334
    %2328 = vmatprep.subr.bf16.mxu0 %v1333
    %2329 = vmatpush1.bf16.msra.mxu0 %v1332
    %2330 = vmatprep.subr.bf16.mxu0 0
    %2331 = vmatpush2.bf16.msra.mxu0 0
    %2332 = vmatprep.subr.bf16.mxu0 0
    %2333 = vmatpush2.bf16.msra.mxu0 0
    %2334 = vmatprep.subr.bf16.mxu0 0
    %2335 = vmatpush2.bf16.msra.mxu0 0
    %2336 = vmatprep.subr.bf16.mxu0 0
    %2337 = vmatpush2.bf16.msra.mxu0 0
    %2338 = vmatprep.subr.bf16.mxu0 0
    %2339 = vmatpush2.bf16.msra.mxu0 0
    %2340 = vmatprep.subr.bf16.mxu0 0
    %2341 = vmatpush2.bf16.msra.mxu0 0
    %2342 = vmatprep.subr.bf16.mxu0 0
    %2343 = vmatpush2.bf16.msra.mxu0 0
    %2344 = vmatprep.subr.bf16.mxu0 0
    %2345 = vmatpush2.bf16.msra.mxu0 0
    %2346 = vmatprep.mubr.bf16.mxu0 0
    %2347 = vmatmul.mubr.bf16.gmra.mxu0 %v2312
    %v2348 = vpop.f32.mrf.mxu0
    %v2349 = vadd.f32 0.0, %v2348
    %v2350 = vpop.f32.mrf.mxu0
    %v2351 = vadd.f32 0.0, %v2350
    %v2352 = vpop.f32.mrf.mxu0
    %v2353 = vpop.f32.mrf.mxu0
    %2354 = vdwg.mxu0
    %2355 = vmatprep.subr.bf16.mxu0 %v1452
    %2356 = vmatpush1.bf16.msra.mxu0 %v1451
    %2357 = vmatprep.subr.bf16.mxu0 %v1450
    %2358 = vmatpush1.bf16.msra.mxu0 %v1449
    %2359 = vmatprep.subr.bf16.mxu0 %v1448
    %2360 = vmatpush1.bf16.msra.mxu0 %v1447
    %2361 = vmatprep.subr.bf16.mxu0 %v1446
    %2362 = vmatpush1.bf16.msra.mxu0 %v1445
    %2363 = vmatprep.subr.bf16.mxu0 %v1444
    %2364 = vmatpush1.bf16.msra.mxu0 %v1443
    %2365 = vmatprep.subr.bf16.mxu0 %v1442
    %2366 = vmatpush1.bf16.msra.mxu0 %v1441
    %2367 = vmatprep.subr.bf16.mxu0 %v1440
    %2368 = vmatpush1.bf16.msra.mxu0 %v1439
    %2369 = vmatprep.subr.bf16.mxu0 %v1438
    %2370 = vmatpush1.bf16.msra.mxu0 %v1437
    %2371 = vmatprep.subr.bf16.mxu0 0
    %2372 = vmatpush2.bf16.msra.mxu0 0
    %2373 = vmatprep.subr.bf16.mxu0 0
    %2374 = vmatpush2.bf16.msra.mxu0 0
    %2375 = vmatprep.subr.bf16.mxu0 0
    %2376 = vmatpush2.bf16.msra.mxu0 0
    %2377 = vmatprep.subr.bf16.mxu0 0
    %2378 = vmatpush2.bf16.msra.mxu0 0
    %2379 = vmatprep.subr.bf16.mxu0 0
    %2380 = vmatpush2.bf16.msra.mxu0 0
    %2381 = vmatprep.subr.bf16.mxu0 0
    %2382 = vmatpush2.bf16.msra.mxu0 0
    %2383 = vmatprep.subr.bf16.mxu0 0
    %2384 = vmatpush2.bf16.msra.mxu0 0
    %2385 = vmatprep.subr.bf16.mxu0 0
    %2386 = vmatpush2.bf16.msra.mxu0 0
    %2387 = vmatprep.mubr.bf16.mxu0 0
    %2388 = vmatmul.mubr.bf16.gmra.mxu0 %v2309
    %v2389 = vpop.f32.mrf.mxu0
    %v2390 = vadd.f32 %v2349, %v2389
    %v2391 = vpop.f32.mrf.mxu0
    %v2392 = vadd.f32 %v2351, %v2391
    %v2393 = vpop.f32.mrf.mxu0
    %v2394 = vpop.f32.mrf.mxu0
    %2395 = vdwg.mxu0
    %v2396 = vadd.f32 %v2390, %v208
    %v2397 = vadd.f32 %v2392, %v212
    %v2398 = vxor.u32 %v2396, 2147483648
    %v2399 = vxor.u32 %v2397, 2147483648
    %v2400 = vmul.f32 %v2398, 1.442695
    %v2401 = vpow.pop %v2400
    %v2402 = vmul.f32 %v2399, 1.442695
    %v2403 = vpow.pop %v2402
    %v2404 = vadd.f32 %v2401, 1.0
    %v2405 = vadd.f32 %v2403, 1.0
    %v2406 = vrcp.pop %v2404
    %v2407 = vmul.f32 1.0, %v2406
    %v2408 = vrcp.pop %v2405
    %v2409 = vmul.f32 1.0, %v2408
    %v2410 = vtanh.pop %v2397
    %v2411 = vmul.f32 %v2407, %v1978
    %2413 = vrot.lane.b32.xlu0 %v2410, 64
    %v2414 = vpop.permute.xlu0 %2413
    %v2416 = vmul.f32 %v2407, %v2414
    %2418 = vrot.lane.b32.xlu0 %v2416, 64
    %v2419 = vpop.permute.xlu0 %2418
    %v2421 = vadd.f32 %v2411, %v2419
    %v2422 = vtanh.pop %v2421
    %2424 = vrot.lane.b32.xlu0 %v2422, 64
    %v2425 = vpop.permute.xlu0 %2424
    %v2427 = vmul.f32 %v2409, %v2425
    %v2428 = vpack.c.bf16 %v2109, %v2109
    %v2430 = vsel %vm280, %v2428, 0
    %2432 = vmatprep.subr.bf16.mxu0 0
    %2433 = vmatpush1.bf16.msra.mxu0 0
    %2434 = vmatprep.subr.bf16.mxu0 0
    %2435 = vmatpush1.bf16.msra.mxu0 0
    %2436 = vmatprep.subr.bf16.mxu0 0
    %2437 = vmatpush1.bf16.msra.mxu0 0
    %2438 = vmatprep.subr.bf16.mxu0 0
    %2439 = vmatpush1.bf16.msra.mxu0 0
    %2440 = vmatprep.subr.bf16.mxu0 %v271
    %2441 = vmatpush1.bf16.msra.mxu0 %v270
    %2442 = vmatprep.subr.bf16.mxu0 %v269
    %2443 = vmatpush1.bf16.msra.mxu0 %v268
    %2444 = vmatprep.subr.bf16.mxu0 %v267
    %2445 = vmatpush1.bf16.msra.mxu0 %v266
    %2446 = vmatprep.subr.bf16.mxu0 %v265
    %2447 = vmatpush1.bf16.msra.mxu0 %v264
    %2448 = vmatprep.subr.bf16.mxu0 0
    %2449 = vmatpush2.bf16.msra.mxu0 0
    %2450 = vmatprep.subr.bf16.mxu0 0
    %2451 = vmatpush2.bf16.msra.mxu0 0
    %2452 = vmatprep.subr.bf16.mxu0 0
    %2453 = vmatpush2.bf16.msra.mxu0 0
    %2454 = vmatprep.subr.bf16.mxu0 0
    %2455 = vmatpush2.bf16.msra.mxu0 0
    %2456 = vmatprep.subr.bf16.mxu0 0
    %2457 = vmatpush2.bf16.msra.mxu0 0
    %2458 = vmatprep.subr.bf16.mxu0 0
    %2459 = vmatpush2.bf16.msra.mxu0 0
    %2460 = vmatprep.subr.bf16.mxu0 0
    %2461 = vmatpush2.bf16.msra.mxu0 0
    %2462 = vmatprep.subr.bf16.mxu0 0
    %2463 = vmatpush2.bf16.msra.mxu0 0
    %2464 = vmatprep.mubr.bf16.mxu0 0
    %2465 = vmatmul.mubr.bf16.gmra.mxu0 %v2430
    %v2466 = vpop.f32.mrf.mxu0
    %v2467 = vadd.f32 0.0, %v2466
    %v2468 = vpop.f32.mrf.mxu0
    %v2469 = vadd.f32 0.0, %v2468
    %v2470 = vpop.f32.mrf.mxu0
    %v2471 = vpop.f32.mrf.mxu0
    %2472 = vdwg.mxu0
    %v2473 = vrot.slane %v327, 5
    %v2474 = vrot.slane %v328, 4
    %v2475 = vsel %vm330, %v2474, %v2473
    %v2476 = vpack.c.b16 %v2475, %v2475
    %v2478 = vsel %vm343, %v2476, 0
    %2480 = vmatprep.subr.bf16.mxu0 0
    %2481 = vmatpush1.bf16.msra.mxu0 0
    %2482 = vmatprep.subr.bf16.mxu0 0
    %2483 = vmatpush1.bf16.msra.mxu0 0
    %2484 = vmatprep.subr.bf16.mxu0 0
    %2485 = vmatpush1.bf16.msra.mxu0 0
    %2486 = vmatprep.subr.bf16.mxu0 0
    %2487 = vmatpush1.bf16.msra.mxu0 0
    %2488 = vmatprep.subr.bf16.mxu0 0
    %2489 = vmatpush1.bf16.msra.mxu0 0
    %2490 = vmatprep.subr.bf16.mxu0 0
    %2491 = vmatpush1.bf16.msra.mxu0 0
    %2492 = vmatprep.subr.bf16.mxu0 0
    %2493 = vmatpush1.bf16.msra.mxu0 0
    %2494 = vmatprep.subr.bf16.mxu0 %v340
    %2495 = vmatpush1.bf16.msra.mxu0 %v339
    %2496 = vmatprep.subr.bf16.mxu0 0
    %2497 = vmatpush2.bf16.msra.mxu0 0
    %2498 = vmatprep.subr.bf16.mxu0 0
    %2499 = vmatpush2.bf16.msra.mxu0 0
    %2500 = vmatprep.subr.bf16.mxu0 0
    %2501 = vmatpush2.bf16.msra.mxu0 0
    %2502 = vmatprep.subr.bf16.mxu0 0
    %2503 = vmatpush2.bf16.msra.mxu0 0
    %2504 = vmatprep.subr.bf16.mxu0 0
    %2505 = vmatpush2.bf16.msra.mxu0 0
    %2506 = vmatprep.subr.bf16.mxu0 0
    %2507 = vmatpush2.bf16.msra.mxu0 0
    %2508 = vmatprep.subr.bf16.mxu0 0
    %2509 = vmatpush2.bf16.msra.mxu0 0
    %2510 = vmatprep.subr.bf16.mxu0 0
    %2511 = vmatpush2.bf16.msra.mxu0 0
    %2512 = vmatprep.mubr.bf16.mxu0 0
    %2513 = vmatmul.mubr.bf16.gmra.mxu0 %v2478
    %v2514 = vpop.f32.mrf.mxu0
    %v2515 = vadd.f32 %v2467, %v2514
    %v2516 = vpop.f32.mrf.mxu0
    %v2517 = vadd.f32 %v2469, %v2516
    %v2518 = vpop.f32.mrf.mxu0
    %v2519 = vpop.f32.mrf.mxu0
    %2520 = vdwg.mxu0
    %v2521 = vadd.f32 %v2515, %v174
    %v2522 = vadd.f32 %v2517, %v178
    %v2523 = vxor.u32 %v2521, 2147483648
    %v2524 = vxor.u32 %v2522, 2147483648
    %v2525 = vmul.f32 %v2523, 1.442695
    %v2526 = vpow.pop %v2525
    %v2527 = vmul.f32 %v2524, 1.442695
    %v2528 = vpow.pop %v2527
    %v2529 = vadd.f32 %v2526, 1.0
    %v2530 = vadd.f32 %v2528, 1.0
    %v2531 = vrcp.pop %v2529
    %v2532 = vmul.f32 1.0, %v2531
    %v2533 = vrcp.pop %v2530
    %v2534 = vmul.f32 1.0, %v2533
    %v2535 = vtanh.pop %v2522
    %v2536 = vmul.f32 %v2532, %v2103
    %2538 = vrot.lane.b32.xlu0 %v2535, 64
    %v2539 = vpop.permute.xlu0 %2538
    %v2541 = vmul.f32 %v2532, %v2539
    %2543 = vrot.lane.b32.xlu0 %v2541, 64
    %v2544 = vpop.permute.xlu0 %2543
    %v2546 = vadd.f32 %v2536, %v2544
    %v2547 = vtanh.pop %v2546
    %2549 = vrot.lane.b32.xlu0 %v2547, 64
    %v2550 = vpop.permute.xlu0 %2549
    %v2552 = vmul.f32 %v2534, %v2550
    %v2553 = vmax.f32 %v2552, 0.0
    %v2554 = vpack.c.bf16 %v2110, %v2110
    %v2555 = vpack.c.bf16 %v2307, %v2307
    %2556 = vmatprep.subr.bf16.mxu0 %v672
    %2557 = vmatpush1.bf16.msra.mxu0 %v671
    %2558 = vmatprep.subr.bf16.mxu0 %v668
    %2559 = vmatpush1.bf16.msra.mxu0 %v667
    %2560 = vmatprep.subr.bf16.mxu0 %v664
    %2561 = vmatpush1.bf16.msra.mxu0 %v663
    %2562 = vmatprep.subr.bf16.mxu0 %v660
    %2563 = vmatpush1.bf16.msra.mxu0 %v659
    %2564 = vmatprep.subr.bf16.mxu0 %v656
    %2565 = vmatpush1.bf16.msra.mxu0 %v655
    %2566 = vmatprep.subr.bf16.mxu0 %v652
    %2567 = vmatpush1.bf16.msra.mxu0 %v651
    %2568 = vmatprep.subr.bf16.mxu0 %v648
    %2569 = vmatpush1.bf16.msra.mxu0 %v647
    %2570 = vmatprep.subr.bf16.mxu0 %v644
    %2571 = vmatpush1.bf16.msra.mxu0 %v643
    %2572 = vmatprep.subr.bf16.mxu0 0
    %2573 = vmatpush2.bf16.msra.mxu0 0
    %2574 = vmatprep.subr.bf16.mxu0 0
    %2575 = vmatpush2.bf16.msra.mxu0 0
    %2576 = vmatprep.subr.bf16.mxu0 0
    %2577 = vmatpush2.bf16.msra.mxu0 0
    %2578 = vmatprep.subr.bf16.mxu0 0
    %2579 = vmatpush2.bf16.msra.mxu0 0
    %2580 = vmatprep.subr.bf16.mxu0 0
    %2581 = vmatpush2.bf16.msra.mxu0 0
    %2582 = vmatprep.subr.bf16.mxu0 0
    %2583 = vmatpush2.bf16.msra.mxu0 0
    %2584 = vmatprep.subr.bf16.mxu0 0
    %2585 = vmatpush2.bf16.msra.mxu0 0
    %2586 = vmatprep.subr.bf16.mxu0 0
    %2587 = vmatpush2.bf16.msra.mxu0 0
    %2588 = vmatprep.mubr.bf16.mxu0 0
    %2589 = vmatmul.mubr.bf16.gmra.mxu0 %v2555
    %v2590 = vpop.f32.mrf.mxu0
    %v2591 = vadd.f32 0.0, %v2590
    %v2592 = vpop.f32.mrf.mxu0
    %v2593 = vadd.f32 0.0, %v2592
    %v2594 = vpop.f32.mrf.mxu0
    %v2595 = vpop.f32.mrf.mxu0
    %2596 = vdwg.mxu0
    %2597 = vmatprep.subr.bf16.mxu0 %v674
    %2598 = vmatpush1.bf16.msra.mxu0 %v673
    %2599 = vmatprep.subr.bf16.mxu0 %v670
    %2600 = vmatpush1.bf16.msra.mxu0 %v669
    %2601 = vmatprep.subr.bf16.mxu0 %v666
    %2602 = vmatpush1.bf16.msra.mxu0 %v665
    %2603 = vmatprep.subr.bf16.mxu0 %v662
    %2604 = vmatpush1.bf16.msra.mxu0 %v661
    %2605 = vmatprep.subr.bf16.mxu0 %v658
    %2606 = vmatpush1.bf16.msra.mxu0 %v657
    %2607 = vmatprep.subr.bf16.mxu0 %v654
    %2608 = vmatpush1.bf16.msra.mxu0 %v653
    %2609 = vmatprep.subr.bf16.mxu0 %v650
    %2610 = vmatpush1.bf16.msra.mxu0 %v649
    %2611 = vmatprep.subr.bf16.mxu0 %v646
    %2612 = vmatpush1.bf16.msra.mxu0 %v645
    %2613 = vmatprep.subr.bf16.mxu0 0
    %2614 = vmatpush2.bf16.msra.mxu0 0
    %2615 = vmatprep.subr.bf16.mxu0 0
    %2616 = vmatpush2.bf16.msra.mxu0 0
    %2617 = vmatprep.subr.bf16.mxu0 0
    %2618 = vmatpush2.bf16.msra.mxu0 0
    %2619 = vmatprep.subr.bf16.mxu0 0
    %2620 = vmatpush2.bf16.msra.mxu0 0
    %2621 = vmatprep.subr.bf16.mxu0 0
    %2622 = vmatpush2.bf16.msra.mxu0 0
    %2623 = vmatprep.subr.bf16.mxu0 0
    %2624 = vmatpush2.bf16.msra.mxu0 0
    %2625 = vmatprep.subr.bf16.mxu0 0
    %2626 = vmatpush2.bf16.msra.mxu0 0
    %2627 = vmatprep.subr.bf16.mxu0 0
    %2628 = vmatpush2.bf16.msra.mxu0 0
    %2629 = vmatprep.mubr.bf16.mxu0 0
    %2630 = vmatmul.mubr.bf16.gmra.mxu0 %v2555
    %v2631 = vpop.f32.mrf.mxu0
    %v2632 = vadd.f32 0.0, %v2631
    %v2633 = vpop.f32.mrf.mxu0
    %v2634 = vadd.f32 0.0, %v2633
    %v2635 = vpop.f32.mrf.mxu0
    %v2636 = vpop.f32.mrf.mxu0
    %2637 = vdwg.mxu0
    %v2639 = vsel %vm280, %v2554, 0
    %2641 = vmatprep.subr.bf16.mxu0 0
    %2642 = vmatpush1.bf16.msra.mxu0 0
    %2643 = vmatprep.subr.bf16.mxu0 0
    %2644 = vmatpush1.bf16.msra.mxu0 0
    %2645 = vmatprep.subr.bf16.mxu0 0
    %2646 = vmatpush1.bf16.msra.mxu0 0
    %2647 = vmatprep.subr.bf16.mxu0 0
    %2648 = vmatpush1.bf16.msra.mxu0 0
    %2649 = vmatprep.subr.bf16.mxu0 %v850
    %2650 = vmatpush1.bf16.msra.mxu0 %v849
    %2651 = vmatprep.subr.bf16.mxu0 %v846
    %2652 = vmatpush1.bf16.msra.mxu0 %v845
    %2653 = vmatprep.subr.bf16.mxu0 %v842
    %2654 = vmatpush1.bf16.msra.mxu0 %v841
    %2655 = vmatprep.subr.bf16.mxu0 %v838
    %2656 = vmatpush1.bf16.msra.mxu0 %v837
    %2657 = vmatprep.subr.bf16.mxu0 0
    %2658 = vmatpush2.bf16.msra.mxu0 0
    %2659 = vmatprep.subr.bf16.mxu0 0
    %2660 = vmatpush2.bf16.msra.mxu0 0
    %2661 = vmatprep.subr.bf16.mxu0 0
    %2662 = vmatpush2.bf16.msra.mxu0 0
    %2663 = vmatprep.subr.bf16.mxu0 0
    %2664 = vmatpush2.bf16.msra.mxu0 0
    %2665 = vmatprep.subr.bf16.mxu0 0
    %2666 = vmatpush2.bf16.msra.mxu0 0
    %2667 = vmatprep.subr.bf16.mxu0 0
    %2668 = vmatpush2.bf16.msra.mxu0 0
    %2669 = vmatprep.subr.bf16.mxu0 0
    %2670 = vmatpush2.bf16.msra.mxu0 0
    %2671 = vmatprep.subr.bf16.mxu0 0
    %2672 = vmatpush2.bf16.msra.mxu0 0
    %2673 = vmatprep.mubr.bf16.mxu0 0
    %2674 = vmatmul.mubr.bf16.gmra.mxu0 %v2639
    %v2675 = vpop.f32.mrf.mxu0
    %v2676 = vadd.f32 %v2591, %v2675
    %v2677 = vpop.f32.mrf.mxu0
    %v2678 = vadd.f32 %v2593, %v2677
    %v2679 = vpop.f32.mrf.mxu0
    %v2680 = vpop.f32.mrf.mxu0
    %2681 = vdwg.mxu0
    %2682 = vmatprep.subr.bf16.mxu0 0
    %2683 = vmatpush1.bf16.msra.mxu0 0
    %2684 = vmatprep.subr.bf16.mxu0 0
    %2685 = vmatpush1.bf16.msra.mxu0 0
    %2686 = vmatprep.subr.bf16.mxu0 0
    %2687 = vmatpush1.bf16.msra.mxu0 0
    %2688 = vmatprep.subr.bf16.mxu0 0
    %2689 = vmatpush1.bf16.msra.mxu0 0
    %2690 = vmatprep.subr.bf16.mxu0 %v852
    %2691 = vmatpush1.bf16.msra.mxu0 %v851
    %2692 = vmatprep.subr.bf16.mxu0 %v848
    %2693 = vmatpush1.bf16.msra.mxu0 %v847
    %2694 = vmatprep.subr.bf16.mxu0 %v844
    %2695 = vmatpush1.bf16.msra.mxu0 %v843
    %2696 = vmatprep.subr.bf16.mxu0 %v840
    %2697 = vmatpush1.bf16.msra.mxu0 %v839
    %2698 = vmatprep.subr.bf16.mxu0 0
    %2699 = vmatpush2.bf16.msra.mxu0 0
    %2700 = vmatprep.subr.bf16.mxu0 0
    %2701 = vmatpush2.bf16.msra.mxu0 0
    %2702 = vmatprep.subr.bf16.mxu0 0
    %2703 = vmatpush2.bf16.msra.mxu0 0
    %2704 = vmatprep.subr.bf16.mxu0 0
    %2705 = vmatpush2.bf16.msra.mxu0 0
    %2706 = vmatprep.subr.bf16.mxu0 0
    %2707 = vmatpush2.bf16.msra.mxu0 0
    %2708 = vmatprep.subr.bf16.mxu0 0
    %2709 = vmatpush2.bf16.msra.mxu0 0
    %2710 = vmatprep.subr.bf16.mxu0 0
    %2711 = vmatpush2.bf16.msra.mxu0 0
    %2712 = vmatprep.subr.bf16.mxu0 0
    %2713 = vmatpush2.bf16.msra.mxu0 0
    %2714 = vmatprep.mubr.bf16.mxu0 0
    %2715 = vmatmul.mubr.bf16.gmra.mxu0 %v2639
    %v2716 = vpop.f32.mrf.mxu0
    %v2717 = vadd.f32 %v2632, %v2716
    %v2718 = vpop.f32.mrf.mxu0
    %v2719 = vadd.f32 %v2634, %v2718
    %v2720 = vpop.f32.mrf.mxu0
    %v2721 = vpop.f32.mrf.mxu0
    %2722 = vdwg.mxu0
    %v2723 = vadd.f32 %v2676, %v186
    %v2724 = vadd.f32 %v2678, %v190
    %v2725 = vadd.f32 %v2717, %v194
    %v2726 = vadd.f32 %v2719, %v198
    %v2727 = vxor.u32 %v2723, 2147483648
    %v2728 = vxor.u32 %v2724, 2147483648
    %v2729 = vxor.u32 %v2725, 2147483648
    %v2730 = vmul.f32 %v2727, 1.442695
    %v2731 = vpow.pop %v2730
    %v2732 = vmul.f32 %v2728, 1.442695
    %v2733 = vpow.pop %v2732
    %v2734 = vmul.f32 %v2729, 1.442695
    %v2735 = vpow.pop %v2734
    %v2736 = vadd.f32 %v2731, 1.0
    %v2737 = vadd.f32 %v2733, 1.0
    %v2738 = vadd.f32 %v2735, 1.0
    %v2739 = vrcp.pop %v2736
    %v2740 = vmul.f32 1.0, %v2739
    %v2741 = vrcp.pop %v2737
    %v2742 = vmul.f32 1.0, %v2741
    %v2743 = vrcp.pop %v2738
    %v2744 = vmul.f32 1.0, %v2743
    %v2745 = vtanh.pop %v2726
    %v2746 = vmul.f32 %v2742, %v2305
    %v2747 = vmul.f32 %v2740, %v2745
    %v2748 = vadd.f32 %v2746, %v2747
    %v2749 = vtanh.pop %v2748
    %v2750 = vmul.f32 %v2744, %v2749
    %v2751 = vmax.f32 %v2750, 0.0
    %v2752 = vpack.c.bf16 %v2308, %v2308
    %v2753 = vpack.c.bf16 %v2427, %v2427
    %v2755 = vsel %vm280, %v2753, 0
    %2757 = vmatprep.subr.bf16.mxu0 0
    %2758 = vmatpush1.bf16.msra.mxu0 0
    %2759 = vmatprep.subr.bf16.mxu0 0
    %2760 = vmatpush1.bf16.msra.mxu0 0
    %2761 = vmatprep.subr.bf16.mxu0 0
    %2762 = vmatpush1.bf16.msra.mxu0 0
    %2763 = vmatprep.subr.bf16.mxu0 0
    %2764 = vmatpush1.bf16.msra.mxu0 0
    %2765 = vmatprep.subr.bf16.mxu0 %v1339
    %2766 = vmatpush1.bf16.msra.mxu0 %v1338
    %2767 = vmatprep.subr.bf16.mxu0 %v1337
    %2768 = vmatpush1.bf16.msra.mxu0 %v1336
    %2769 = vmatprep.subr.bf16.mxu0 %v1335
    %2770 = vmatpush1.bf16.msra.mxu0 %v1334
    %2771 = vmatprep.subr.bf16.mxu0 %v1333
    %2772 = vmatpush1.bf16.msra.mxu0 %v1332
    %2773 = vmatprep.subr.bf16.mxu0 0
    %2774 = vmatpush2.bf16.msra.mxu0 0
    %2775 = vmatprep.subr.bf16.mxu0 0
    %2776 = vmatpush2.bf16.msra.mxu0 0
    %2777 = vmatprep.subr.bf16.mxu0 0
    %2778 = vmatpush2.bf16.msra.mxu0 0
    %2779 = vmatprep.subr.bf16.mxu0 0
    %2780 = vmatpush2.bf16.msra.mxu0 0
    %2781 = vmatprep.subr.bf16.mxu0 0
    %2782 = vmatpush2.bf16.msra.mxu0 0
    %2783 = vmatprep.subr.bf16.mxu0 0
    %2784 = vmatpush2.bf16.msra.mxu0 0
    %2785 = vmatprep.subr.bf16.mxu0 0
    %2786 = vmatpush2.bf16.msra.mxu0 0
    %2787 = vmatprep.subr.bf16.mxu0 0
    %2788 = vmatpush2.bf16.msra.mxu0 0
    %2789 = vmatprep.mubr.bf16.mxu0 0
    %2790 = vmatmul.mubr.bf16.gmra.mxu0 %v2755
    %v2791 = vpop.f32.mrf.mxu0
    %v2792 = vadd.f32 0.0, %v2791
    %v2793 = vpop.f32.mrf.mxu0
    %v2794 = vadd.f32 0.0, %v2793
    %v2795 = vpop.f32.mrf.mxu0
    %v2796 = vpop.f32.mrf.mxu0
    %2797 = vdwg.mxu0
    %2798 = vmatprep.subr.bf16.mxu0 %v1452
    %2799 = vmatpush1.bf16.msra.mxu0 %v1451
    %2800 = vmatprep.subr.bf16.mxu0 %v1450
    %2801 = vmatpush1.bf16.msra.mxu0 %v1449
    %2802 = vmatprep.subr.bf16.mxu0 %v1448
    %2803 = vmatpush1.bf16.msra.mxu0 %v1447
    %2804 = vmatprep.subr.bf16.mxu0 %v1446
    %2805 = vmatpush1.bf16.msra.mxu0 %v1445
    %2806 = vmatprep.subr.bf16.mxu0 %v1444
    %2807 = vmatpush1.bf16.msra.mxu0 %v1443
    %2808 = vmatprep.subr.bf16.mxu0 %v1442
    %2809 = vmatpush1.bf16.msra.mxu0 %v1441
    %2810 = vmatprep.subr.bf16.mxu0 %v1440
    %2811 = vmatpush1.bf16.msra.mxu0 %v1439
    %2812 = vmatprep.subr.bf16.mxu0 %v1438
    %2813 = vmatpush1.bf16.msra.mxu0 %v1437
    %2814 = vmatprep.subr.bf16.mxu0 0
    %2815 = vmatpush2.bf16.msra.mxu0 0
    %2816 = vmatprep.subr.bf16.mxu0 0
    %2817 = vmatpush2.bf16.msra.mxu0 0
    %2818 = vmatprep.subr.bf16.mxu0 0
    %2819 = vmatpush2.bf16.msra.mxu0 0
    %2820 = vmatprep.subr.bf16.mxu0 0
    %2821 = vmatpush2.bf16.msra.mxu0 0
    %2822 = vmatprep.subr.bf16.mxu0 0
    %2823 = vmatpush2.bf16.msra.mxu0 0
    %2824 = vmatprep.subr.bf16.mxu0 0
    %2825 = vmatpush2.bf16.msra.mxu0 0
    %2826 = vmatprep.subr.bf16.mxu0 0
    %2827 = vmatpush2.bf16.msra.mxu0 0
    %2828 = vmatprep.subr.bf16.mxu0 0
    %2829 = vmatpush2.bf16.msra.mxu0 0
    %2830 = vmatprep.mubr.bf16.mxu0 0
    %2831 = vmatmul.mubr.bf16.gmra.mxu0 %v2752
    %v2832 = vpop.f32.mrf.mxu0
    %v2833 = vadd.f32 %v2792, %v2832
    %v2834 = vpop.f32.mrf.mxu0
    %v2835 = vadd.f32 %v2794, %v2834
    %v2836 = vpop.f32.mrf.mxu0
    %v2837 = vpop.f32.mrf.mxu0
    %2838 = vdwg.mxu0
    %v2839 = vadd.f32 %v2833, %v208
    %v2840 = vadd.f32 %v2835, %v212
    %v2841 = vxor.u32 %v2839, 2147483648
    %v2842 = vxor.u32 %v2840, 2147483648
    %v2843 = vmul.f32 %v2841, 1.442695
    %v2844 = vpow.pop %v2843
    %v2845 = vmul.f32 %v2842, 1.442695
    %v2846 = vpow.pop %v2845
    %v2847 = vadd.f32 %v2844, 1.0
    %v2848 = vadd.f32 %v2846, 1.0
    %v2849 = vrcp.pop %v2847
    %v2850 = vmul.f32 1.0, %v2849
    %v2851 = vrcp.pop %v2848
    %v2852 = vmul.f32 1.0, %v2851
    %v2853 = vtanh.pop %v2840
    %v2854 = vmul.f32 %v2850, %v2421
    %2856 = vrot.lane.b32.xlu0 %v2853, 64
    %v2857 = vpop.permute.xlu0 %2856
    %v2859 = vmul.f32 %v2850, %v2857
    %2861 = vrot.lane.b32.xlu0 %v2859, 64
    %v2862 = vpop.permute.xlu0 %2861
    %v2864 = vadd.f32 %v2854, %v2862
    %v2865 = vtanh.pop %v2864
    %2867 = vrot.lane.b32.xlu0 %v2865, 64
    %v2868 = vpop.permute.xlu0 %2867
    %v2870 = vmul.f32 %v2852, %v2868
    %v2871 = vpack.c.bf16 %v2552, %v2552
    %v2873 = vsel %vm280, %v2871, 0
    %2875 = vmatprep.subr.bf16.mxu0 0
    %2876 = vmatpush1.bf16.msra.mxu0 0
    %2877 = vmatprep.subr.bf16.mxu0 0
    %2878 = vmatpush1.bf16.msra.mxu0 0
    %2879 = vmatprep.subr.bf16.mxu0 0
    %2880 = vmatpush1.bf16.msra.mxu0 0
    %2881 = vmatprep.subr.bf16.mxu0 0
    %2882 = vmatpush1.bf16.msra.mxu0 0
    %2883 = vmatprep.subr.bf16.mxu0 %v271
    %2884 = vmatpush1.bf16.msra.mxu0 %v270
    %2885 = vmatprep.subr.bf16.mxu0 %v269
    %2886 = vmatpush1.bf16.msra.mxu0 %v268
    %2887 = vmatprep.subr.bf16.mxu0 %v267
    %2888 = vmatpush1.bf16.msra.mxu0 %v266
    %2889 = vmatprep.subr.bf16.mxu0 %v265
    %2890 = vmatpush1.bf16.msra.mxu0 %v264
    %2891 = vmatprep.subr.bf16.mxu0 0
    %2892 = vmatpush2.bf16.msra.mxu0 0
    %2893 = vmatprep.subr.bf16.mxu0 0
    %2894 = vmatpush2.bf16.msra.mxu0 0
    %2895 = vmatprep.subr.bf16.mxu0 0
    %2896 = vmatpush2.bf16.msra.mxu0 0
    %2897 = vmatprep.subr.bf16.mxu0 0
    %2898 = vmatpush2.bf16.msra.mxu0 0
    %2899 = vmatprep.subr.bf16.mxu0 0
    %2900 = vmatpush2.bf16.msra.mxu0 0
    %2901 = vmatprep.subr.bf16.mxu0 0
    %2902 = vmatpush2.bf16.msra.mxu0 0
    %2903 = vmatprep.subr.bf16.mxu0 0
    %2904 = vmatpush2.bf16.msra.mxu0 0
    %2905 = vmatprep.subr.bf16.mxu0 0
    %2906 = vmatpush2.bf16.msra.mxu0 0
    %2907 = vmatprep.mubr.bf16.mxu0 0
    %2908 = vmatmul.mubr.bf16.gmra.mxu0 %v2873
    %v2909 = vpop.f32.mrf.mxu0
    %v2910 = vadd.f32 0.0, %v2909
    %v2911 = vpop.f32.mrf.mxu0
    %v2912 = vadd.f32 0.0, %v2911
    %v2913 = vpop.f32.mrf.mxu0
    %v2914 = vpop.f32.mrf.mxu0
    %2915 = vdwg.mxu0
    %v2916 = vrot.slane %v327, 6
    %v2917 = vrot.slane %v328, 5
    %v2918 = vsel %vm330, %v2917, %v2916
    %v2919 = vpack.c.b16 %v2918, %v2918
    %v2921 = vsel %vm343, %v2919, 0
    %2923 = vmatprep.subr.bf16.mxu0 0
    %2924 = vmatpush1.bf16.msra.mxu0 0
    %2925 = vmatprep.subr.bf16.mxu0 0
    %2926 = vmatpush1.bf16.msra.mxu0 0
    %2927 = vmatprep.subr.bf16.mxu0 0
    %2928 = vmatpush1.bf16.msra.mxu0 0
    %2929 = vmatprep.subr.bf16.mxu0 0
    %2930 = vmatpush1.bf16.msra.mxu0 0
    %2931 = vmatprep.subr.bf16.mxu0 0
    %2932 = vmatpush1.bf16.msra.mxu0 0
    %2933 = vmatprep.subr.bf16.mxu0 0
    %2934 = vmatpush1.bf16.msra.mxu0 0
    %2935 = vmatprep.subr.bf16.mxu0 0
    %2936 = vmatpush1.bf16.msra.mxu0 0
    %2937 = vmatprep.subr.bf16.mxu0 %v340
    %2938 = vmatpush1.bf16.msra.mxu0 %v339
    %2939 = vmatprep.subr.bf16.mxu0 0
    %2940 = vmatpush2.bf16.msra.mxu0 0
    %2941 = vmatprep.subr.bf16.mxu0 0
    %2942 = vmatpush2.bf16.msra.mxu0 0
    %2943 = vmatprep.subr.bf16.mxu0 0
    %2944 = vmatpush2.bf16.msra.mxu0 0
    %2945 = vmatprep.subr.bf16.mxu0 0
    %2946 = vmatpush2.bf16.msra.mxu0 0
    %2947 = vmatprep.subr.bf16.mxu0 0
    %2948 = vmatpush2.bf16.msra.mxu0 0
    %2949 = vmatprep.subr.bf16.mxu0 0
    %2950 = vmatpush2.bf16.msra.mxu0 0
    %2951 = vmatprep.subr.bf16.mxu0 0
    %2952 = vmatpush2.bf16.msra.mxu0 0
    %2953 = vmatprep.subr.bf16.mxu0 0
    %2954 = vmatpush2.bf16.msra.mxu0 0
    %2955 = vmatprep.mubr.bf16.mxu0 0
    %2956 = vmatmul.mubr.bf16.gmra.mxu0 %v2921
    %v2957 = vpop.f32.mrf.mxu0
    %v2958 = vadd.f32 %v2910, %v2957
    %v2959 = vpop.f32.mrf.mxu0
    %v2960 = vadd.f32 %v2912, %v2959
    %v2961 = vpop.f32.mrf.mxu0
    %v2962 = vpop.f32.mrf.mxu0
    %2963 = vdwg.mxu0
    %v2964 = vadd.f32 %v2958, %v174
    %v2965 = vadd.f32 %v2960, %v178
    %v2966 = vxor.u32 %v2964, 2147483648
    %v2967 = vxor.u32 %v2965, 2147483648
    %v2968 = vmul.f32 %v2966, 1.442695
    %v2969 = vpow.pop %v2968
    %v2970 = vmul.f32 %v2967, 1.442695
    %v2971 = vpow.pop %v2970
    %v2972 = vadd.f32 %v2969, 1.0
    %v2973 = vadd.f32 %v2971, 1.0
    %v2974 = vrcp.pop %v2972
    %v2975 = vmul.f32 1.0, %v2974
    %v2976 = vrcp.pop %v2973
    %v2977 = vmul.f32 1.0, %v2976
    %v2978 = vtanh.pop %v2965
    %v2979 = vmul.f32 %v2975, %v2546
    %2981 = vrot.lane.b32.xlu0 %v2978, 64
    %v2982 = vpop.permute.xlu0 %2981
    %v2984 = vmul.f32 %v2975, %v2982
    %2986 = vrot.lane.b32.xlu0 %v2984, 64
    %v2987 = vpop.permute.xlu0 %2986
    %v2989 = vadd.f32 %v2979, %v2987
    %v2990 = vtanh.pop %v2989
    %2992 = vrot.lane.b32.xlu0 %v2990, 64
    %v2993 = vpop.permute.xlu0 %2992
    %v2995 = vmul.f32 %v2977, %v2993
    %v2996 = vmax.f32 %v2995, 0.0
    %v2997 = vpack.c.bf16 %v2553, %v2553
    %v2998 = vpack.c.bf16 %v2750, %v2750
    %2999 = vmatprep.subr.bf16.mxu0 %v672
    %3000 = vmatpush1.bf16.msra.mxu0 %v671
    %3001 = vmatprep.subr.bf16.mxu0 %v668
    %3002 = vmatpush1.bf16.msra.mxu0 %v667
    %3003 = vmatprep.subr.bf16.mxu0 %v664
    %3004 = vmatpush1.bf16.msra.mxu0 %v663
    %3005 = vmatprep.subr.bf16.mxu0 %v660
    %3006 = vmatpush1.bf16.msra.mxu0 %v659
    %3007 = vmatprep.subr.bf16.mxu0 %v656
    %3008 = vmatpush1.bf16.msra.mxu0 %v655
    %3009 = vmatprep.subr.bf16.mxu0 %v652
    %3010 = vmatpush1.bf16.msra.mxu0 %v651
    %3011 = vmatprep.subr.bf16.mxu0 %v648
    %3012 = vmatpush1.bf16.msra.mxu0 %v647
    %3013 = vmatprep.subr.bf16.mxu0 %v644
    %3014 = vmatpush1.bf16.msra.mxu0 %v643
    %3015 = vmatprep.subr.bf16.mxu0 0
    %3016 = vmatpush2.bf16.msra.mxu0 0
    %3017 = vmatprep.subr.bf16.mxu0 0
    %3018 = vmatpush2.bf16.msra.mxu0 0
    %3019 = vmatprep.subr.bf16.mxu0 0
    %3020 = vmatpush2.bf16.msra.mxu0 0
    %3021 = vmatprep.subr.bf16.mxu0 0
    %3022 = vmatpush2.bf16.msra.mxu0 0
    %3023 = vmatprep.subr.bf16.mxu0 0
    %3024 = vmatpush2.bf16.msra.mxu0 0
    %3025 = vmatprep.subr.bf16.mxu0 0
    %3026 = vmatpush2.bf16.msra.mxu0 0
    %3027 = vmatprep.subr.bf16.mxu0 0
    %3028 = vmatpush2.bf16.msra.mxu0 0
    %3029 = vmatprep.subr.bf16.mxu0 0
    %3030 = vmatpush2.bf16.msra.mxu0 0
    %3031 = vmatprep.mubr.bf16.mxu0 0
    %3032 = vmatmul.mubr.bf16.gmra.mxu0 %v2998
    %v3033 = vpop.f32.mrf.mxu0
    %v3034 = vadd.f32 0.0, %v3033
    %v3035 = vpop.f32.mrf.mxu0
    %v3036 = vadd.f32 0.0, %v3035
    %v3037 = vpop.f32.mrf.mxu0
    %v3038 = vpop.f32.mrf.mxu0
    %3039 = vdwg.mxu0
    %3040 = vmatprep.subr.bf16.mxu0 %v674
    %3041 = vmatpush1.bf16.msra.mxu0 %v673
    %3042 = vmatprep.subr.bf16.mxu0 %v670
    %3043 = vmatpush1.bf16.msra.mxu0 %v669
    %3044 = vmatprep.subr.bf16.mxu0 %v666
    %3045 = vmatpush1.bf16.msra.mxu0 %v665
    %3046 = vmatprep.subr.bf16.mxu0 %v662
    %3047 = vmatpush1.bf16.msra.mxu0 %v661
    %3048 = vmatprep.subr.bf16.mxu0 %v658
    %3049 = vmatpush1.bf16.msra.mxu0 %v657
    %3050 = vmatprep.subr.bf16.mxu0 %v654
    %3051 = vmatpush1.bf16.msra.mxu0 %v653
    %3052 = vmatprep.subr.bf16.mxu0 %v650
    %3053 = vmatpush1.bf16.msra.mxu0 %v649
    %3054 = vmatprep.subr.bf16.mxu0 %v646
    %3055 = vmatpush1.bf16.msra.mxu0 %v645
    %3056 = vmatprep.subr.bf16.mxu0 0
    %3057 = vmatpush2.bf16.msra.mxu0 0
    %3058 = vmatprep.subr.bf16.mxu0 0
    %3059 = vmatpush2.bf16.msra.mxu0 0
    %3060 = vmatprep.subr.bf16.mxu0 0
    %3061 = vmatpush2.bf16.msra.mxu0 0
    %3062 = vmatprep.subr.bf16.mxu0 0
    %3063 = vmatpush2.bf16.msra.mxu0 0
    %3064 = vmatprep.subr.bf16.mxu0 0
    %3065 = vmatpush2.bf16.msra.mxu0 0
    %3066 = vmatprep.subr.bf16.mxu0 0
    %3067 = vmatpush2.bf16.msra.mxu0 0
    %3068 = vmatprep.subr.bf16.mxu0 0
    %3069 = vmatpush2.bf16.msra.mxu0 0
    %3070 = vmatprep.subr.bf16.mxu0 0
    %3071 = vmatpush2.bf16.msra.mxu0 0
    %3072 = vmatprep.mubr.bf16.mxu0 0
    %3073 = vmatmul.mubr.bf16.gmra.mxu0 %v2998
    %v3074 = vpop.f32.mrf.mxu0
    %v3075 = vadd.f32 0.0, %v3074
    %v3076 = vpop.f32.mrf.mxu0
    %v3077 = vadd.f32 0.0, %v3076
    %v3078 = vpop.f32.mrf.mxu0
    %v3079 = vpop.f32.mrf.mxu0
    %3080 = vdwg.mxu0
    %v3082 = vsel %vm280, %v2997, 0
    %3084 = vmatprep.subr.bf16.mxu0 0
    %3085 = vmatpush1.bf16.msra.mxu0 0
    %3086 = vmatprep.subr.bf16.mxu0 0
    %3087 = vmatpush1.bf16.msra.mxu0 0
    %3088 = vmatprep.subr.bf16.mxu0 0
    %3089 = vmatpush1.bf16.msra.mxu0 0
    %3090 = vmatprep.subr.bf16.mxu0 0
    %3091 = vmatpush1.bf16.msra.mxu0 0
    %3092 = vmatprep.subr.bf16.mxu0 %v850
    %3093 = vmatpush1.bf16.msra.mxu0 %v849
    %3094 = vmatprep.subr.bf16.mxu0 %v846
    %3095 = vmatpush1.bf16.msra.mxu0 %v845
    %3096 = vmatprep.subr.bf16.mxu0 %v842
    %3097 = vmatpush1.bf16.msra.mxu0 %v841
    %3098 = vmatprep.subr.bf16.mxu0 %v838
    %3099 = vmatpush1.bf16.msra.mxu0 %v837
    %3100 = vmatprep.subr.bf16.mxu0 0
    %3101 = vmatpush2.bf16.msra.mxu0 0
    %3102 = vmatprep.subr.bf16.mxu0 0
    %3103 = vmatpush2.bf16.msra.mxu0 0
    %3104 = vmatprep.subr.bf16.mxu0 0
    %3105 = vmatpush2.bf16.msra.mxu0 0
    %3106 = vmatprep.subr.bf16.mxu0 0
    %3107 = vmatpush2.bf16.msra.mxu0 0
    %3108 = vmatprep.subr.bf16.mxu0 0
    %3109 = vmatpush2.bf16.msra.mxu0 0
    %3110 = vmatprep.subr.bf16.mxu0 0
    %3111 = vmatpush2.bf16.msra.mxu0 0
    %3112 = vmatprep.subr.bf16.mxu0 0
    %3113 = vmatpush2.bf16.msra.mxu0 0
    %3114 = vmatprep.subr.bf16.mxu0 0
    %3115 = vmatpush2.bf16.msra.mxu0 0
    %3116 = vmatprep.mubr.bf16.mxu0 0
    %3117 = vmatmul.mubr.bf16.gmra.mxu0 %v3082
    %v3118 = vpop.f32.mrf.mxu0
    %v3119 = vadd.f32 %v3034, %v3118
    %v3120 = vpop.f32.mrf.mxu0
    %v3121 = vadd.f32 %v3036, %v3120
    %v3122 = vpop.f32.mrf.mxu0
    %v3123 = vpop.f32.mrf.mxu0
    %3124 = vdwg.mxu0
    %3125 = vmatprep.subr.bf16.mxu0 0
    %3126 = vmatpush1.bf16.msra.mxu0 0
    %3127 = vmatprep.subr.bf16.mxu0 0
    %3128 = vmatpush1.bf16.msra.mxu0 0
    %3129 = vmatprep.subr.bf16.mxu0 0
    %3130 = vmatpush1.bf16.msra.mxu0 0
    %3131 = vmatprep.subr.bf16.mxu0 0
    %3132 = vmatpush1.bf16.msra.mxu0 0
    %3133 = vmatprep.subr.bf16.mxu0 %v852
    %3134 = vmatpush1.bf16.msra.mxu0 %v851
    %3135 = vmatprep.subr.bf16.mxu0 %v848
    %3136 = vmatpush1.bf16.msra.mxu0 %v847
    %3137 = vmatprep.subr.bf16.mxu0 %v844
    %3138 = vmatpush1.bf16.msra.mxu0 %v843
    %3139 = vmatprep.subr.bf16.mxu0 %v840
    %3140 = vmatpush1.bf16.msra.mxu0 %v839
    %3141 = vmatprep.subr.bf16.mxu0 0
    %3142 = vmatpush2.bf16.msra.mxu0 0
    %3143 = vmatprep.subr.bf16.mxu0 0
    %3144 = vmatpush2.bf16.msra.mxu0 0
    %3145 = vmatprep.subr.bf16.mxu0 0
    %3146 = vmatpush2.bf16.msra.mxu0 0
    %3147 = vmatprep.subr.bf16.mxu0 0
    %3148 = vmatpush2.bf16.msra.mxu0 0
    %3149 = vmatprep.subr.bf16.mxu0 0
    %3150 = vmatpush2.bf16.msra.mxu0 0
    %3151 = vmatprep.subr.bf16.mxu0 0
    %3152 = vmatpush2.bf16.msra.mxu0 0
    %3153 = vmatprep.subr.bf16.mxu0 0
    %3154 = vmatpush2.bf16.msra.mxu0 0
    %3155 = vmatprep.subr.bf16.mxu0 0
    %3156 = vmatpush2.bf16.msra.mxu0 0
    %3157 = vmatprep.mubr.bf16.mxu0 0
    %3158 = vmatmul.mubr.bf16.gmra.mxu0 %v3082
    %v3159 = vpop.f32.mrf.mxu0
    %v3160 = vadd.f32 %v3075, %v3159
    %v3161 = vpop.f32.mrf.mxu0
    %v3162 = vadd.f32 %v3077, %v3161
    %v3163 = vpop.f32.mrf.mxu0
    %v3164 = vpop.f32.mrf.mxu0
    %3165 = vdwg.mxu0
    %v3166 = vadd.f32 %v3119, %v186
    %v3167 = vadd.f32 %v3121, %v190
    %v3168 = vadd.f32 %v3160, %v194
    %v3169 = vadd.f32 %v3162, %v198
    %v3170 = vxor.u32 %v3166, 2147483648
    %v3171 = vxor.u32 %v3167, 2147483648
    %v3172 = vxor.u32 %v3168, 2147483648
    %v3173 = vmul.f32 %v3170, 1.442695
    %v3174 = vpow.pop %v3173
    %v3175 = vmul.f32 %v3171, 1.442695
    %v3176 = vpow.pop %v3175
    %v3177 = vmul.f32 %v3172, 1.442695
    %v3178 = vpow.pop %v3177
    %v3179 = vadd.f32 %v3174, 1.0
    %v3180 = vadd.f32 %v3176, 1.0
    %v3181 = vadd.f32 %v3178, 1.0
    %v3182 = vrcp.pop %v3179
    %v3183 = vmul.f32 1.0, %v3182
    %v3184 = vrcp.pop %v3180
    %v3185 = vmul.f32 1.0, %v3184
    %v3186 = vrcp.pop %v3181
    %v3187 = vmul.f32 1.0, %v3186
    %v3188 = vtanh.pop %v3169
    %v3189 = vmul.f32 %v3185, %v2748
    %v3190 = vmul.f32 %v3183, %v3188
    %v3191 = vadd.f32 %v3189, %v3190
    %v3192 = vtanh.pop %v3191
    %v3193 = vmul.f32 %v3187, %v3192
    %v3194 = vmax.f32 %v3193, 0.0
    %v3195 = vpack.c.bf16 %v2751, %v2751
    %v3196 = vpack.c.bf16 %v2870, %v2870
    %v3198 = vsel %vm280, %v3196, 0
    %3200 = vmatprep.subr.bf16.mxu0 0
    %3201 = vmatpush1.bf16.msra.mxu0 0
    %3202 = vmatprep.subr.bf16.mxu0 0
    %3203 = vmatpush1.bf16.msra.mxu0 0
    %3204 = vmatprep.subr.bf16.mxu0 0
    %3205 = vmatpush1.bf16.msra.mxu0 0
    %3206 = vmatprep.subr.bf16.mxu0 0
    %3207 = vmatpush1.bf16.msra.mxu0 0
    %3208 = vmatprep.subr.bf16.mxu0 %v1339
    %3209 = vmatpush1.bf16.msra.mxu0 %v1338
    %3210 = vmatprep.subr.bf16.mxu0 %v1337
    %3211 = vmatpush1.bf16.msra.mxu0 %v1336
    %3212 = vmatprep.subr.bf16.mxu0 %v1335
    %3213 = vmatpush1.bf16.msra.mxu0 %v1334
    %3214 = vmatprep.subr.bf16.mxu0 %v1333
    %3215 = vmatpush1.bf16.msra.mxu0 %v1332
    %3216 = vmatprep.subr.bf16.mxu0 0
    %3217 = vmatpush2.bf16.msra.mxu0 0
    %3218 = vmatprep.subr.bf16.mxu0 0
    %3219 = vmatpush2.bf16.msra.mxu0 0
    %3220 = vmatprep.subr.bf16.mxu0 0
    %3221 = vmatpush2.bf16.msra.mxu0 0
    %3222 = vmatprep.subr.bf16.mxu0 0
    %3223 = vmatpush2.bf16.msra.mxu0 0
    %3224 = vmatprep.subr.bf16.mxu0 0
    %3225 = vmatpush2.bf16.msra.mxu0 0
    %3226 = vmatprep.subr.bf16.mxu0 0
    %3227 = vmatpush2.bf16.msra.mxu0 0
    %3228 = vmatprep.subr.bf16.mxu0 0
    %3229 = vmatpush2.bf16.msra.mxu0 0
    %3230 = vmatprep.subr.bf16.mxu0 0
    %3231 = vmatpush2.bf16.msra.mxu0 0
    %3232 = vmatprep.mubr.bf16.mxu0 0
    %3233 = vmatmul.mubr.bf16.gmra.mxu0 %v3198
    %v3234 = vpop.f32.mrf.mxu0
    %v3235 = vadd.f32 0.0, %v3234
    %v3236 = vpop.f32.mrf.mxu0
    %v3237 = vadd.f32 0.0, %v3236
    %v3238 = vpop.f32.mrf.mxu0
    %v3239 = vpop.f32.mrf.mxu0
    %3240 = vdwg.mxu0
    %3241 = vmatprep.subr.bf16.mxu0 %v1452
    %3242 = vmatpush1.bf16.msra.mxu0 %v1451
    %3243 = vmatprep.subr.bf16.mxu0 %v1450
    %3244 = vmatpush1.bf16.msra.mxu0 %v1449
    %3245 = vmatprep.subr.bf16.mxu0 %v1448
    %3246 = vmatpush1.bf16.msra.mxu0 %v1447
    %3247 = vmatprep.subr.bf16.mxu0 %v1446
    %3248 = vmatpush1.bf16.msra.mxu0 %v1445
    %3249 = vmatprep.subr.bf16.mxu0 %v1444
    %3250 = vmatpush1.bf16.msra.mxu0 %v1443
    %3251 = vmatprep.subr.bf16.mxu0 %v1442
    %3252 = vmatpush1.bf16.msra.mxu0 %v1441
    %3253 = vmatprep.subr.bf16.mxu0 %v1440
    %3254 = vmatpush1.bf16.msra.mxu0 %v1439
    %3255 = vmatprep.subr.bf16.mxu0 %v1438
    %3256 = vmatpush1.bf16.msra.mxu0 %v1437
    %3257 = vmatprep.subr.bf16.mxu0 0
    %3258 = vmatpush2.bf16.msra.mxu0 0
    %3259 = vmatprep.subr.bf16.mxu0 0
    %3260 = vmatpush2.bf16.msra.mxu0 0
    %3261 = vmatprep.subr.bf16.mxu0 0
    %3262 = vmatpush2.bf16.msra.mxu0 0
    %3263 = vmatprep.subr.bf16.mxu0 0
    %3264 = vmatpush2.bf16.msra.mxu0 0
    %3265 = vmatprep.subr.bf16.mxu0 0
    %3266 = vmatpush2.bf16.msra.mxu0 0
    %3267 = vmatprep.subr.bf16.mxu0 0
    %3268 = vmatpush2.bf16.msra.mxu0 0
    %3269 = vmatprep.subr.bf16.mxu0 0
    %3270 = vmatpush2.bf16.msra.mxu0 0
    %3271 = vmatprep.subr.bf16.mxu0 0
    %3272 = vmatpush2.bf16.msra.mxu0 0
    %3273 = vmatprep.mubr.bf16.mxu0 0
    %3274 = vmatmul.mubr.bf16.gmra.mxu0 %v3195
    %v3275 = vpop.f32.mrf.mxu0
    %v3276 = vadd.f32 %v3235, %v3275
    %v3277 = vpop.f32.mrf.mxu0
    %v3278 = vadd.f32 %v3237, %v3277
    %v3279 = vpop.f32.mrf.mxu0
    %v3280 = vpop.f32.mrf.mxu0
    %3281 = vdwg.mxu0
    %v3282 = vadd.f32 %v3276, %v208
    %v3283 = vadd.f32 %v3278, %v212
    %v3284 = vxor.u32 %v3282, 2147483648
    %v3285 = vxor.u32 %v3283, 2147483648
    %v3286 = vmul.f32 %v3284, 1.442695
    %v3287 = vpow.pop %v3286
    %v3288 = vmul.f32 %v3285, 1.442695
    %v3289 = vpow.pop %v3288
    %v3290 = vadd.f32 %v3287, 1.0
    %v3291 = vadd.f32 %v3289, 1.0
    %v3292 = vrcp.pop %v3290
    %v3293 = vmul.f32 1.0, %v3292
    %v3294 = vrcp.pop %v3291
    %v3295 = vmul.f32 1.0, %v3294
    %v3296 = vtanh.pop %v3283
    %v3297 = vmul.f32 %v3293, %v2864
    %3299 = vrot.lane.b32.xlu0 %v3296, 64
    %v3300 = vpop.permute.xlu0 %3299
    %v3302 = vmul.f32 %v3293, %v3300
    %3304 = vrot.lane.b32.xlu0 %v3302, 64
    %v3305 = vpop.permute.xlu0 %3304
    %v3307 = vadd.f32 %v3297, %v3305
    %v3308 = vtanh.pop %v3307
    %3310 = vrot.lane.b32.xlu0 %v3308, 64
    %v3311 = vpop.permute.xlu0 %3310
    %v3313 = vmul.f32 %v3295, %v3311
    %v3314 = vpack.c.bf16 %v2995, %v2995
    %v3316 = vsel %vm280, %v3314, 0
    %3318 = vmatprep.subr.bf16.mxu0 0
    %3319 = vmatpush1.bf16.msra.mxu0 0
    %3320 = vmatprep.subr.bf16.mxu0 0
    %3321 = vmatpush1.bf16.msra.mxu0 0
    %3322 = vmatprep.subr.bf16.mxu0 0
    %3323 = vmatpush1.bf16.msra.mxu0 0
    %3324 = vmatprep.subr.bf16.mxu0 0
    %3325 = vmatpush1.bf16.msra.mxu0 0
    %3326 = vmatprep.subr.bf16.mxu0 %v271
    %3327 = vmatpush1.bf16.msra.mxu0 %v270
    %3328 = vmatprep.subr.bf16.mxu0 %v269
    %3329 = vmatpush1.bf16.msra.mxu0 %v268
    %3330 = vmatprep.subr.bf16.mxu0 %v267
    %3331 = vmatpush1.bf16.msra.mxu0 %v266
    %3332 = vmatprep.subr.bf16.mxu0 %v265
    %3333 = vmatpush1.bf16.msra.mxu0 %v264
    %3334 = vmatprep.subr.bf16.mxu0 0
    %3335 = vmatpush2.bf16.msra.mxu0 0
    %3336 = vmatprep.subr.bf16.mxu0 0
    %3337 = vmatpush2.bf16.msra.mxu0 0
    %3338 = vmatprep.subr.bf16.mxu0 0
    %3339 = vmatpush2.bf16.msra.mxu0 0
    %3340 = vmatprep.subr.bf16.mxu0 0
    %3341 = vmatpush2.bf16.msra.mxu0 0
    %3342 = vmatprep.subr.bf16.mxu0 0
    %3343 = vmatpush2.bf16.msra.mxu0 0
    %3344 = vmatprep.subr.bf16.mxu0 0
    %3345 = vmatpush2.bf16.msra.mxu0 0
    %3346 = vmatprep.subr.bf16.mxu0 0
    %3347 = vmatpush2.bf16.msra.mxu0 0
    %3348 = vmatprep.subr.bf16.mxu0 0
    %3349 = vmatpush2.bf16.msra.mxu0 0
    %3350 = vmatprep.mubr.bf16.mxu0 0
    %3351 = vmatmul.mubr.bf16.gmra.mxu0 %v3316
    %v3352 = vpop.f32.mrf.mxu0
    %v3353 = vadd.f32 0.0, %v3352
    %v3354 = vpop.f32.mrf.mxu0
    %v3355 = vadd.f32 0.0, %v3354
    %v3356 = vpop.f32.mrf.mxu0
    %v3357 = vpop.f32.mrf.mxu0
    %3358 = vdwg.mxu0
    %v3359 = vrot.slane %v327, 7
    %v3360 = vrot.slane %v328, 6
    %v3361 = vsel %vm330, %v3360, %v3359
    %v3362 = vpack.c.b16 %v3361, %v3361
    %v3364 = vsel %vm343, %v3362, 0
    %3366 = vmatprep.subr.bf16.mxu0 0
    %3367 = vmatpush1.bf16.msra.mxu0 0
    %3368 = vmatprep.subr.bf16.mxu0 0
    %3369 = vmatpush1.bf16.msra.mxu0 0
    %3370 = vmatprep.subr.bf16.mxu0 0
    %3371 = vmatpush1.bf16.msra.mxu0 0
    %3372 = vmatprep.subr.bf16.mxu0 0
    %3373 = vmatpush1.bf16.msra.mxu0 0
    %3374 = vmatprep.subr.bf16.mxu0 0
    %3375 = vmatpush1.bf16.msra.mxu0 0
    %3376 = vmatprep.subr.bf16.mxu0 0
    %3377 = vmatpush1.bf16.msra.mxu0 0
    %3378 = vmatprep.subr.bf16.mxu0 0
    %3379 = vmatpush1.bf16.msra.mxu0 0
    %3380 = vmatprep.subr.bf16.mxu0 %v340
    %3381 = vmatpush1.bf16.msra.mxu0 %v339
    %3382 = vmatprep.subr.bf16.mxu0 0
    %3383 = vmatpush2.bf16.msra.mxu0 0
    %3384 = vmatprep.subr.bf16.mxu0 0
    %3385 = vmatpush2.bf16.msra.mxu0 0
    %3386 = vmatprep.subr.bf16.mxu0 0
    %3387 = vmatpush2.bf16.msra.mxu0 0
    %3388 = vmatprep.subr.bf16.mxu0 0
    %3389 = vmatpush2.bf16.msra.mxu0 0
    %3390 = vmatprep.subr.bf16.mxu0 0
    %3391 = vmatpush2.bf16.msra.mxu0 0
    %3392 = vmatprep.subr.bf16.mxu0 0
    %3393 = vmatpush2.bf16.msra.mxu0 0
    %3394 = vmatprep.subr.bf16.mxu0 0
    %3395 = vmatpush2.bf16.msra.mxu0 0
    %3396 = vmatprep.subr.bf16.mxu0 0
    %3397 = vmatpush2.bf16.msra.mxu0 0
    %3398 = vmatprep.mubr.bf16.mxu0 0
    %3399 = vmatmul.mubr.bf16.gmra.mxu0 %v3364
    %v3400 = vpop.f32.mrf.mxu0
    %v3401 = vadd.f32 %v3353, %v3400
    %v3402 = vpop.f32.mrf.mxu0
    %v3403 = vadd.f32 %v3355, %v3402
    %v3404 = vpop.f32.mrf.mxu0
    %v3405 = vpop.f32.mrf.mxu0
    %3406 = vdwg.mxu0
    %v3407 = vadd.f32 %v3401, %v174
    %v3408 = vadd.f32 %v3403, %v178
    %v3409 = vxor.u32 %v3407, 2147483648
    %v3410 = vxor.u32 %v3408, 2147483648
    %v3411 = vmul.f32 %v3409, 1.442695
    %v3412 = vpow.pop %v3411
    %v3413 = vmul.f32 %v3410, 1.442695
    %v3414 = vpow.pop %v3413
    %v3415 = vadd.f32 %v3412, 1.0
    %v3416 = vadd.f32 %v3414, 1.0
    %v3417 = vrcp.pop %v3415
    %v3418 = vmul.f32 1.0, %v3417
    %v3419 = vrcp.pop %v3416
    %v3420 = vmul.f32 1.0, %v3419
    %v3421 = vtanh.pop %v3408
    %v3422 = vmul.f32 %v3418, %v2989
    %3424 = vrot.lane.b32.xlu0 %v3421, 64
    %v3425 = vpop.permute.xlu0 %3424
    %v3427 = vmul.f32 %v3418, %v3425
    %3429 = vrot.lane.b32.xlu0 %v3427, 64
    %v3430 = vpop.permute.xlu0 %3429
    %v3432 = vadd.f32 %v3422, %v3430
    %v3433 = vtanh.pop %v3432
    %3435 = vrot.lane.b32.xlu0 %v3433, 64
    %v3436 = vpop.permute.xlu0 %3435
    %v3438 = vmul.f32 %v3420, %v3436
    %v3439 = vmax.f32 %v3438, 0.0
    %v3440 = vpack.c.bf16 %v2996, %v2996
    %v3441 = vpack.c.bf16 %v3193, %v3193
    %3442 = vmatprep.subr.bf16.mxu0 %v672
    %3443 = vmatpush1.bf16.msra.mxu0 %v671
    %3444 = vmatprep.subr.bf16.mxu0 %v668
    %3445 = vmatpush1.bf16.msra.mxu0 %v667
    %3446 = vmatprep.subr.bf16.mxu0 %v664
    %3447 = vmatpush1.bf16.msra.mxu0 %v663
    %3448 = vmatprep.subr.bf16.mxu0 %v660
    %3449 = vmatpush1.bf16.msra.mxu0 %v659
    %3450 = vmatprep.subr.bf16.mxu0 %v656
    %3451 = vmatpush1.bf16.msra.mxu0 %v655
    %3452 = vmatprep.subr.bf16.mxu0 %v652
    %3453 = vmatpush1.bf16.msra.mxu0 %v651
    %3454 = vmatprep.subr.bf16.mxu0 %v648
    %3455 = vmatpush1.bf16.msra.mxu0 %v647
    %3456 = vmatprep.subr.bf16.mxu0 %v644
    %3457 = vmatpush1.bf16.msra.mxu0 %v643
    %3458 = vmatprep.subr.bf16.mxu0 0
    %3459 = vmatpush2.bf16.msra.mxu0 0
    %3460 = vmatprep.subr.bf16.mxu0 0
    %3461 = vmatpush2.bf16.msra.mxu0 0
    %3462 = vmatprep.subr.bf16.mxu0 0
    %3463 = vmatpush2.bf16.msra.mxu0 0
    %3464 = vmatprep.subr.bf16.mxu0 0
    %3465 = vmatpush2.bf16.msra.mxu0 0
    %3466 = vmatprep.subr.bf16.mxu0 0
    %3467 = vmatpush2.bf16.msra.mxu0 0
    %3468 = vmatprep.subr.bf16.mxu0 0
    %3469 = vmatpush2.bf16.msra.mxu0 0
    %3470 = vmatprep.subr.bf16.mxu0 0
    %3471 = vmatpush2.bf16.msra.mxu0 0
    %3472 = vmatprep.subr.bf16.mxu0 0
    %3473 = vmatpush2.bf16.msra.mxu0 0
    %3474 = vmatprep.mubr.bf16.mxu0 0
    %3475 = vmatmul.mubr.bf16.gmra.mxu0 %v3441
    %v3476 = vpop.f32.mrf.mxu0
    %v3477 = vadd.f32 0.0, %v3476
    %v3478 = vpop.f32.mrf.mxu0
    %v3479 = vadd.f32 0.0, %v3478
    %v3480 = vpop.f32.mrf.mxu0
    %v3481 = vpop.f32.mrf.mxu0
    %3482 = vdwg.mxu0
    %3483 = vmatprep.subr.bf16.mxu0 %v674
    %3484 = vmatpush1.bf16.msra.mxu0 %v673
    %3485 = vmatprep.subr.bf16.mxu0 %v670
    %3486 = vmatpush1.bf16.msra.mxu0 %v669
    %3487 = vmatprep.subr.bf16.mxu0 %v666
    %3488 = vmatpush1.bf16.msra.mxu0 %v665
    %3489 = vmatprep.subr.bf16.mxu0 %v662
    %3490 = vmatpush1.bf16.msra.mxu0 %v661
    %3491 = vmatprep.subr.bf16.mxu0 %v658
    %3492 = vmatpush1.bf16.msra.mxu0 %v657
    %3493 = vmatprep.subr.bf16.mxu0 %v654
    %3494 = vmatpush1.bf16.msra.mxu0 %v653
    %3495 = vmatprep.subr.bf16.mxu0 %v650
    %3496 = vmatpush1.bf16.msra.mxu0 %v649
    %3497 = vmatprep.subr.bf16.mxu0 %v646
    %3498 = vmatpush1.bf16.msra.mxu0 %v645
    %3499 = vmatprep.subr.bf16.mxu0 0
    %3500 = vmatpush2.bf16.msra.mxu0 0
    %3501 = vmatprep.subr.bf16.mxu0 0
    %3502 = vmatpush2.bf16.msra.mxu0 0
    %3503 = vmatprep.subr.bf16.mxu0 0
    %3504 = vmatpush2.bf16.msra.mxu0 0
    %3505 = vmatprep.subr.bf16.mxu0 0
    %3506 = vmatpush2.bf16.msra.mxu0 0
    %3507 = vmatprep.subr.bf16.mxu0 0
    %3508 = vmatpush2.bf16.msra.mxu0 0
    %3509 = vmatprep.subr.bf16.mxu0 0
    %3510 = vmatpush2.bf16.msra.mxu0 0
    %3511 = vmatprep.subr.bf16.mxu0 0
    %3512 = vmatpush2.bf16.msra.mxu0 0
    %3513 = vmatprep.subr.bf16.mxu0 0
    %3514 = vmatpush2.bf16.msra.mxu0 0
    %3515 = vmatprep.mubr.bf16.mxu0 0
    %3516 = vmatmul.mubr.bf16.gmra.mxu0 %v3441
    %v3517 = vpop.f32.mrf.mxu0
    %v3518 = vadd.f32 0.0, %v3517
    %v3519 = vpop.f32.mrf.mxu0
    %v3520 = vadd.f32 0.0, %v3519
    %v3521 = vpop.f32.mrf.mxu0
    %v3522 = vpop.f32.mrf.mxu0
    %3523 = vdwg.mxu0
    %v3525 = vsel %vm280, %v3440, 0
    %3527 = vmatprep.subr.bf16.mxu0 0
    %3528 = vmatpush1.bf16.msra.mxu0 0
    %3529 = vmatprep.subr.bf16.mxu0 0
    %3530 = vmatpush1.bf16.msra.mxu0 0
    %3531 = vmatprep.subr.bf16.mxu0 0
    %3532 = vmatpush1.bf16.msra.mxu0 0
    %3533 = vmatprep.subr.bf16.mxu0 0
    %3534 = vmatpush1.bf16.msra.mxu0 0
    %3535 = vmatprep.subr.bf16.mxu0 %v850
    %3536 = vmatpush1.bf16.msra.mxu0 %v849
    %3537 = vmatprep.subr.bf16.mxu0 %v846
    %3538 = vmatpush1.bf16.msra.mxu0 %v845
    %3539 = vmatprep.subr.bf16.mxu0 %v842
    %3540 = vmatpush1.bf16.msra.mxu0 %v841
    %3541 = vmatprep.subr.bf16.mxu0 %v838
    %3542 = vmatpush1.bf16.msra.mxu0 %v837
    %3543 = vmatprep.subr.bf16.mxu0 0
    %3544 = vmatpush2.bf16.msra.mxu0 0
    %3545 = vmatprep.subr.bf16.mxu0 0
    %3546 = vmatpush2.bf16.msra.mxu0 0
    %3547 = vmatprep.subr.bf16.mxu0 0
    %3548 = vmatpush2.bf16.msra.mxu0 0
    %3549 = vmatprep.subr.bf16.mxu0 0
    %3550 = vmatpush2.bf16.msra.mxu0 0
    %3551 = vmatprep.subr.bf16.mxu0 0
    %3552 = vmatpush2.bf16.msra.mxu0 0
    %3553 = vmatprep.subr.bf16.mxu0 0
    %3554 = vmatpush2.bf16.msra.mxu0 0
    %3555 = vmatprep.subr.bf16.mxu0 0
    %3556 = vmatpush2.bf16.msra.mxu0 0
    %3557 = vmatprep.subr.bf16.mxu0 0
    %3558 = vmatpush2.bf16.msra.mxu0 0
    %3559 = vmatprep.mubr.bf16.mxu0 0
    %3560 = vmatmul.mubr.bf16.gmra.mxu0 %v3525
    %v3561 = vpop.f32.mrf.mxu0
    %v3562 = vadd.f32 %v3477, %v3561
    %v3563 = vpop.f32.mrf.mxu0
    %v3564 = vadd.f32 %v3479, %v3563
    %v3565 = vpop.f32.mrf.mxu0
    %v3566 = vpop.f32.mrf.mxu0
    %3567 = vdwg.mxu0
    %3568 = vmatprep.subr.bf16.mxu0 0
    %3569 = vmatpush1.bf16.msra.mxu0 0
    %3570 = vmatprep.subr.bf16.mxu0 0
    %3571 = vmatpush1.bf16.msra.mxu0 0
    %3572 = vmatprep.subr.bf16.mxu0 0
    %3573 = vmatpush1.bf16.msra.mxu0 0
    %3574 = vmatprep.subr.bf16.mxu0 0
    %3575 = vmatpush1.bf16.msra.mxu0 0
    %3576 = vmatprep.subr.bf16.mxu0 %v852
    %3577 = vmatpush1.bf16.msra.mxu0 %v851
    %3578 = vmatprep.subr.bf16.mxu0 %v848
    %3579 = vmatpush1.bf16.msra.mxu0 %v847
    %3580 = vmatprep.subr.bf16.mxu0 %v844
    %3581 = vmatpush1.bf16.msra.mxu0 %v843
    %3582 = vmatprep.subr.bf16.mxu0 %v840
    %3583 = vmatpush1.bf16.msra.mxu0 %v839
    %3584 = vmatprep.subr.bf16.mxu0 0
    %3585 = vmatpush2.bf16.msra.mxu0 0
    %3586 = vmatprep.subr.bf16.mxu0 0
    %3587 = vmatpush2.bf16.msra.mxu0 0
    %3588 = vmatprep.subr.bf16.mxu0 0
    %3589 = vmatpush2.bf16.msra.mxu0 0
    %3590 = vmatprep.subr.bf16.mxu0 0
    %3591 = vmatpush2.bf16.msra.mxu0 0
    %3592 = vmatprep.subr.bf16.mxu0 0
    %3593 = vmatpush2.bf16.msra.mxu0 0
    %3594 = vmatprep.subr.bf16.mxu0 0
    %3595 = vmatpush2.bf16.msra.mxu0 0
    %3596 = vmatprep.subr.bf16.mxu0 0
    %3597 = vmatpush2.bf16.msra.mxu0 0
    %3598 = vmatprep.subr.bf16.mxu0 0
    %3599 = vmatpush2.bf16.msra.mxu0 0
    %3600 = vmatprep.mubr.bf16.mxu0 0
    %3601 = vmatmul.mubr.bf16.gmra.mxu0 %v3525
    %v3602 = vpop.f32.mrf.mxu0
    %v3603 = vadd.f32 %v3518, %v3602
    %v3604 = vpop.f32.mrf.mxu0
    %v3605 = vadd.f32 %v3520, %v3604
    %v3606 = vpop.f32.mrf.mxu0
    %v3607 = vpop.f32.mrf.mxu0
    %3608 = vdwg.mxu0
    %v3609 = vadd.f32 %v3562, %v186
    %v3610 = vadd.f32 %v3564, %v190
    %v3611 = vadd.f32 %v3603, %v194
    %v3612 = vadd.f32 %v3605, %v198
    %v3613 = vxor.u32 %v3609, 2147483648
    %v3614 = vxor.u32 %v3610, 2147483648
    %v3615 = vxor.u32 %v3611, 2147483648
    %v3616 = vmul.f32 %v3613, 1.442695
    %v3617 = vpow.pop %v3616
    %v3618 = vmul.f32 %v3614, 1.442695
    %v3619 = vpow.pop %v3618
    %v3620 = vmul.f32 %v3615, 1.442695
    %v3621 = vpow.pop %v3620
    %v3622 = vadd.f32 %v3617, 1.0
    %v3623 = vadd.f32 %v3619, 1.0
    %v3624 = vadd.f32 %v3621, 1.0
    %v3625 = vrcp.pop %v3622
    %v3626 = vmul.f32 1.0, %v3625
    %v3627 = vrcp.pop %v3623
    %v3628 = vmul.f32 1.0, %v3627
    %v3629 = vrcp.pop %v3624
    %v3630 = vmul.f32 1.0, %v3629
    %v3631 = vtanh.pop %v3612
    %v3632 = vmul.f32 %v3628, %v3191
    %v3633 = vmul.f32 %v3626, %v3631
    %v3634 = vadd.f32 %v3632, %v3633
    %v3635 = vtanh.pop %v3634
    %v3636 = vmul.f32 %v3630, %v3635
    %v3637 = vmax.f32 %v3636, 0.0
    %v3638 = vpack.c.bf16 %v3194, %v3194
    %v3639 = vpack.c.bf16 %v3313, %v3313
    %v3641 = vsel %vm280, %v3639, 0
    %3643 = vmatprep.subr.bf16.mxu0 0
    %3644 = vmatpush1.bf16.msra.mxu0 0
    %3645 = vmatprep.subr.bf16.mxu0 0
    %3646 = vmatpush1.bf16.msra.mxu0 0
    %3647 = vmatprep.subr.bf16.mxu0 0
    %3648 = vmatpush1.bf16.msra.mxu0 0
    %3649 = vmatprep.subr.bf16.mxu0 0
    %3650 = vmatpush1.bf16.msra.mxu0 0
    %3651 = vmatprep.subr.bf16.mxu0 %v1339
    %3652 = vmatpush1.bf16.msra.mxu0 %v1338
    %3653 = vmatprep.subr.bf16.mxu0 %v1337
    %3654 = vmatpush1.bf16.msra.mxu0 %v1336
    %3655 = vmatprep.subr.bf16.mxu0 %v1335
    %3656 = vmatpush1.bf16.msra.mxu0 %v1334
    %3657 = vmatprep.subr.bf16.mxu0 %v1333
    %3658 = vmatpush1.bf16.msra.mxu0 %v1332
    %3659 = vmatprep.subr.bf16.mxu0 0
    %3660 = vmatpush2.bf16.msra.mxu0 0
    %3661 = vmatprep.subr.bf16.mxu0 0
    %3662 = vmatpush2.bf16.msra.mxu0 0
    %3663 = vmatprep.subr.bf16.mxu0 0
    %3664 = vmatpush2.bf16.msra.mxu0 0
    %3665 = vmatprep.subr.bf16.mxu0 0
    %3666 = vmatpush2.bf16.msra.mxu0 0
    %3667 = vmatprep.subr.bf16.mxu0 0
    %3668 = vmatpush2.bf16.msra.mxu0 0
    %3669 = vmatprep.subr.bf16.mxu0 0
    %3670 = vmatpush2.bf16.msra.mxu0 0
    %3671 = vmatprep.subr.bf16.mxu0 0
    %3672 = vmatpush2.bf16.msra.mxu0 0
    %3673 = vmatprep.subr.bf16.mxu0 0
    %3674 = vmatpush2.bf16.msra.mxu0 0
    %3675 = vmatprep.mubr.bf16.mxu0 0
    %3676 = vmatmul.mubr.bf16.gmra.mxu0 %v3641
    %v3677 = vpop.f32.mrf.mxu0
    %v3678 = vadd.f32 0.0, %v3677
    %v3679 = vpop.f32.mrf.mxu0
    %v3680 = vadd.f32 0.0, %v3679
    %v3681 = vpop.f32.mrf.mxu0
    %v3682 = vpop.f32.mrf.mxu0
    %3683 = vdwg.mxu0
    %3684 = vmatprep.subr.bf16.mxu0 %v1452
    %3685 = vmatpush1.bf16.msra.mxu0 %v1451
    %3686 = vmatprep.subr.bf16.mxu0 %v1450
    %3687 = vmatpush1.bf16.msra.mxu0 %v1449
    %3688 = vmatprep.subr.bf16.mxu0 %v1448
    %3689 = vmatpush1.bf16.msra.mxu0 %v1447
    %3690 = vmatprep.subr.bf16.mxu0 %v1446
    %3691 = vmatpush1.bf16.msra.mxu0 %v1445
    %3692 = vmatprep.subr.bf16.mxu0 %v1444
    %3693 = vmatpush1.bf16.msra.mxu0 %v1443
    %3694 = vmatprep.subr.bf16.mxu0 %v1442
    %3695 = vmatpush1.bf16.msra.mxu0 %v1441
    %3696 = vmatprep.subr.bf16.mxu0 %v1440
    %3697 = vmatpush1.bf16.msra.mxu0 %v1439
    %3698 = vmatprep.subr.bf16.mxu0 %v1438
    %3699 = vmatpush1.bf16.msra.mxu0 %v1437
    %3700 = vmatprep.subr.bf16.mxu0 0
    %3701 = vmatpush2.bf16.msra.mxu0 0
    %3702 = vmatprep.subr.bf16.mxu0 0
    %3703 = vmatpush2.bf16.msra.mxu0 0
    %3704 = vmatprep.subr.bf16.mxu0 0
    %3705 = vmatpush2.bf16.msra.mxu0 0
    %3706 = vmatprep.subr.bf16.mxu0 0
    %3707 = vmatpush2.bf16.msra.mxu0 0
    %3708 = vmatprep.subr.bf16.mxu0 0
    %3709 = vmatpush2.bf16.msra.mxu0 0
    %3710 = vmatprep.subr.bf16.mxu0 0
    %3711 = vmatpush2.bf16.msra.mxu0 0
    %3712 = vmatprep.subr.bf16.mxu0 0
    %3713 = vmatpush2.bf16.msra.mxu0 0
    %3714 = vmatprep.subr.bf16.mxu0 0
    %3715 = vmatpush2.bf16.msra.mxu0 0
    %3716 = vmatprep.mubr.bf16.mxu0 0
    %3717 = vmatmul.mubr.bf16.gmra.mxu0 %v3638
    %v3718 = vpop.f32.mrf.mxu0
    %v3719 = vadd.f32 %v3678, %v3718
    %v3720 = vpop.f32.mrf.mxu0
    %v3721 = vadd.f32 %v3680, %v3720
    %v3722 = vpop.f32.mrf.mxu0
    %v3723 = vpop.f32.mrf.mxu0
    %3724 = vdwg.mxu0
    %v3725 = vadd.f32 %v3719, %v208
    %v3726 = vadd.f32 %v3721, %v212
    %v3727 = vxor.u32 %v3725, 2147483648
    %v3728 = vxor.u32 %v3726, 2147483648
    %v3729 = vmul.f32 %v3727, 1.442695
    %v3730 = vpow.pop %v3729
    %v3731 = vmul.f32 %v3728, 1.442695
    %v3732 = vpow.pop %v3731
    %v3733 = vadd.f32 %v3730, 1.0
    %v3734 = vadd.f32 %v3732, 1.0
    %v3735 = vrcp.pop %v3733
    %v3736 = vmul.f32 1.0, %v3735
    %v3737 = vrcp.pop %v3734
    %v3738 = vmul.f32 1.0, %v3737
    %v3739 = vtanh.pop %v3726
    %v3740 = vmul.f32 %v3736, %v3307
    %3742 = vrot.lane.b32.xlu0 %v3739, 64
    %v3743 = vpop.permute.xlu0 %3742
    %v3745 = vmul.f32 %v3736, %v3743
    %3747 = vrot.lane.b32.xlu0 %v3745, 64
    %v3748 = vpop.permute.xlu0 %3747
    %v3750 = vadd.f32 %v3740, %v3748
    %v3751 = vtanh.pop %v3750
    %3753 = vrot.lane.b32.xlu0 %v3751, 64
    %v3754 = vpop.permute.xlu0 %3753
    %v3756 = vmul.f32 %v3738, %v3754
    %v3757 = vpack.c.bf16 %v3439, %v3439
    %v3758 = vpack.c.bf16 %v3636, %v3636
    %3759 = vmatprep.subr.bf16.mxu0 %v672
    %3760 = vmatpush1.bf16.msra.mxu0 %v671
    %3761 = vmatprep.subr.bf16.mxu0 %v668
    %3762 = vmatpush1.bf16.msra.mxu0 %v667
    %3763 = vmatprep.subr.bf16.mxu0 %v664
    %3764 = vmatpush1.bf16.msra.mxu0 %v663
    %3765 = vmatprep.subr.bf16.mxu0 %v660
    %3766 = vmatpush1.bf16.msra.mxu0 %v659
    %3767 = vmatprep.subr.bf16.mxu0 %v656
    %3768 = vmatpush1.bf16.msra.mxu0 %v655
    %3769 = vmatprep.subr.bf16.mxu0 %v652
    %3770 = vmatpush1.bf16.msra.mxu0 %v651
    %3771 = vmatprep.subr.bf16.mxu0 %v648
    %3772 = vmatpush1.bf16.msra.mxu0 %v647
    %3773 = vmatprep.subr.bf16.mxu0 %v644
    %3774 = vmatpush1.bf16.msra.mxu0 %v643
    %3775 = vmatprep.subr.bf16.mxu0 0
    %3776 = vmatpush2.bf16.msra.mxu0 0
    %3777 = vmatprep.subr.bf16.mxu0 0
    %3778 = vmatpush2.bf16.msra.mxu0 0
    %3779 = vmatprep.subr.bf16.mxu0 0
    %3780 = vmatpush2.bf16.msra.mxu0 0
    %3781 = vmatprep.subr.bf16.mxu0 0
    %3782 = vmatpush2.bf16.msra.mxu0 0
    %3783 = vmatprep.subr.bf16.mxu0 0
    %3784 = vmatpush2.bf16.msra.mxu0 0
    %3785 = vmatprep.subr.bf16.mxu0 0
    %3786 = vmatpush2.bf16.msra.mxu0 0
    %3787 = vmatprep.subr.bf16.mxu0 0
    %3788 = vmatpush2.bf16.msra.mxu0 0
    %3789 = vmatprep.subr.bf16.mxu0 0
    %3790 = vmatpush2.bf16.msra.mxu0 0
    %3791 = vmatprep.mubr.bf16.mxu0 0
    %3792 = vmatmul.mubr.bf16.gmra.mxu0 %v3758
    %v3793 = vpop.f32.mrf.mxu0
    %v3794 = vadd.f32 0.0, %v3793
    %v3795 = vpop.f32.mrf.mxu0
    %v3796 = vadd.f32 0.0, %v3795
    %v3797 = vpop.f32.mrf.mxu0
    %v3798 = vpop.f32.mrf.mxu0
    %3799 = vdwg.mxu0
    %3800 = vmatprep.subr.bf16.mxu0 %v674
    %3801 = vmatpush1.bf16.msra.mxu0 %v673
    %3802 = vmatprep.subr.bf16.mxu0 %v670
    %3803 = vmatpush1.bf16.msra.mxu0 %v669
    %3804 = vmatprep.subr.bf16.mxu0 %v666
    %3805 = vmatpush1.bf16.msra.mxu0 %v665
    %3806 = vmatprep.subr.bf16.mxu0 %v662
    %3807 = vmatpush1.bf16.msra.mxu0 %v661
    %3808 = vmatprep.subr.bf16.mxu0 %v658
    %3809 = vmatpush1.bf16.msra.mxu0 %v657
    %3810 = vmatprep.subr.bf16.mxu0 %v654
    %3811 = vmatpush1.bf16.msra.mxu0 %v653
    %3812 = vmatprep.subr.bf16.mxu0 %v650
    %3813 = vmatpush1.bf16.msra.mxu0 %v649
    %3814 = vmatprep.subr.bf16.mxu0 %v646
    %3815 = vmatpush1.bf16.msra.mxu0 %v645
    %3816 = vmatprep.subr.bf16.mxu0 0
    %3817 = vmatpush2.bf16.msra.mxu0 0
    %3818 = vmatprep.subr.bf16.mxu0 0
    %3819 = vmatpush2.bf16.msra.mxu0 0
    %3820 = vmatprep.subr.bf16.mxu0 0
    %3821 = vmatpush2.bf16.msra.mxu0 0
    %3822 = vmatprep.subr.bf16.mxu0 0
    %3823 = vmatpush2.bf16.msra.mxu0 0
    %3824 = vmatprep.subr.bf16.mxu0 0
    %3825 = vmatpush2.bf16.msra.mxu0 0
    %3826 = vmatprep.subr.bf16.mxu0 0
    %3827 = vmatpush2.bf16.msra.mxu0 0
    %3828 = vmatprep.subr.bf16.mxu0 0
    %3829 = vmatpush2.bf16.msra.mxu0 0
    %3830 = vmatprep.subr.bf16.mxu0 0
    %3831 = vmatpush2.bf16.msra.mxu0 0
    %3832 = vmatprep.mubr.bf16.mxu0 0
    %3833 = vmatmul.mubr.bf16.gmra.mxu0 %v3758
    %v3834 = vpop.f32.mrf.mxu0
    %v3835 = vadd.f32 0.0, %v3834
    %v3836 = vpop.f32.mrf.mxu0
    %v3837 = vadd.f32 0.0, %v3836
    %v3838 = vpop.f32.mrf.mxu0
    %v3839 = vpop.f32.mrf.mxu0
    %3840 = vdwg.mxu0
    %v3842 = vsel %vm280, %v3757, 0
    %3844 = vmatprep.subr.bf16.mxu0 0
    %3845 = vmatpush1.bf16.msra.mxu0 0
    %3846 = vmatprep.subr.bf16.mxu0 0
    %3847 = vmatpush1.bf16.msra.mxu0 0
    %3848 = vmatprep.subr.bf16.mxu0 0
    %3849 = vmatpush1.bf16.msra.mxu0 0
    %3850 = vmatprep.subr.bf16.mxu0 0
    %3851 = vmatpush1.bf16.msra.mxu0 0
    %3852 = vmatprep.subr.bf16.mxu0 %v850
    %3853 = vmatpush1.bf16.msra.mxu0 %v849
    %3854 = vmatprep.subr.bf16.mxu0 %v846
    %3855 = vmatpush1.bf16.msra.mxu0 %v845
    %3856 = vmatprep.subr.bf16.mxu0 %v842
    %3857 = vmatpush1.bf16.msra.mxu0 %v841
    %3858 = vmatprep.subr.bf16.mxu0 %v838
    %3859 = vmatpush1.bf16.msra.mxu0 %v837
    %3860 = vmatprep.subr.bf16.mxu0 0
    %3861 = vmatpush2.bf16.msra.mxu0 0
    %3862 = vmatprep.subr.bf16.mxu0 0
    %3863 = vmatpush2.bf16.msra.mxu0 0
    %3864 = vmatprep.subr.bf16.mxu0 0
    %3865 = vmatpush2.bf16.msra.mxu0 0
    %3866 = vmatprep.subr.bf16.mxu0 0
    %3867 = vmatpush2.bf16.msra.mxu0 0
    %3868 = vmatprep.subr.bf16.mxu0 0
    %3869 = vmatpush2.bf16.msra.mxu0 0
    %3870 = vmatprep.subr.bf16.mxu0 0
    %3871 = vmatpush2.bf16.msra.mxu0 0
    %3872 = vmatprep.subr.bf16.mxu0 0
    %3873 = vmatpush2.bf16.msra.mxu0 0
    %3874 = vmatprep.subr.bf16.mxu0 0
    %3875 = vmatpush2.bf16.msra.mxu0 0
    %3876 = vmatprep.mubr.bf16.mxu0 0
    %3877 = vmatmul.mubr.bf16.gmra.mxu0 %v3842
    %v3878 = vpop.f32.mrf.mxu0
    %v3879 = vadd.f32 %v3794, %v3878
    %v3880 = vpop.f32.mrf.mxu0
    %v3881 = vadd.f32 %v3796, %v3880
    %v3882 = vpop.f32.mrf.mxu0
    %v3883 = vpop.f32.mrf.mxu0
    %3884 = vdwg.mxu0
    %3885 = vmatprep.subr.bf16.mxu0 0
    %3886 = vmatpush1.bf16.msra.mxu0 0
    %3887 = vmatprep.subr.bf16.mxu0 0
    %3888 = vmatpush1.bf16.msra.mxu0 0
    %3889 = vmatprep.subr.bf16.mxu0 0
    %3890 = vmatpush1.bf16.msra.mxu0 0
    %3891 = vmatprep.subr.bf16.mxu0 0
    %3892 = vmatpush1.bf16.msra.mxu0 0
    %3893 = vmatprep.subr.bf16.mxu0 %v852
    %3894 = vmatpush1.bf16.msra.mxu0 %v851
    %3895 = vmatprep.subr.bf16.mxu0 %v848
    %3896 = vmatpush1.bf16.msra.mxu0 %v847
    %3897 = vmatprep.subr.bf16.mxu0 %v844
    %3898 = vmatpush1.bf16.msra.mxu0 %v843
    %3899 = vmatprep.subr.bf16.mxu0 %v840
    %3900 = vmatpush1.bf16.msra.mxu0 %v839
    %3901 = vmatprep.subr.bf16.mxu0 0
    %3902 = vmatpush2.bf16.msra.mxu0 0
    %3903 = vmatprep.subr.bf16.mxu0 0
    %3904 = vmatpush2.bf16.msra.mxu0 0
    %3905 = vmatprep.subr.bf16.mxu0 0
    %3906 = vmatpush2.bf16.msra.mxu0 0
    %3907 = vmatprep.subr.bf16.mxu0 0
    %3908 = vmatpush2.bf16.msra.mxu0 0
    %3909 = vmatprep.subr.bf16.mxu0 0
    %3910 = vmatpush2.bf16.msra.mxu0 0
    %3911 = vmatprep.subr.bf16.mxu0 0
    %3912 = vmatpush2.bf16.msra.mxu0 0
    %3913 = vmatprep.subr.bf16.mxu0 0
    %3914 = vmatpush2.bf16.msra.mxu0 0
    %3915 = vmatprep.subr.bf16.mxu0 0
    %3916 = vmatpush2.bf16.msra.mxu0 0
    %3917 = vmatprep.mubr.bf16.mxu0 0
    %3918 = vmatmul.mubr.bf16.gmra.mxu0 %v3842
    %v3919 = vpop.f32.mrf.mxu0
    %v3920 = vadd.f32 %v3835, %v3919
    %v3921 = vpop.f32.mrf.mxu0
    %v3922 = vadd.f32 %v3837, %v3921
    %v3923 = vpop.f32.mrf.mxu0
    %v3924 = vpop.f32.mrf.mxu0
    %3925 = vdwg.mxu0
    %v3926 = vadd.f32 %v3879, %v186
    %v3927 = vadd.f32 %v3881, %v190
    %v3928 = vadd.f32 %v3920, %v194
    %v3929 = vadd.f32 %v3922, %v198
    %v3930 = vxor.u32 %v3926, 2147483648
    %v3931 = vxor.u32 %v3927, 2147483648
    %v3932 = vxor.u32 %v3928, 2147483648
    %v3933 = vmul.f32 %v3930, 1.442695
    %v3934 = vpow.pop %v3933
    %v3935 = vmul.f32 %v3931, 1.442695
    %v3936 = vpow.pop %v3935
    %v3937 = vmul.f32 %v3932, 1.442695
    %v3938 = vpow.pop %v3937
    %v3939 = vadd.f32 %v3934, 1.0
    %v3940 = vadd.f32 %v3936, 1.0
    %v3941 = vadd.f32 %v3938, 1.0
    %v3942 = vrcp.pop %v3939
    %v3943 = vmul.f32 1.0, %v3942
    %v3944 = vrcp.pop %v3940
    %v3945 = vmul.f32 1.0, %v3944
    %v3946 = vrcp.pop %v3941
    %v3947 = vmul.f32 1.0, %v3946
    %v3948 = vtanh.pop %v3929
    %v3949 = vmul.f32 %v3945, %v3634
    %v3950 = vmul.f32 %v3943, %v3948
    %v3951 = vadd.f32 %v3949, %v3950
    %v3952 = vtanh.pop %v3951
    %v3953 = vmul.f32 %v3947, %v3952
    %v3954 = vmax.f32 %v3953, 0.0
    %v3955 = vpack.c.bf16 %v3637, %v3637
    %v3956 = vpack.c.bf16 %v3756, %v3756
    %v3958 = vsel %vm280, %v3956, 0
    %3960 = vmatprep.subr.bf16.mxu0 0
    %3961 = vmatpush1.bf16.msra.mxu0 0
    %3962 = vmatprep.subr.bf16.mxu0 0
    %3963 = vmatpush1.bf16.msra.mxu0 0
    %3964 = vmatprep.subr.bf16.mxu0 0
    %3965 = vmatpush1.bf16.msra.mxu0 0
    %3966 = vmatprep.subr.bf16.mxu0 0
    %3967 = vmatpush1.bf16.msra.mxu0 0
    %3968 = vmatprep.subr.bf16.mxu0 %v1339
    %3969 = vmatpush1.bf16.msra.mxu0 %v1338
    %3970 = vmatprep.subr.bf16.mxu0 %v1337
    %3971 = vmatpush1.bf16.msra.mxu0 %v1336
    %3972 = vmatprep.subr.bf16.mxu0 %v1335
    %3973 = vmatpush1.bf16.msra.mxu0 %v1334
    %3974 = vmatprep.subr.bf16.mxu0 %v1333
    %3975 = vmatpush1.bf16.msra.mxu0 %v1332
    %3976 = vmatprep.subr.bf16.mxu0 0
    %3977 = vmatpush2.bf16.msra.mxu0 0
    %3978 = vmatprep.subr.bf16.mxu0 0
    %3979 = vmatpush2.bf16.msra.mxu0 0
    %3980 = vmatprep.subr.bf16.mxu0 0
    %3981 = vmatpush2.bf16.msra.mxu0 0
    %3982 = vmatprep.subr.bf16.mxu0 0
    %3983 = vmatpush2.bf16.msra.mxu0 0
    %3984 = vmatprep.subr.bf16.mxu0 0
    %3985 = vmatpush2.bf16.msra.mxu0 0
    %3986 = vmatprep.subr.bf16.mxu0 0
    %3987 = vmatpush2.bf16.msra.mxu0 0
    %3988 = vmatprep.subr.bf16.mxu0 0
    %3989 = vmatpush2.bf16.msra.mxu0 0
    %3990 = vmatprep.subr.bf16.mxu0 0
    %3991 = vmatpush2.bf16.msra.mxu0 0
    %3992 = vmatprep.mubr.bf16.mxu0 0
    %3993 = vmatmul.mubr.bf16.gmra.mxu0 %v3958
    %v3994 = vpop.f32.mrf.mxu0
    %v3995 = vadd.f32 0.0, %v3994
    %v3996 = vpop.f32.mrf.mxu0
    %v3997 = vadd.f32 0.0, %v3996
    %v3998 = vpop.f32.mrf.mxu0
    %v3999 = vpop.f32.mrf.mxu0
    %4000 = vdwg.mxu0
    %4001 = vmatprep.subr.bf16.mxu0 %v1452
    %4002 = vmatpush1.bf16.msra.mxu0 %v1451
    %4003 = vmatprep.subr.bf16.mxu0 %v1450
    %4004 = vmatpush1.bf16.msra.mxu0 %v1449
    %4005 = vmatprep.subr.bf16.mxu0 %v1448
    %4006 = vmatpush1.bf16.msra.mxu0 %v1447
    %4007 = vmatprep.subr.bf16.mxu0 %v1446
    %4008 = vmatpush1.bf16.msra.mxu0 %v1445
    %4009 = vmatprep.subr.bf16.mxu0 %v1444
    %4010 = vmatpush1.bf16.msra.mxu0 %v1443
    %4011 = vmatprep.subr.bf16.mxu0 %v1442
    %4012 = vmatpush1.bf16.msra.mxu0 %v1441
    %4013 = vmatprep.subr.bf16.mxu0 %v1440
    %4014 = vmatpush1.bf16.msra.mxu0 %v1439
    %4015 = vmatprep.subr.bf16.mxu0 %v1438
    %4016 = vmatpush1.bf16.msra.mxu0 %v1437
    %4017 = vmatprep.subr.bf16.mxu0 0
    %4018 = vmatpush2.bf16.msra.mxu0 0
    %4019 = vmatprep.subr.bf16.mxu0 0
    %4020 = vmatpush2.bf16.msra.mxu0 0
    %4021 = vmatprep.subr.bf16.mxu0 0
    %4022 = vmatpush2.bf16.msra.mxu0 0
    %4023 = vmatprep.subr.bf16.mxu0 0
    %4024 = vmatpush2.bf16.msra.mxu0 0
    %4025 = vmatprep.subr.bf16.mxu0 0
    %4026 = vmatpush2.bf16.msra.mxu0 0
    %4027 = vmatprep.subr.bf16.mxu0 0
    %4028 = vmatpush2.bf16.msra.mxu0 0
    %4029 = vmatprep.subr.bf16.mxu0 0
    %4030 = vmatpush2.bf16.msra.mxu0 0
    %4031 = vmatprep.subr.bf16.mxu0 0
    %4032 = vmatpush2.bf16.msra.mxu0 0
    %4033 = vmatprep.mubr.bf16.mxu0 0
    %4034 = vmatmul.mubr.bf16.gmra.mxu0 %v3955
    %v4035 = vpop.f32.mrf.mxu0
    %v4036 = vadd.f32 %v3995, %v4035
    %v4037 = vpop.f32.mrf.mxu0
    %v4038 = vadd.f32 %v3997, %v4037
    %v4039 = vpop.f32.mrf.mxu0
    %v4040 = vpop.f32.mrf.mxu0
    %4041 = vdwg.mxu0
    %v4042 = vadd.f32 %v4036, %v208
    %v4043 = vadd.f32 %v4038, %v212
    %v4044 = vxor.u32 %v4042, 2147483648
    %v4045 = vxor.u32 %v4043, 2147483648
    %v4046 = vmul.f32 %v4044, 1.442695
    %v4047 = vpow.pop %v4046
    %v4048 = vmul.f32 %v4045, 1.442695
    %v4049 = vpow.pop %v4048
    %v4050 = vadd.f32 %v4047, 1.0
    %v4051 = vadd.f32 %v4049, 1.0
    %v4052 = vrcp.pop %v4050
    %v4053 = vmul.f32 1.0, %v4052
    %v4054 = vrcp.pop %v4051
    %v4055 = vmul.f32 1.0, %v4054
    %v4056 = vtanh.pop %v4043
    %v4057 = vmul.f32 %v4053, %v3750
    %4059 = vrot.lane.b32.xlu0 %v4056, 64
    %v4060 = vpop.permute.xlu0 %4059
    %v4062 = vmul.f32 %v4053, %v4060
    %4064 = vrot.lane.b32.xlu0 %v4062, 64
    %v4065 = vpop.permute.xlu0 %4064
    %v4067 = vadd.f32 %v4057, %v4065
    %v4068 = vtanh.pop %v4067
    %4070 = vrot.lane.b32.xlu0 %v4068, 64
    %v4071 = vpop.permute.xlu0 %4070
    %v4073 = vmul.f32 %v4055, %v4071
    %v4074 = vpack.c.bf16 %v3954, %v3954
    %v4075 = vpack.c.bf16 %v4073, %v4073
    %v4077 = vsel %vm280, %v4075, 0
    %4079 = vmatprep.subr.bf16.mxu0 0
    %4080 = vmatpush1.bf16.msra.mxu0 0
    %4081 = vmatprep.subr.bf16.mxu0 0
    %4082 = vmatpush1.bf16.msra.mxu0 0
    %4083 = vmatprep.subr.bf16.mxu0 0
    %4084 = vmatpush1.bf16.msra.mxu0 0
    %4085 = vmatprep.subr.bf16.mxu0 0
    %4086 = vmatpush1.bf16.msra.mxu0 0
    %4087 = vmatprep.subr.bf16.mxu0 %v1339
    %4088 = vmatpush1.bf16.msra.mxu0 %v1338
    %4089 = vmatprep.subr.bf16.mxu0 %v1337
    %4090 = vmatpush1.bf16.msra.mxu0 %v1336
    %4091 = vmatprep.subr.bf16.mxu0 %v1335
    %4092 = vmatpush1.bf16.msra.mxu0 %v1334
    %4093 = vmatprep.subr.bf16.mxu0 %v1333
    %4094 = vmatpush1.bf16.msra.mxu0 %v1332
    %4095 = vmatprep.subr.bf16.mxu0 0
    %4096 = vmatpush2.bf16.msra.mxu0 0
    %4097 = vmatprep.subr.bf16.mxu0 0
    %4098 = vmatpush2.bf16.msra.mxu0 0
    %4099 = vmatprep.subr.bf16.mxu0 0
    %4100 = vmatpush2.bf16.msra.mxu0 0
    %4101 = vmatprep.subr.bf16.mxu0 0
    %4102 = vmatpush2.bf16.msra.mxu0 0
    %4103 = vmatprep.subr.bf16.mxu0 0
    %4104 = vmatpush2.bf16.msra.mxu0 0
    %4105 = vmatprep.subr.bf16.mxu0 0
    %4106 = vmatpush2.bf16.msra.mxu0 0
    %4107 = vmatprep.subr.bf16.mxu0 0
    %4108 = vmatpush2.bf16.msra.mxu0 0
    %4109 = vmatprep.subr.bf16.mxu0 0
    %4110 = vmatpush2.bf16.msra.mxu0 0
    %4111 = vmatprep.mubr.bf16.mxu0 0
    %4112 = vmatmul.mubr.bf16.gmra.mxu0 %v4077
    %v4113 = vpop.f32.mrf.mxu0
    %v4114 = vadd.f32 0.0, %v4113
    %v4115 = vpop.f32.mrf.mxu0
    %v4116 = vadd.f32 0.0, %v4115
    %v4117 = vpop.f32.mrf.mxu0
    %v4118 = vpop.f32.mrf.mxu0
    %4119 = vdwg.mxu0
    %4120 = vmatprep.subr.bf16.mxu0 %v1452
    %4121 = vmatpush1.bf16.msra.mxu0 %v1451
    %4122 = vmatprep.subr.bf16.mxu0 %v1450
    %4123 = vmatpush1.bf16.msra.mxu0 %v1449
    %4124 = vmatprep.subr.bf16.mxu0 %v1448
    %4125 = vmatpush1.bf16.msra.mxu0 %v1447
    %4126 = vmatprep.subr.bf16.mxu0 %v1446
    %4127 = vmatpush1.bf16.msra.mxu0 %v1445
    %4128 = vmatprep.subr.bf16.mxu0 %v1444
    %4129 = vmatpush1.bf16.msra.mxu0 %v1443
    %4130 = vmatprep.subr.bf16.mxu0 %v1442
    %4131 = vmatpush1.bf16.msra.mxu0 %v1441
    %4132 = vmatprep.subr.bf16.mxu0 %v1440
    %4133 = vmatpush1.bf16.msra.mxu0 %v1439
    %4134 = vmatprep.subr.bf16.mxu0 %v1438
    %4135 = vmatpush1.bf16.msra.mxu0 %v1437
    %4136 = vmatprep.subr.bf16.mxu0 0
    %4137 = vmatpush2.bf16.msra.mxu0 0
    %4138 = vmatprep.subr.bf16.mxu0 0
    %4139 = vmatpush2.bf16.msra.mxu0 0
    %4140 = vmatprep.subr.bf16.mxu0 0
    %4141 = vmatpush2.bf16.msra.mxu0 0
    %4142 = vmatprep.subr.bf16.mxu0 0
    %4143 = vmatpush2.bf16.msra.mxu0 0
    %4144 = vmatprep.subr.bf16.mxu0 0
    %4145 = vmatpush2.bf16.msra.mxu0 0
    %4146 = vmatprep.subr.bf16.mxu0 0
    %4147 = vmatpush2.bf16.msra.mxu0 0
    %4148 = vmatprep.subr.bf16.mxu0 0
    %4149 = vmatpush2.bf16.msra.mxu0 0
    %4150 = vmatprep.subr.bf16.mxu0 0
    %4151 = vmatpush2.bf16.msra.mxu0 0
    %4152 = vmatprep.mubr.bf16.mxu0 0
    %4153 = vmatmul.mubr.bf16.gmra.mxu0 %v4074
    %v4154 = vpop.f32.mrf.mxu0
    %v4155 = vadd.f32 %v4114, %v4154
    %v4156 = vpop.f32.mrf.mxu0
    %v4157 = vadd.f32 %v4116, %v4156
    %v4158 = vpop.f32.mrf.mxu0
    %v4159 = vpop.f32.mrf.mxu0
    %4160 = vdwg.mxu0
    %v4161 = vadd.f32 %v4155, %v208
    %v4162 = vadd.f32 %v4157, %v212
    %v4163 = vxor.u32 %v4161, 2147483648
    %v4164 = vxor.u32 %v4162, 2147483648
    %v4165 = vmul.f32 %v4163, 1.442695
    %v4166 = vpow.pop %v4165
    %v4167 = vmul.f32 %v4164, 1.442695
    %v4168 = vpow.pop %v4167
    %v4169 = vadd.f32 %v4166, 1.0
    %v4170 = vadd.f32 %v4168, 1.0
    %v4171 = vrcp.pop %v4169
    %v4172 = vmul.f32 1.0, %v4171
    %v4173 = vrcp.pop %v4170
    %v4174 = vmul.f32 1.0, %v4173
    %v4175 = vtanh.pop %v4162
    %v4176 = vmul.f32 %v4172, %v4067
    %4178 = vrot.lane.b32.xlu0 %v4175, 64
    %v4179 = vpop.permute.xlu0 %4178
    %v4181 = vmul.f32 %v4172, %v4179
    %4183 = vrot.lane.b32.xlu0 %v4181, 64
    %v4184 = vpop.permute.xlu0 %4183
    %v4186 = vadd.f32 %v4176, %v4184
    %v4187 = vtanh.pop %v4186
    %4189 = vrot.lane.b32.xlu0 %v4187, 64
    %v4190 = vpop.permute.xlu0 %4189
    %v4192 = vmul.f32 %v4174, %v4190
    %v4193 = vmax.f32 %v4192, 0.0
    %v4194 = vpack.c.bf16 %v4193, %v4193
    %v4203 = vunpack.c.l.b16 %v137
    %v4204 = vunpack.c.l.b16 %v138
    %v4205 = vunpack.c.l.b16 %v139
    %v4206 = vunpack.c.l.b16 %v140
    %v4207 = vunpack.c.l.b16 %v141
    %v4208 = vunpack.c.l.b16 %v142
    %v4209 = vunpack.c.l.b16 %v143
    %v4210 = vunpack.c.l.b16 %v144
    %v4211 = vpack.c.b16 %v4204, %v4203
    %v4212 = vpack.c.b16 %v4206, %v4205
    %v4213 = vpack.c.b16 %v4208, %v4207
    %v4214 = vpack.c.b16 %v4210, %v4209
    %v4220 = vsel %vm280, %v4194, 0
    %4222 = vmatprep.subr.bf16.mxu0 0
    %4223 = vmatpush1.bf16.msra.mxu0 0
    %4224 = vmatprep.subr.bf16.mxu0 0
    %4225 = vmatpush1.bf16.msra.mxu0 0
    %4226 = vmatprep.subr.bf16.mxu0 0
    %4227 = vmatpush1.bf16.msra.mxu0 0
    %4228 = vmatprep.subr.bf16.mxu0 0
    %4229 = vmatpush1.bf16.msra.mxu0 0
    %4230 = vmatprep.subr.bf16.mxu0 0
    %4231 = vmatpush1.bf16.msra.mxu0 %v4214
    %4232 = vmatprep.subr.bf16.mxu0 0
    %4233 = vmatpush1.bf16.msra.mxu0 %v4213
    %4234 = vmatprep.subr.bf16.mxu0 0
    %4235 = vmatpush1.bf16.msra.mxu0 %v4212
    %4236 = vmatprep.subr.bf16.mxu0 0
    %4237 = vmatpush1.bf16.msra.mxu0 %v4211
    %4238 = vmatprep.subr.bf16.mxu0 0
    %4239 = vmatpush2.bf16.msra.mxu0 0
    %4240 = vmatprep.subr.bf16.mxu0 0
    %4241 = vmatpush2.bf16.msra.mxu0 0
    %4242 = vmatprep.subr.bf16.mxu0 0
    %4243 = vmatpush2.bf16.msra.mxu0 0
    %4244 = vmatprep.subr.bf16.mxu0 0
    %4245 = vmatpush2.bf16.msra.mxu0 0
    %4246 = vmatprep.subr.bf16.mxu0 0
    %4247 = vmatpush2.bf16.msra.mxu0 0
    %4248 = vmatprep.subr.bf16.mxu0 0
    %4249 = vmatpush2.bf16.msra.mxu0 0
    %4250 = vmatprep.subr.bf16.mxu0 0
    %4251 = vmatpush2.bf16.msra.mxu0 0
    %4252 = vmatprep.subr.bf16.mxu0 0
    %4253 = vmatpush2.bf16.msra.mxu0 0
    %4254 = vmatprep.mubr.bf16.mxu0 0
    %4255 = vmatmul.mubr.bf16.gmra.mxu0 %v4220
    %v4256 = vpop.f32.mrf.mxu0
    %v4257 = vadd.f32 %v220, %v4256
    %v4258 = vpop.f32.mrf.mxu0
    %v4259 = vpop.f32.mrf.mxu0
    %v4260 = vpop.f32.mrf.mxu0
    %4261 = vdwg.mxu0
    %v4262 = vmax.f32 %v4257, 0.0
    %v4263 = vpack.c.bf16 %v4262, %v4262
    %v4272 = vunpack.c.l.b16 %v145
    %v4273 = vunpack.c.l.b16 %v146
    %v4274 = vunpack.c.l.b16 %v147
    %v4275 = vunpack.c.l.b16 %v148
    %v4276 = vunpack.c.l.b16 %v149
    %v4277 = vunpack.c.l.b16 %v150
    %v4278 = vunpack.c.l.b16 %v151
    %v4279 = vunpack.c.l.b16 %v152
    %v4280 = vpack.c.b16 %v4273, %v4272
    %v4281 = vpack.c.b16 %v4275, %v4274
    %v4282 = vpack.c.b16 %v4277, %v4276
    %v4283 = vpack.c.b16 %v4279, %v4278
    %v4289 = vsel %vm280, %v4263, 0
    %4291 = vmatprep.subr.bf16.mxu0 0
    %4292 = vmatpush1.bf16.msra.mxu0 0
    %4293 = vmatprep.subr.bf16.mxu0 0
    %4294 = vmatpush1.bf16.msra.mxu0 0
    %4295 = vmatprep.subr.bf16.mxu0 0
    %4296 = vmatpush1.bf16.msra.mxu0 0
    %4297 = vmatprep.subr.bf16.mxu0 0
    %4298 = vmatpush1.bf16.msra.mxu0 0
    %4299 = vmatprep.subr.bf16.mxu0 0
    %4300 = vmatpush1.bf16.msra.mxu0 %v4283
    %4301 = vmatprep.subr.bf16.mxu0 0
    %4302 = vmatpush1.bf16.msra.mxu0 %v4282
    %4303 = vmatprep.subr.bf16.mxu0 0
    %4304 = vmatpush1.bf16.msra.mxu0 %v4281
    %4305 = vmatprep.subr.bf16.mxu0 0
    %4306 = vmatpush1.bf16.msra.mxu0 %v4280
    %4307 = vmatprep.subr.bf16.mxu0 0
    %4308 = vmatpush2.bf16.msra.mxu0 0
    %4309 = vmatprep.subr.bf16.mxu0 0
    %4310 = vmatpush2.bf16.msra.mxu0 0
    %4311 = vmatprep.subr.bf16.mxu0 0
    %4312 = vmatpush2.bf16.msra.mxu0 0
    %4313 = vmatprep.subr.bf16.mxu0 0
    %4314 = vmatpush2.bf16.msra.mxu0 0
    %4315 = vmatprep.subr.bf16.mxu0 0
    %4316 = vmatpush2.bf16.msra.mxu0 0
    %4317 = vmatprep.subr.bf16.mxu0 0
    %4318 = vmatpush2.bf16.msra.mxu0 0
    %4319 = vmatprep.subr.bf16.mxu0 0
    %4320 = vmatpush2.bf16.msra.mxu0 0
    %4321 = vmatprep.subr.bf16.mxu0 0
    %4322 = vmatpush2.bf16.msra.mxu0 0
    %4323 = vmatprep.mubr.bf16.mxu0 0
    %4324 = vmatmul.mubr.bf16.gmra.mxu0 %v4289
    %v4325 = vpop.f32.mrf.mxu0
    %v4326 = vadd.f32 %v227, %v4325
    %v4327 = vpop.f32.mrf.mxu0
    %v4328 = vpop.f32.mrf.mxu0
    %v4329 = vpop.f32.mrf.mxu0
    %4330 = vdwg.mxu0
    %v4331 = vmax.f32 %v4326, 0.0
    %v4332 = vpack.c.bf16 %v4331, %v4331
    %v4349 = vunpack.c.l.b16 %v153
    %v4350 = vunpack.c.l.b16 %v154
    %v4351 = vunpack.c.l.b16 %v155
    %v4352 = vunpack.c.l.b16 %v156
    %v4353 = vunpack.c.l.b16 %v157
    %v4354 = vunpack.c.l.b16 %v158
    %v4355 = vunpack.c.l.b16 %v159
    %v4356 = vunpack.c.l.b16 %v160
    %v4357 = vunpack.c.l.b16 %v161
    %v4358 = vunpack.c.l.b16 %v162
    %v4359 = vunpack.c.l.b16 %v163
    %v4360 = vunpack.c.l.b16 %v164
    %v4361 = vunpack.c.l.b16 %v165
    %v4362 = vunpack.c.l.b16 %v166
    %v4363 = vunpack.c.l.b16 %v167
    %v4364 = vunpack.c.l.b16 %v168
    %v4365 = vpack.c.b16 %v4350, %v4349
    %v4366 = vpack.c.b16 %v4352, %v4351
    %v4367 = vpack.c.b16 %v4354, %v4353
    %v4368 = vpack.c.b16 %v4356, %v4355
    %v4369 = vpack.c.b16 %v4358, %v4357
    %v4370 = vpack.c.b16 %v4360, %v4359
    %v4371 = vpack.c.b16 %v4362, %v4361
    %v4372 = vpack.c.b16 %v4364, %v4363
    %4381 = vmatprep.subr.bf16.mxu0 0
    %4382 = vmatpush1.bf16.msra.mxu0 %v4372
    %4383 = vmatprep.subr.bf16.mxu0 0
    %4384 = vmatpush1.bf16.msra.mxu0 %v4371
    %4385 = vmatprep.subr.bf16.mxu0 0
    %4386 = vmatpush1.bf16.msra.mxu0 %v4370
    %4387 = vmatprep.subr.bf16.mxu0 0
    %4388 = vmatpush1.bf16.msra.mxu0 %v4369
    %4389 = vmatprep.subr.bf16.mxu0 0
    %4390 = vmatpush1.bf16.msra.mxu0 %v4368
    %4391 = vmatprep.subr.bf16.mxu0 0
    %4392 = vmatpush1.bf16.msra.mxu0 %v4367
    %4393 = vmatprep.subr.bf16.mxu0 0
    %4394 = vmatpush1.bf16.msra.mxu0 %v4366
    %4395 = vmatprep.subr.bf16.mxu0 0
    %4396 = vmatpush1.bf16.msra.mxu0 %v4365
    %4397 = vmatprep.subr.bf16.mxu0 0
    %4398 = vmatpush2.bf16.msra.mxu0 0
    %4399 = vmatprep.subr.bf16.mxu0 0
    %4400 = vmatpush2.bf16.msra.mxu0 0
    %4401 = vmatprep.subr.bf16.mxu0 0
    %4402 = vmatpush2.bf16.msra.mxu0 0
    %4403 = vmatprep.subr.bf16.mxu0 0
    %4404 = vmatpush2.bf16.msra.mxu0 0
    %4405 = vmatprep.subr.bf16.mxu0 0
    %4406 = vmatpush2.bf16.msra.mxu0 0
    %4407 = vmatprep.subr.bf16.mxu0 0
    %4408 = vmatpush2.bf16.msra.mxu0 0
    %4409 = vmatprep.subr.bf16.mxu0 0
    %4410 = vmatpush2.bf16.msra.mxu0 0
    %4411 = vmatprep.subr.bf16.mxu0 0
    %4412 = vmatpush2.bf16.msra.mxu0 0
    %4413 = vmatprep.mubr.bf16.mxu0 0
    %4414 = vmatmul.mubr.bf16.gmra.mxu0 %v4332
    %v4415 = vpop.f32.mrf.mxu0
    %v4416 = vadd.f32 %v234, %v4415
    %v4417 = vpop.f32.mrf.mxu0
    %v4418 = vpop.f32.mrf.mxu0
    %v4419 = vpop.f32.mrf.mxu0
    %4420 = vdwg.mxu0
    %4421 = vst [vmem:[#allocation8] sm:$0x3] %v4416
    // Predicated region
    $region26: #{_forward_padded.1} parent=1 // pred_check
      _
    $region27: #{_forward_padded.1} parent=1 // pred_check_branch
      %4423 = sbr.rel (0) target = $region29
    $region28: #{_forward_padded.1} parent=1 // pred_region
      %s4425 = ssub.s32 32, 32
      %4426 = vsyncadd [#allocation4], %s4425
      %s4428 = sshll.u32 [#allocation8], 4
      %s4429 = int_to_ptr.vmem [resolvable:$true] %s4428
      %4431 = dma.vmem_to_hbm [thread:$0]  %s4429, 32, %s3, [#allocation4]
    $region29: #{_forward_padded.1} parent=1 // pred_fallthru
      _
    // Predicated region
    $region30: #{_forward_padded.1} parent=1 // pred_check
      _
    $region31: #{_forward_padded.1} parent=1 // pred_check_branch
      %4433 = sbr.rel (0) target = $region33
    $region32: #{_forward_padded.1} parent=1 // pred_region
      %4434 = dma.done [#allocation4], 32
    $region33: #{_forward_padded.1} parent=1 // pred_fallthru
      _
    %4435 = vsyncpa [#allocation3], 1
    %4436 = vsyncpa [#allocation6], 1
    %4437 = vsyncpa [#allocation4], 1

</llo_original>
